<compile_context>
chip_gen: v7x
topology: tpu7x:2x2x1
jax: 0.10.0
libtpu: 0.0.40
codegen_flags: <defaults>
</compile_context>

<pallas_src>
import jax
import jax.numpy as jnp
from jax.experimental import pallas as pl
from jax.experimental.pallas import tpu as pltpu

# TODO(synk): timm.create_model('efficientnet_b1', pretrained=True) backbone has
# no clean Pallas equivalent (pretrained weights); kernel starts from its output.


def mtl_kernel(feat_ref, w_ref, b_ref, out_ref):
    # feat_ref: (TB, C*HW) lane-dense NCHW feature block (spatial fastest)
    # w_ref:    (C*HW, NP) fused [domain | category] weights, rows replicated HW
    #                      times with the 1/(H*W) mean scale folded in (resident)
    # b_ref:    (1, NP)    fused biases (zero in padded lanes)
    # out_ref:  (TB, NP)   lane-dense fused logits
    acc = jnp.dot(feat_ref[...], w_ref[...], preferred_element_type=jnp.float32)
    out_ref[...] = (acc + b_ref[...]).astype(out_ref.dtype)


def _tpu_vmem_capacity_bytes():
    try:
        return int(pltpu.get_tpu_info().vmem_capacity_bytes)
    except Exception:
        return 64 << 20  # conservative fallback (v7x-sized VMEM)


def fuse_head_weights(w_dom, b_dom, w_cat, b_cat, hw, feat_dtype=jnp.float32):
    """Build the fused, HW-replicated weight / bias once (hoist out of the step)."""
    n_dom, n_cat = w_dom.shape[0], w_cat.shape[0]
    n_heads = n_dom + n_cat
    n_pad = max(128, ((n_heads + 127) // 128) * 128)
    # (C, n_pad): both heads side by side, mean scale folded in, lane-padded.
    w_fused = jnp.concatenate([w_dom, w_cat], axis=0).astype(jnp.float32).T / float(hw)
    w_fused = jnp.pad(w_fused, ((0, 0), (0, n_pad - n_heads)))
    # Replicate each channel row HW times so pooling happens inside the MXU
    # matmul over the contiguous NCHW view (flat index = c*HW + s).
    w_rep = jnp.repeat(w_fused, hw, axis=0).astype(feat_dtype)          # (C*HW, NP)
    b_fused = jnp.concatenate([b_dom, b_cat], axis=0).astype(jnp.float32)
    b_fused = jnp.pad(b_fused, (0, n_pad - n_heads)).reshape(1, n_pad)  # (1, NP)
    return w_rep, b_fused


def multi_task_forward_fused(feat_nchw, w_rep, b_fused, num_domains, num_heads,
                             tile_batch=None):
    """Pool + dual linear heads, consuming prebuilt fused weights."""
    B, C, H, W = feat_nchw.shape
    hw = H * W
    chw = C * hw
    n_pad = w_rep.shape[1]
    # Zero-cost view of the contiguous NCHW layout: fully lane-dense.
    feat_flat = feat_nchw.reshape(B, chw)

    # --- generation-gated tile size ----------------------------------------
    itemsize = feat_flat.dtype.itemsize
    weight_bytes = chw * n_pad * w_rep.dtype.itemsize
    vmem_cap = _tpu_vmem_capacity_bytes()
    # ~3/4 of physical VMEM to the pipeline: ~48 MiB on v7x, up to ~100 MiB on
    # v5e/v6e (128 MiB physical).
    vmem_limit = min((vmem_cap * 3) // 4, 100 << 20)
    # Reserve resident fused weight (counted x2 for safety), bias, output blocks.
    reserved = 2 * weight_bytes + 4 * n_pad * 4 + (1 << 20)
    feat_budget = max(vmem_limit - reserved, 2 << 20)
    per_buffer = feat_budget // 2  # double-buffered feature blocks

    if tile_batch is not None:
        tb = int(tile_batch)
    else:
        tb = max(1, min(B, per_buffer // max(chw * itemsize, 1)))
        # Guarantee >=2 grid steps for larger batches so v7x's second TensorCore
        # gets work; costs one ~0.35us extra step on single-core chips.
        if tb >= B and B > 8:
            tb = pl.cdiv(B, 2)
    if tb < B:
        tb = max(8, (tb // 8) * 8)  # sublane-aligned partial-batch tiles
    nb = pl.cdiv(B, tb)

    out = pl.pallas_call(
        mtl_kernel,
        out_shape=jax.ShapeDtypeStruct((B, n_pad), jnp.float32),
        grid=(nb,),
        in_specs=[
            pl.BlockSpec((tb, chw), lambda b: (b, 0)),       # streamed features
            pl.BlockSpec((chw, n_pad), lambda b: (0, 0)),    # resident fused weight
            pl.BlockSpec((1, n_pad), lambda b: (0, 0)),      # resident fused bias
        ],
        out_specs=pl.BlockSpec((tb, n_pad), lambda b: (b, 0)),
        compiler_params=pltpu.CompilerParams(
            dimension_semantics=("parallel",),
            vmem_limit_bytes=int(vmem_limit),
        ),
    )(feat_flat, w_rep, b_fused)

    # Split the fused lane-dense output back into the two heads.
    return out[:, :num_domains], out[:, num_domains:num_heads]


def multi_task_forward(feat_nchw, w_dom, b_dom, w_cat, b_cat):
    """Full post-backbone forward of MultiTaskModel.

    feat_nchw: (B, C, H, W) last backbone feature map (NCHW, as PyTorch produces).
    w_dom: (num_domains, C), b_dom: (num_domains,)   -- PyTorch Linear layout.
    w_cat: (num_categories, C), b_cat: (num_categories,)
    Returns (domain_preds (B, num_domains), category_preds (B, num_categories)).
    """
    hw = feat_nchw.shape[2] * feat_nchw.shape[3]
    w_rep, b_fused = fuse_head_weights(w_dom, b_dom, w_cat, b_cat, hw,
                                       feat_nchw.dtype)
    nd = w_dom.shape[0]
    return multi_task_forward_fused(feat_nchw, w_rep, b_fused,
                                    nd, nd + w_cat.shape[0])


if __name__ == "__main__":
    # Small shapes: batch=2, feature channels=128 (stand-in for efficientnet_b1's
    # 320-channel last stage), spatial 8x8, num_domains=4, num_categories=65.
    B, C, H, W = 2, 128, 8, 8
    NUM_DOMAINS, NUM_CATEGORIES = 4, 65

    key = jax.random.PRNGKey(0)
    k_feat, k_wd, k_bd, k_wc, k_bc, k_feat2 = jax.random.split(key, 6)

    feat = jax.random.normal(k_feat, (B, C, H, W), dtype=jnp.float32)
    w_dom = jax.random.normal(k_wd, (NUM_DOMAINS, C), dtype=jnp.float32) * 0.05
    b_dom = jax.random.normal(k_bd, (NUM_DOMAINS,), dtype=jnp.float32) * 0.05
    w_cat = jax.random.normal(k_wc, (NUM_CATEGORIES, C), dtype=jnp.float32) * 0.05
    b_cat = jax.random.normal(k_bc, (NUM_CATEGORIES,), dtype=jnp.float32) * 0.05

    def reference(f):
        pooled = jnp.mean(f, axis=(2, 3))                      # (B, C)
        return pooled @ w_dom.T + b_dom, pooled @ w_cat.T + b_cat

    # --- end-to-end path (weight fusion inside the jitted forward) ----------
    dom_preds, cat_preds = jax.jit(multi_task_forward)(feat, w_dom, b_dom, w_cat, b_cat)
    jax.block_until_ready((dom_preds, cat_preds))
    dom_ref, cat_ref = reference(feat)
    assert dom_preds.shape == (B, NUM_DOMAINS) and cat_preds.shape == (B, NUM_CATEGORIES)
    assert jnp.allclose(dom_preds, dom_ref, atol=2e-3, rtol=2e-3)
    assert jnp.allclose(cat_preds, cat_ref, atol=2e-3, rtol=2e-3)

    # --- hoisted fused weights + non-divisible batch tiling check -----------
    B2 = 10
    feat2 = jax.random.normal(k_feat2, (B2, C, H, W), dtype=jnp.float32)
    w_rep, b_fused = fuse_head_weights(w_dom, b_dom, w_cat, b_cat, H * W, feat2.dtype)
    fwd = jax.jit(lambda f, wr, bf: multi_task_forward_fused(
        f, wr, bf, NUM_DOMAINS, NUM_DOMAINS + NUM_CATEGORIES, tile_batch=8))
    dom2, cat2 = fwd(feat2, w_rep, b_fused)
    jax.block_until_ready((dom2, cat2))
    dom2_ref, cat2_ref = reference(feat2)
    assert dom2.shape == (B2, NUM_DOMAINS) and cat2.shape == (B2, NUM_CATEGORIES)
    assert jnp.allclose(dom2, dom2_ref, atol=2e-3, rtol=2e-3)
    assert jnp.allclose(cat2, cat2_ref, atol=2e-3, rtol=2e-3)

    print("KERNEL_OK")
</pallas_src>

<mosaic_0001>
module attributes {stable_mosaic.version = 11 : i64} {
  func.func @mtl_kernel(%arg0: i32, %arg1: memref<2x8192xf32, #tpu.memory_space<vmem>>, %arg2: memref<8192x128xf32, #tpu.memory_space<vmem>>, %arg3: memref<1x128xf32, #tpu.memory_space<vmem>>, %arg4: memref<2x128xf32, #tpu.memory_space<vmem>>) attributes {dimension_semantics = [#tpu.dimension_semantics<parallel>], iteration_bounds = array<i64: 1>, scalar_prefetch = 0 : i64, scratch_operands = 0 : i64, tpu.core_type = #tpu.core_type<tc>, window_params = [{transform_indices = @transform_0, window_bounds = array<i64: 2, 8192>}, {pipeline_mode = #tpu.pipeline_mode<synchronous>, transform_indices = @transform_1, window_bounds = array<i64: 8192, 128>}, {pipeline_mode = #tpu.pipeline_mode<synchronous>, transform_indices = @transform_2, window_bounds = array<i64: 1, 128>}, {transform_indices = @transform_3, window_bounds = array<i64: 2, 128>}]} {
    %c0 = arith.constant 0 : index
    %c0_0 = arith.constant 0 : index
    %0 = vector.load %arg1[%c0, %c0_0] : memref<2x8192xf32, #tpu.memory_space<vmem>>, vector<2x8192xf32>
    %c0_1 = arith.constant 0 : index
    %c0_2 = arith.constant 0 : index
    %1 = vector.load %arg2[%c0_1, %c0_2] : memref<8192x128xf32, #tpu.memory_space<vmem>>, vector<8192x128xf32>
    %cst = arith.constant dense<0.000000e+00> : vector<2x128xf32>
    %2 = tpu.matmul %0, %1, %cst {dimension_numbers = #tpu.dot_dimension_numbers<[1], [0], [0], [1], [0, 0, 1, 1], [], []>} : vector<2x8192xf32>, vector<8192x128xf32>, vector<2x128xf32> -> vector<2x128xf32>
    %c0_3 = arith.constant 0 : index
    %c0_4 = arith.constant 0 : index
    %3 = vector.load %arg3[%c0_3, %c0_4] : memref<1x128xf32, #tpu.memory_space<vmem>>, vector<1x128xf32>
    %4 = vector.broadcast %3 : vector<1x128xf32> to vector<2x128xf32>
    %5 = arith.addf %2, %4 : vector<2x128xf32>
    %c0_5 = arith.constant 0 : index
    %c0_6 = arith.constant 0 : index
    %6 = vector.load %arg4[%c0_5, %c0_6] : memref<2x128xf32, #tpu.memory_space<vmem>>, vector<2x128xf32>
    tpu.vector_store %arg4[%c0_5, %c0_6], %5 {strides = array<i32>} : memref<2x128xf32, #tpu.memory_space<vmem>>, vector<2x128xf32>,
    return
  }
  func.func @transform_0(%arg0: i32) -> (i32, i32) {
    %c0_i32 = arith.constant 0 : i32
    %c0_i32_0 = arith.constant 0 : i32
    return %arg0, %c0_i32 : i32, i32
  }
  func.func @transform_1(%arg0: i32) -> (i32, i32) {
    %c0_i32 = arith.constant 0 : i32
    %c0_i32_0 = arith.constant 0 : i32
    %c0_i32_1 = arith.constant 0 : i32
    return %c0_i32, %c0_i32_0 : i32, i32
  }
  func.func @transform_2(%arg0: i32) -> (i32, i32) {
    %c0_i32 = arith.constant 0 : i32
    %c0_i32_0 = arith.constant 0 : i32
    %c0_i32_1 = arith.constant 0 : i32
    return %c0_i32, %c0_i32_0 : i32, i32
  }
  func.func @transform_3(%arg0: i32) -> (i32, i32) {
    %c0_i32 = arith.constant 0 : i32
    %c0_i32_0 = arith.constant 0 : i32
    return %arg0, %c0_i32 : i32, i32
  }
}

</mosaic_0001>

<llo_original>
// kernel: multi_task_forward.1
$region0: #{multi_task_forward.1}
  #allocation0 [shape = 'u32[]', space=smem, size = 0x4, offset = 0x4, fixed_abs, tag = 'smem constant byte address 0x4 - core index']
  #allocation1 [shape = 'u32[144,128]{1,0:T(1,128)}', space=vmem, size = 0x12000, scoped, tag = 'internal scratch']
  %s0 = inlined_call_operand.vmem [shape: f32[2,8192], index: 0, kind: input, shape index: {}]
  %s1 = inlined_call_operand.vmem [shape: f32[8192,128], index: 1, kind: input, shape index: {}]
  %s2 = inlined_call_operand.vmem [shape: f32[1,128], index: 2, kind: input, shape index: {}]
  %s3 = inlined_call_operand.vmem [shape: f32[2,128], index: 3, kind: output, shape index: {}]
  %s4 = sld [smem:[#allocation0]]
  $region22: #{multi_task_forward.1} parent=0
    _
  %s6 = ssub.s32 1, %s4
  %s7 = scalar_select 0, %s6, %s4
  // Predicated region
  $region2: #{multi_task_forward.1} parent=0 // pred_check
    _
  $region3: #{multi_task_forward.1} parent=0 // pred_check_branch
    %9 = sbr.rel (0) target = $region5
  $region4: #{multi_task_forward.1} parent=0 // pred_region
    _
  $region5: #{multi_task_forward.1} parent=0 // pred_fallthru
    _
  // Predicated region
  $region6: #{multi_task_forward.1} parent=0 // pred_check
    _
  $region7: #{multi_task_forward.1} parent=0 // pred_check_branch
    %11 = sbr.rel (0) target = $region9
  $region8: #{multi_task_forward.1} parent=0 // pred_region
    _
  $region9: #{multi_task_forward.1} parent=0 // pred_fallthru
    _
  // Predicated region
  $region10: #{multi_task_forward.1} parent=0 // pred_check
    _
  $region11: #{multi_task_forward.1} parent=0 // pred_check_branch
    %13 = sbr.rel (0) target = $region13
  $region12: #{multi_task_forward.1} parent=0 // pred_region
    _
  $region13: #{multi_task_forward.1} parent=0 // pred_fallthru
    _
  %v14 = vld [vmem:[%s0] sm:$0xff]
  %v15 = vld [vmem:[%s0 + $0x8] sm:$0xff]
  %v16 = vld [vmem:[%s0 + $0x10] sm:$0xff]
  %v17 = vld [vmem:[%s0 + $0x18] sm:$0xff]
  %v18 = vld [vmem:[%s0 + $0x20] sm:$0xff]
  %v19 = vld [vmem:[%s0 + $0x28] sm:$0xff]
  %v20 = vld [vmem:[%s0 + $0x30] sm:$0xff]
  %v21 = vld [vmem:[%s0 + $0x38] sm:$0xff]
  %v22 = vld [vmem:[%s0 + $0x40] sm:$0xff]
  %v23 = vld [vmem:[%s0 + $0x48] sm:$0xff]
  %v24 = vld [vmem:[%s0 + $0x50] sm:$0xff]
  %v25 = vld [vmem:[%s0 + $0x58] sm:$0xff]
  %v26 = vld [vmem:[%s0 + $0x60] sm:$0xff]
  %v27 = vld [vmem:[%s0 + $0x68] sm:$0xff]
  %v28 = vld [vmem:[%s0 + $0x70] sm:$0xff]
  %v29 = vld [vmem:[%s0 + $0x78] sm:$0xff]
  %v30 = vld [vmem:[%s1] sm:$0xff]
  %v31 = vld [vmem:[%s1 + $0x8] sm:$0xff]
  %v32 = vld [vmem:[%s1 + $0x10] sm:$0xff]
  %v33 = vld [vmem:[%s1 + $0x18] sm:$0xff]
  %v34 = vld [vmem:[%s1 + $0x20] sm:$0xff]
  %v35 = vld [vmem:[%s1 + $0x28] sm:$0xff]
  %v36 = vld [vmem:[%s1 + $0x30] sm:$0xff]
  %v37 = vld [vmem:[%s1 + $0x38] sm:$0xff]
  %v38 = vld [vmem:[%s1 + $0x40] sm:$0xff]
  %v39 = vld [vmem:[%s1 + $0x48] sm:$0xff]
  %v40 = vld [vmem:[%s1 + $0x50] sm:$0xff]
  %v41 = vld [vmem:[%s1 + $0x58] sm:$0xff]
  %v42 = vld [vmem:[%s1 + $0x60] sm:$0xff]
  %v43 = vld [vmem:[%s1 + $0x68] sm:$0xff]
  %v44 = vld [vmem:[%s1 + $0x70] sm:$0xff]
  %v45 = vld [vmem:[%s1 + $0x78] sm:$0xff]
  %v46 = vld [vmem:[%s1 + $0x80] sm:$0xff]
  %v47 = vld [vmem:[%s1 + $0x88] sm:$0xff]
  %v48 = vld [vmem:[%s1 + $0x90] sm:$0xff]
  %v49 = vld [vmem:[%s1 + $0x98] sm:$0xff]
  %v50 = vld [vmem:[%s1 + $0xa0] sm:$0xff]
  %v51 = vld [vmem:[%s1 + $0xa8] sm:$0xff]
  %v52 = vld [vmem:[%s1 + $0xb0] sm:$0xff]
  %v53 = vld [vmem:[%s1 + $0xb8] sm:$0xff]
  %v54 = vld [vmem:[%s1 + $0xc0] sm:$0xff]
  %v55 = vld [vmem:[%s1 + $0xc8] sm:$0xff]
  %v56 = vld [vmem:[%s1 + $0xd0] sm:$0xff]
  %v57 = vld [vmem:[%s1 + $0xd8] sm:$0xff]
  %v58 = vld [vmem:[%s1 + $0xe0] sm:$0xff]
  %v59 = vld [vmem:[%s1 + $0xe8] sm:$0xff]
  %v60 = vld [vmem:[%s1 + $0xf0] sm:$0xff]
  %v61 = vld [vmem:[%s1 + $0xf8] sm:$0xff]
  %v62 = vld [vmem:[%s1 + $0x100] sm:$0xff]
  %v63 = vld [vmem:[%s1 + $0x108] sm:$0xff]
  %v64 = vld [vmem:[%s1 + $0x110] sm:$0xff]
  %v65 = vld [vmem:[%s1 + $0x118] sm:$0xff]
  %v66 = vld [vmem:[%s1 + $0x120] sm:$0xff]
  %v67 = vld [vmem:[%s1 + $0x128] sm:$0xff]
  %v68 = vld [vmem:[%s1 + $0x130] sm:$0xff]
  %v69 = vld [vmem:[%s1 + $0x138] sm:$0xff]
  %v70 = vld [vmem:[%s1 + $0x140] sm:$0xff]
  %v71 = vld [vmem:[%s1 + $0x148] sm:$0xff]
  %v72 = vld [vmem:[%s1 + $0x150] sm:$0xff]
  %v73 = vld [vmem:[%s1 + $0x158] sm:$0xff]
  %v74 = vld [vmem:[%s1 + $0x160] sm:$0xff]
  %v75 = vld [vmem:[%s1 + $0x168] sm:$0xff]
  %v76 = vld [vmem:[%s1 + $0x170] sm:$0xff]
  %v77 = vld [vmem:[%s1 + $0x178] sm:$0xff]
  %v78 = vld [vmem:[%s1 + $0x180] sm:$0xff]
  %v79 = vld [vmem:[%s1 + $0x188] sm:$0xff]
  %v80 = vld [vmem:[%s1 + $0x190] sm:$0xff]
  %v81 = vld [vmem:[%s1 + $0x198] sm:$0xff]
  %v82 = vld [vmem:[%s1 + $0x1a0] sm:$0xff]
  %v83 = vld [vmem:[%s1 + $0x1a8] sm:$0xff]
  %v84 = vld [vmem:[%s1 + $0x1b0] sm:$0xff]
  %v85 = vld [vmem:[%s1 + $0x1b8] sm:$0xff]
  %v86 = vld [vmem:[%s1 + $0x1c0] sm:$0xff]
  %v87 = vld [vmem:[%s1 + $0x1c8] sm:$0xff]
  %v88 = vld [vmem:[%s1 + $0x1d0] sm:$0xff]
  %v89 = vld [vmem:[%s1 + $0x1d8] sm:$0xff]
  %v90 = vld [vmem:[%s1 + $0x1e0] sm:$0xff]
  %v91 = vld [vmem:[%s1 + $0x1e8] sm:$0xff]
  %v92 = vld [vmem:[%s1 + $0x1f0] sm:$0xff]
  %v93 = vld [vmem:[%s1 + $0x1f8] sm:$0xff]
  %v94 = vld [vmem:[%s1 + $0x200] sm:$0xff]
  %v95 = vld [vmem:[%s1 + $0x208] sm:$0xff]
  %v96 = vld [vmem:[%s1 + $0x210] sm:$0xff]
  %v97 = vld [vmem:[%s1 + $0x218] sm:$0xff]
  %v98 = vld [vmem:[%s1 + $0x220] sm:$0xff]
  %v99 = vld [vmem:[%s1 + $0x228] sm:$0xff]
  %v100 = vld [vmem:[%s1 + $0x230] sm:$0xff]
  %v101 = vld [vmem:[%s1 + $0x238] sm:$0xff]
  %v102 = vld [vmem:[%s1 + $0x240] sm:$0xff]
  %v103 = vld [vmem:[%s1 + $0x248] sm:$0xff]
  %v104 = vld [vmem:[%s1 + $0x250] sm:$0xff]
  %v105 = vld [vmem:[%s1 + $0x258] sm:$0xff]
  %v106 = vld [vmem:[%s1 + $0x260] sm:$0xff]
  %v107 = vld [vmem:[%s1 + $0x268] sm:$0xff]
  %v108 = vld [vmem:[%s1 + $0x270] sm:$0xff]
  %v109 = vld [vmem:[%s1 + $0x278] sm:$0xff]
  %v110 = vld [vmem:[%s1 + $0x280] sm:$0xff]
  %v111 = vld [vmem:[%s1 + $0x288] sm:$0xff]
  %v112 = vld [vmem:[%s1 + $0x290] sm:$0xff]
  %v113 = vld [vmem:[%s1 + $0x298] sm:$0xff]
  %v114 = vld [vmem:[%s1 + $0x2a0] sm:$0xff]
  %v115 = vld [vmem:[%s1 + $0x2a8] sm:$0xff]
  %v116 = vld [vmem:[%s1 + $0x2b0] sm:$0xff]
  %v117 = vld [vmem:[%s1 + $0x2b8] sm:$0xff]
  %v118 = vld [vmem:[%s1 + $0x2c0] sm:$0xff]
  %v119 = vld [vmem:[%s1 + $0x2c8] sm:$0xff]
  %v120 = vld [vmem:[%s1 + $0x2d0] sm:$0xff]
  %v121 = vld [vmem:[%s1 + $0x2d8] sm:$0xff]
  %v122 = vld [vmem:[%s1 + $0x2e0] sm:$0xff]
  %v123 = vld [vmem:[%s1 + $0x2e8] sm:$0xff]
  %v124 = vld [vmem:[%s1 + $0x2f0] sm:$0xff]
  %v125 = vld [vmem:[%s1 + $0x2f8] sm:$0xff]
  %v126 = vld [vmem:[%s1 + $0x300] sm:$0xff]
  %v127 = vld [vmem:[%s1 + $0x308] sm:$0xff]
  %v128 = vld [vmem:[%s1 + $0x310] sm:$0xff]
  %v129 = vld [vmem:[%s1 + $0x318] sm:$0xff]
  %v130 = vld [vmem:[%s1 + $0x320] sm:$0xff]
  %v131 = vld [vmem:[%s1 + $0x328] sm:$0xff]
  %v132 = vld [vmem:[%s1 + $0x330] sm:$0xff]
  %v133 = vld [vmem:[%s1 + $0x338] sm:$0xff]
  %v134 = vld [vmem:[%s1 + $0x340] sm:$0xff]
  %v135 = vld [vmem:[%s1 + $0x348] sm:$0xff]
  %v136 = vld [vmem:[%s1 + $0x350] sm:$0xff]
  %v137 = vld [vmem:[%s1 + $0x358] sm:$0xff]
  %v138 = vld [vmem:[%s1 + $0x360] sm:$0xff]
  %v139 = vld [vmem:[%s1 + $0x368] sm:$0xff]
  %v140 = vld [vmem:[%s1 + $0x370] sm:$0xff]
  %v141 = vld [vmem:[%s1 + $0x378] sm:$0xff]
  %v142 = vld [vmem:[%s1 + $0x380] sm:$0xff]
  %v143 = vld [vmem:[%s1 + $0x388] sm:$0xff]
  %v144 = vld [vmem:[%s1 + $0x390] sm:$0xff]
  %v145 = vld [vmem:[%s1 + $0x398] sm:$0xff]
  %v146 = vld [vmem:[%s1 + $0x3a0] sm:$0xff]
  %v147 = vld [vmem:[%s1 + $0x3a8] sm:$0xff]
  %v148 = vld [vmem:[%s1 + $0x3b0] sm:$0xff]
  %v149 = vld [vmem:[%s1 + $0x3b8] sm:$0xff]
  %v150 = vld [vmem:[%s1 + $0x3c0] sm:$0xff]
  %v151 = vld [vmem:[%s1 + $0x3c8] sm:$0xff]
  %v152 = vld [vmem:[%s1 + $0x3d0] sm:$0xff]
  %v153 = vld [vmem:[%s1 + $0x3d8] sm:$0xff]
  %v154 = vld [vmem:[%s1 + $0x3e0] sm:$0xff]
  %v155 = vld [vmem:[%s1 + $0x3e8] sm:$0xff]
  %v156 = vld [vmem:[%s1 + $0x3f0] sm:$0xff]
  %v157 = vld [vmem:[%s1 + $0x3f8] sm:$0xff]
  %v158 = vld [vmem:[%s1 + $0x400] sm:$0xff]
  %v159 = vld [vmem:[%s1 + $0x408] sm:$0xff]
  %v160 = vld [vmem:[%s1 + $0x410] sm:$0xff]
  %v161 = vld [vmem:[%s1 + $0x418] sm:$0xff]
  %v162 = vld [vmem:[%s1 + $0x420] sm:$0xff]
  %v163 = vld [vmem:[%s1 + $0x428] sm:$0xff]
  %v164 = vld [vmem:[%s1 + $0x430] sm:$0xff]
  %v165 = vld [vmem:[%s1 + $0x438] sm:$0xff]
  %v166 = vld [vmem:[%s1 + $0x440] sm:$0xff]
  %v167 = vld [vmem:[%s1 + $0x448] sm:$0xff]
  %v168 = vld [vmem:[%s1 + $0x450] sm:$0xff]
  %v169 = vld [vmem:[%s1 + $0x458] sm:$0xff]
  %v170 = vld [vmem:[%s1 + $0x460] sm:$0xff]
  %v171 = vld [vmem:[%s1 + $0x468] sm:$0xff]
  %v172 = vld [vmem:[%s1 + $0x470] sm:$0xff]
  %v173 = vld [vmem:[%s1 + $0x478] sm:$0xff]
  %v174 = vld [vmem:[%s1 + $0x480] sm:$0xff]
  %v175 = vld [vmem:[%s1 + $0x488] sm:$0xff]
  %v176 = vld [vmem:[%s1 + $0x490] sm:$0xff]
  %v177 = vld [vmem:[%s1 + $0x498] sm:$0xff]
  %v178 = vld [vmem:[%s1 + $0x4a0] sm:$0xff]
  %v179 = vld [vmem:[%s1 + $0x4a8] sm:$0xff]
  %v180 = vld [vmem:[%s1 + $0x4b0] sm:$0xff]
  %v181 = vld [vmem:[%s1 + $0x4b8] sm:$0xff]
  %v182 = vld [vmem:[%s1 + $0x4c0] sm:$0xff]
  %v183 = vld [vmem:[%s1 + $0x4c8] sm:$0xff]
  %v184 = vld [vmem:[%s1 + $0x4d0] sm:$0xff]
  %v185 = vld [vmem:[%s1 + $0x4d8] sm:$0xff]
  %v186 = vld [vmem:[%s1 + $0x4e0] sm:$0xff]
  %v187 = vld [vmem:[%s1 + $0x4e8] sm:$0xff]
  %v188 = vld [vmem:[%s1 + $0x4f0] sm:$0xff]
  %v189 = vld [vmem:[%s1 + $0x4f8] sm:$0xff]
  %v190 = vld [vmem:[%s1 + $0x500] sm:$0xff]
  %v191 = vld [vmem:[%s1 + $0x508] sm:$0xff]
  %v192 = vld [vmem:[%s1 + $0x510] sm:$0xff]
  %v193 = vld [vmem:[%s1 + $0x518] sm:$0xff]
  %v194 = vld [vmem:[%s1 + $0x520] sm:$0xff]
  %v195 = vld [vmem:[%s1 + $0x528] sm:$0xff]
  %v196 = vld [vmem:[%s1 + $0x530] sm:$0xff]
  %v197 = vld [vmem:[%s1 + $0x538] sm:$0xff]
  %v198 = vld [vmem:[%s1 + $0x540] sm:$0xff]
  %v199 = vld [vmem:[%s1 + $0x548] sm:$0xff]
  %v200 = vld [vmem:[%s1 + $0x550] sm:$0xff]
  %v201 = vld [vmem:[%s1 + $0x558] sm:$0xff]
  %v202 = vld [vmem:[%s1 + $0x560] sm:$0xff]
  %v203 = vld [vmem:[%s1 + $0x568] sm:$0xff]
  %v204 = vld [vmem:[%s1 + $0x570] sm:$0xff]
  %v205 = vld [vmem:[%s1 + $0x578] sm:$0xff]
  %v206 = vld [vmem:[%s1 + $0x580] sm:$0xff]
  %v207 = vld [vmem:[%s1 + $0x588] sm:$0xff]
  %v208 = vld [vmem:[%s1 + $0x590] sm:$0xff]
  %v209 = vld [vmem:[%s1 + $0x598] sm:$0xff]
  %v210 = vld [vmem:[%s1 + $0x5a0] sm:$0xff]
  %v211 = vld [vmem:[%s1 + $0x5a8] sm:$0xff]
  %v212 = vld [vmem:[%s1 + $0x5b0] sm:$0xff]
  %v213 = vld [vmem:[%s1 + $0x5b8] sm:$0xff]
  %v214 = vld [vmem:[%s1 + $0x5c0] sm:$0xff]
  %v215 = vld [vmem:[%s1 + $0x5c8] sm:$0xff]
  %v216 = vld [vmem:[%s1 + $0x5d0] sm:$0xff]
  %v217 = vld [vmem:[%s1 + $0x5d8] sm:$0xff]
  %v218 = vld [vmem:[%s1 + $0x5e0] sm:$0xff]
  %v219 = vld [vmem:[%s1 + $0x5e8] sm:$0xff]
  %v220 = vld [vmem:[%s1 + $0x5f0] sm:$0xff]
  %v221 = vld [vmem:[%s1 + $0x5f8] sm:$0xff]
  %v222 = vld [vmem:[%s1 + $0x600] sm:$0xff]
  %v223 = vld [vmem:[%s1 + $0x608] sm:$0xff]
  %v224 = vld [vmem:[%s1 + $0x610] sm:$0xff]
  %v225 = vld [vmem:[%s1 + $0x618] sm:$0xff]
  %v226 = vld [vmem:[%s1 + $0x620] sm:$0xff]
  %v227 = vld [vmem:[%s1 + $0x628] sm:$0xff]
  %v228 = vld [vmem:[%s1 + $0x630] sm:$0xff]
  %v229 = vld [vmem:[%s1 + $0x638] sm:$0xff]
  %v230 = vld [vmem:[%s1 + $0x640] sm:$0xff]
  %v231 = vld [vmem:[%s1 + $0x648] sm:$0xff]
  %v232 = vld [vmem:[%s1 + $0x650] sm:$0xff]
  %v233 = vld [vmem:[%s1 + $0x658] sm:$0xff]
  %v234 = vld [vmem:[%s1 + $0x660] sm:$0xff]
  %v235 = vld [vmem:[%s1 + $0x668] sm:$0xff]
  %v236 = vld [vmem:[%s1 + $0x670] sm:$0xff]
  %v237 = vld [vmem:[%s1 + $0x678] sm:$0xff]
  %v238 = vld [vmem:[%s1 + $0x680] sm:$0xff]
  %v239 = vld [vmem:[%s1 + $0x688] sm:$0xff]
  %v240 = vld [vmem:[%s1 + $0x690] sm:$0xff]
  %v241 = vld [vmem:[%s1 + $0x698] sm:$0xff]
  %v242 = vld [vmem:[%s1 + $0x6a0] sm:$0xff]
  %v243 = vld [vmem:[%s1 + $0x6a8] sm:$0xff]
  %v244 = vld [vmem:[%s1 + $0x6b0] sm:$0xff]
  %v245 = vld [vmem:[%s1 + $0x6b8] sm:$0xff]
  %v246 = vld [vmem:[%s1 + $0x6c0] sm:$0xff]
  %v247 = vld [vmem:[%s1 + $0x6c8] sm:$0xff]
  %v248 = vld [vmem:[%s1 + $0x6d0] sm:$0xff]
  %v249 = vld [vmem:[%s1 + $0x6d8] sm:$0xff]
  %v250 = vld [vmem:[%s1 + $0x6e0] sm:$0xff]
  %v251 = vld [vmem:[%s1 + $0x6e8] sm:$0xff]
  %v252 = vld [vmem:[%s1 + $0x6f0] sm:$0xff]
  %v253 = vld [vmem:[%s1 + $0x6f8] sm:$0xff]
  %v254 = vld [vmem:[%s1 + $0x700] sm:$0xff]
  %v255 = vld [vmem:[%s1 + $0x708] sm:$0xff]
  %v256 = vld [vmem:[%s1 + $0x710] sm:$0xff]
  %v257 = vld [vmem:[%s1 + $0x718] sm:$0xff]
  %v258 = vld [vmem:[%s1 + $0x720] sm:$0xff]
  %v259 = vld [vmem:[%s1 + $0x728] sm:$0xff]
  %v260 = vld [vmem:[%s1 + $0x730] sm:$0xff]
  %v261 = vld [vmem:[%s1 + $0x738] sm:$0xff]
  %v262 = vld [vmem:[%s1 + $0x740] sm:$0xff]
  %v263 = vld [vmem:[%s1 + $0x748] sm:$0xff]
  %v264 = vld [vmem:[%s1 + $0x750] sm:$0xff]
  %v265 = vld [vmem:[%s1 + $0x758] sm:$0xff]
  %v266 = vld [vmem:[%s1 + $0x760] sm:$0xff]
  %v267 = vld [vmem:[%s1 + $0x768] sm:$0xff]
  %v268 = vld [vmem:[%s1 + $0x770] sm:$0xff]
  %v269 = vld [vmem:[%s1 + $0x778] sm:$0xff]
  %v270 = vld [vmem:[%s1 + $0x780] sm:$0xff]
  %v271 = vld [vmem:[%s1 + $0x788] sm:$0xff]
  %v272 = vld [vmem:[%s1 + $0x790] sm:$0xff]
  %v273 = vld [vmem:[%s1 + $0x798] sm:$0xff]
  %v274 = vld [vmem:[%s1 + $0x7a0] sm:$0xff]
  %v275 = vld [vmem:[%s1 + $0x7a8] sm:$0xff]
  %v276 = vld [vmem:[%s1 + $0x7b0] sm:$0xff]
  %v277 = vld [vmem:[%s1 + $0x7b8] sm:$0xff]
  %v278 = vld [vmem:[%s1 + $0x7c0] sm:$0xff]
  %v279 = vld [vmem:[%s1 + $0x7c8] sm:$0xff]
  %v280 = vld [vmem:[%s1 + $0x7d0] sm:$0xff]
  %v281 = vld [vmem:[%s1 + $0x7d8] sm:$0xff]
  %v282 = vld [vmem:[%s1 + $0x7e0] sm:$0xff]
  %v283 = vld [vmem:[%s1 + $0x7e8] sm:$0xff]
  %v284 = vld [vmem:[%s1 + $0x7f0] sm:$0xff]
  %v285 = vld [vmem:[%s1 + $0x7f8] sm:$0xff]
  %v286 = vld [vmem:[%s1 + $0x800] sm:$0xff]
  %v287 = vld [vmem:[%s1 + $0x808] sm:$0xff]
  %v288 = vld [vmem:[%s1 + $0x810] sm:$0xff]
  %v289 = vld [vmem:[%s1 + $0x818] sm:$0xff]
  %v290 = vld [vmem:[%s1 + $0x820] sm:$0xff]
  %v291 = vld [vmem:[%s1 + $0x828] sm:$0xff]
  %v292 = vld [vmem:[%s1 + $0x830] sm:$0xff]
  %v293 = vld [vmem:[%s1 + $0x838] sm:$0xff]
  %v294 = vld [vmem:[%s1 + $0x840] sm:$0xff]
  %v295 = vld [vmem:[%s1 + $0x848] sm:$0xff]
  %v296 = vld [vmem:[%s1 + $0x850] sm:$0xff]
  %v297 = vld [vmem:[%s1 + $0x858] sm:$0xff]
  %v298 = vld [vmem:[%s1 + $0x860] sm:$0xff]
  %v299 = vld [vmem:[%s1 + $0x868] sm:$0xff]
  %v300 = vld [vmem:[%s1 + $0x870] sm:$0xff]
  %v301 = vld [vmem:[%s1 + $0x878] sm:$0xff]
  %v302 = vld [vmem:[%s1 + $0x880] sm:$0xff]
  %v303 = vld [vmem:[%s1 + $0x888] sm:$0xff]
  %v304 = vld [vmem:[%s1 + $0x890] sm:$0xff]
  %v305 = vld [vmem:[%s1 + $0x898] sm:$0xff]
  %v306 = vld [vmem:[%s1 + $0x8a0] sm:$0xff]
  %v307 = vld [vmem:[%s1 + $0x8a8] sm:$0xff]
  %v308 = vld [vmem:[%s1 + $0x8b0] sm:$0xff]
  %v309 = vld [vmem:[%s1 + $0x8b8] sm:$0xff]
  %v310 = vld [vmem:[%s1 + $0x8c0] sm:$0xff]
  %v311 = vld [vmem:[%s1 + $0x8c8] sm:$0xff]
  %v312 = vld [vmem:[%s1 + $0x8d0] sm:$0xff]
  %v313 = vld [vmem:[%s1 + $0x8d8] sm:$0xff]
  %v314 = vld [vmem:[%s1 + $0x8e0] sm:$0xff]
  %v315 = vld [vmem:[%s1 + $0x8e8] sm:$0xff]
  %v316 = vld [vmem:[%s1 + $0x8f0] sm:$0xff]
  %v317 = vld [vmem:[%s1 + $0x8f8] sm:$0xff]
  %v318 = vld [vmem:[%s1 + $0x900] sm:$0xff]
  %v319 = vld [vmem:[%s1 + $0x908] sm:$0xff]
  %v320 = vld [vmem:[%s1 + $0x910] sm:$0xff]
  %v321 = vld [vmem:[%s1 + $0x918] sm:$0xff]
  %v322 = vld [vmem:[%s1 + $0x920] sm:$0xff]
  %v323 = vld [vmem:[%s1 + $0x928] sm:$0xff]
  %v324 = vld [vmem:[%s1 + $0x930] sm:$0xff]
  %v325 = vld [vmem:[%s1 + $0x938] sm:$0xff]
  %v326 = vld [vmem:[%s1 + $0x940] sm:$0xff]
  %v327 = vld [vmem:[%s1 + $0x948] sm:$0xff]
  %v328 = vld [vmem:[%s1 + $0x950] sm:$0xff]
  %v329 = vld [vmem:[%s1 + $0x958] sm:$0xff]
  %v330 = vld [vmem:[%s1 + $0x960] sm:$0xff]
  %v331 = vld [vmem:[%s1 + $0x968] sm:$0xff]
  %v332 = vld [vmem:[%s1 + $0x970] sm:$0xff]
  %v333 = vld [vmem:[%s1 + $0x978] sm:$0xff]
  %v334 = vld [vmem:[%s1 + $0x980] sm:$0xff]
  %v335 = vld [vmem:[%s1 + $0x988] sm:$0xff]
  %v336 = vld [vmem:[%s1 + $0x990] sm:$0xff]
  %v337 = vld [vmem:[%s1 + $0x998] sm:$0xff]
  %v338 = vld [vmem:[%s1 + $0x9a0] sm:$0xff]
  %v339 = vld [vmem:[%s1 + $0x9a8] sm:$0xff]
  %v340 = vld [vmem:[%s1 + $0x9b0] sm:$0xff]
  %v341 = vld [vmem:[%s1 + $0x9b8] sm:$0xff]
  %v342 = vld [vmem:[%s1 + $0x9c0] sm:$0xff]
  %v343 = vld [vmem:[%s1 + $0x9c8] sm:$0xff]
  %v344 = vld [vmem:[%s1 + $0x9d0] sm:$0xff]
  %v345 = vld [vmem:[%s1 + $0x9d8] sm:$0xff]
  %v346 = vld [vmem:[%s1 + $0x9e0] sm:$0xff]
  %v347 = vld [vmem:[%s1 + $0x9e8] sm:$0xff]
  %v348 = vld [vmem:[%s1 + $0x9f0] sm:$0xff]
  %v349 = vld [vmem:[%s1 + $0x9f8] sm:$0xff]
  %v350 = vld [vmem:[%s1 + $0xa00] sm:$0xff]
  %v351 = vld [vmem:[%s1 + $0xa08] sm:$0xff]
  %v352 = vld [vmem:[%s1 + $0xa10] sm:$0xff]
  %v353 = vld [vmem:[%s1 + $0xa18] sm:$0xff]
  %v354 = vld [vmem:[%s1 + $0xa20] sm:$0xff]
  %v355 = vld [vmem:[%s1 + $0xa28] sm:$0xff]
  %v356 = vld [vmem:[%s1 + $0xa30] sm:$0xff]
  %v357 = vld [vmem:[%s1 + $0xa38] sm:$0xff]
  %v358 = vld [vmem:[%s1 + $0xa40] sm:$0xff]
  %v359 = vld [vmem:[%s1 + $0xa48] sm:$0xff]
  %v360 = vld [vmem:[%s1 + $0xa50] sm:$0xff]
  %v361 = vld [vmem:[%s1 + $0xa58] sm:$0xff]
  %v362 = vld [vmem:[%s1 + $0xa60] sm:$0xff]
  %v363 = vld [vmem:[%s1 + $0xa68] sm:$0xff]
  %v364 = vld [vmem:[%s1 + $0xa70] sm:$0xff]
  %v365 = vld [vmem:[%s1 + $0xa78] sm:$0xff]
  %v366 = vld [vmem:[%s1 + $0xa80] sm:$0xff]
  %v367 = vld [vmem:[%s1 + $0xa88] sm:$0xff]
  %v368 = vld [vmem:[%s1 + $0xa90] sm:$0xff]
  %v369 = vld [vmem:[%s1 + $0xa98] sm:$0xff]
  %v370 = vld [vmem:[%s1 + $0xaa0] sm:$0xff]
  %v371 = vld [vmem:[%s1 + $0xaa8] sm:$0xff]
  %v372 = vld [vmem:[%s1 + $0xab0] sm:$0xff]
  %v373 = vld [vmem:[%s1 + $0xab8] sm:$0xff]
  %v374 = vld [vmem:[%s1 + $0xac0] sm:$0xff]
  %v375 = vld [vmem:[%s1 + $0xac8] sm:$0xff]
  %v376 = vld [vmem:[%s1 + $0xad0] sm:$0xff]
  %v377 = vld [vmem:[%s1 + $0xad8] sm:$0xff]
  %v378 = vld [vmem:[%s1 + $0xae0] sm:$0xff]
  %v379 = vld [vmem:[%s1 + $0xae8] sm:$0xff]
  %v380 = vld [vmem:[%s1 + $0xaf0] sm:$0xff]
  %v381 = vld [vmem:[%s1 + $0xaf8] sm:$0xff]
  %v382 = vld [vmem:[%s1 + $0xb00] sm:$0xff]
  %v383 = vld [vmem:[%s1 + $0xb08] sm:$0xff]
  %v384 = vld [vmem:[%s1 + $0xb10] sm:$0xff]
  %v385 = vld [vmem:[%s1 + $0xb18] sm:$0xff]
  %v386 = vld [vmem:[%s1 + $0xb20] sm:$0xff]
  %v387 = vld [vmem:[%s1 + $0xb28] sm:$0xff]
  %v388 = vld [vmem:[%s1 + $0xb30] sm:$0xff]
  %v389 = vld [vmem:[%s1 + $0xb38] sm:$0xff]
  %v390 = vld [vmem:[%s1 + $0xb40] sm:$0xff]
  %v391 = vld [vmem:[%s1 + $0xb48] sm:$0xff]
  %v392 = vld [vmem:[%s1 + $0xb50] sm:$0xff]
  %v393 = vld [vmem:[%s1 + $0xb58] sm:$0xff]
  %v394 = vld [vmem:[%s1 + $0xb60] sm:$0xff]
  %v395 = vld [vmem:[%s1 + $0xb68] sm:$0xff]
  %v396 = vld [vmem:[%s1 + $0xb70] sm:$0xff]
  %v397 = vld [vmem:[%s1 + $0xb78] sm:$0xff]
  %v398 = vld [vmem:[%s1 + $0xb80] sm:$0xff]
  %v399 = vld [vmem:[%s1 + $0xb88] sm:$0xff]
  %v400 = vld [vmem:[%s1 + $0xb90] sm:$0xff]
  %v401 = vld [vmem:[%s1 + $0xb98] sm:$0xff]
  %v402 = vld [vmem:[%s1 + $0xba0] sm:$0xff]
  %v403 = vld [vmem:[%s1 + $0xba8] sm:$0xff]
  %v404 = vld [vmem:[%s1 + $0xbb0] sm:$0xff]
  %v405 = vld [vmem:[%s1 + $0xbb8] sm:$0xff]
  %v406 = vld [vmem:[%s1 + $0xbc0] sm:$0xff]
  %v407 = vld [vmem:[%s1 + $0xbc8] sm:$0xff]
  %v408 = vld [vmem:[%s1 + $0xbd0] sm:$0xff]
  %v409 = vld [vmem:[%s1 + $0xbd8] sm:$0xff]
  %v410 = vld [vmem:[%s1 + $0xbe0] sm:$0xff]
  %v411 = vld [vmem:[%s1 + $0xbe8] sm:$0xff]
  %v412 = vld [vmem:[%s1 + $0xbf0] sm:$0xff]
  %v413 = vld [vmem:[%s1 + $0xbf8] sm:$0xff]
  %v414 = vld [vmem:[%s1 + $0xc00] sm:$0xff]
  %v415 = vld [vmem:[%s1 + $0xc08] sm:$0xff]
  %v416 = vld [vmem:[%s1 + $0xc10] sm:$0xff]
  %v417 = vld [vmem:[%s1 + $0xc18] sm:$0xff]
  %v418 = vld [vmem:[%s1 + $0xc20] sm:$0xff]
  %v419 = vld [vmem:[%s1 + $0xc28] sm:$0xff]
  %v420 = vld [vmem:[%s1 + $0xc30] sm:$0xff]
  %v421 = vld [vmem:[%s1 + $0xc38] sm:$0xff]
  %v422 = vld [vmem:[%s1 + $0xc40] sm:$0xff]
  %v423 = vld [vmem:[%s1 + $0xc48] sm:$0xff]
  %v424 = vld [vmem:[%s1 + $0xc50] sm:$0xff]
  %v425 = vld [vmem:[%s1 + $0xc58] sm:$0xff]
  %v426 = vld [vmem:[%s1 + $0xc60] sm:$0xff]
  %v427 = vld [vmem:[%s1 + $0xc68] sm:$0xff]
  %v428 = vld [vmem:[%s1 + $0xc70] sm:$0xff]
  %v429 = vld [vmem:[%s1 + $0xc78] sm:$0xff]
  %v430 = vld [vmem:[%s1 + $0xc80] sm:$0xff]
  %v431 = vld [vmem:[%s1 + $0xc88] sm:$0xff]
  %v432 = vld [vmem:[%s1 + $0xc90] sm:$0xff]
  %v433 = vld [vmem:[%s1 + $0xc98] sm:$0xff]
  %v434 = vld [vmem:[%s1 + $0xca0] sm:$0xff]
  %v435 = vld [vmem:[%s1 + $0xca8] sm:$0xff]
  %v436 = vld [vmem:[%s1 + $0xcb0] sm:$0xff]
  %v437 = vld [vmem:[%s1 + $0xcb8] sm:$0xff]
  %v438 = vld [vmem:[%s1 + $0xcc0] sm:$0xff]
  %v439 = vld [vmem:[%s1 + $0xcc8] sm:$0xff]
  %v440 = vld [vmem:[%s1 + $0xcd0] sm:$0xff]
  %v441 = vld [vmem:[%s1 + $0xcd8] sm:$0xff]
  %v442 = vld [vmem:[%s1 + $0xce0] sm:$0xff]
  %v443 = vld [vmem:[%s1 + $0xce8] sm:$0xff]
  %v444 = vld [vmem:[%s1 + $0xcf0] sm:$0xff]
  %v445 = vld [vmem:[%s1 + $0xcf8] sm:$0xff]
  %v446 = vld [vmem:[%s1 + $0xd00] sm:$0xff]
  %v447 = vld [vmem:[%s1 + $0xd08] sm:$0xff]
  %v448 = vld [vmem:[%s1 + $0xd10] sm:$0xff]
  %v449 = vld [vmem:[%s1 + $0xd18] sm:$0xff]
  %v450 = vld [vmem:[%s1 + $0xd20] sm:$0xff]
  %v451 = vld [vmem:[%s1 + $0xd28] sm:$0xff]
  %v452 = vld [vmem:[%s1 + $0xd30] sm:$0xff]
  %v453 = vld [vmem:[%s1 + $0xd38] sm:$0xff]
  %v454 = vld [vmem:[%s1 + $0xd40] sm:$0xff]
  %v455 = vld [vmem:[%s1 + $0xd48] sm:$0xff]
  %v456 = vld [vmem:[%s1 + $0xd50] sm:$0xff]
  %v457 = vld [vmem:[%s1 + $0xd58] sm:$0xff]
  %v458 = vld [vmem:[%s1 + $0xd60] sm:$0xff]
  %v459 = vld [vmem:[%s1 + $0xd68] sm:$0xff]
  %v460 = vld [vmem:[%s1 + $0xd70] sm:$0xff]
  %v461 = vld [vmem:[%s1 + $0xd78] sm:$0xff]
  %v462 = vld [vmem:[%s1 + $0xd80] sm:$0xff]
  %v463 = vld [vmem:[%s1 + $0xd88] sm:$0xff]
  %v464 = vld [vmem:[%s1 + $0xd90] sm:$0xff]
  %v465 = vld [vmem:[%s1 + $0xd98] sm:$0xff]
  %v466 = vld [vmem:[%s1 + $0xda0] sm:$0xff]
  %v467 = vld [vmem:[%s1 + $0xda8] sm:$0xff]
  %v468 = vld [vmem:[%s1 + $0xdb0] sm:$0xff]
  %v469 = vld [vmem:[%s1 + $0xdb8] sm:$0xff]
  %v470 = vld [vmem:[%s1 + $0xdc0] sm:$0xff]
  %v471 = vld [vmem:[%s1 + $0xdc8] sm:$0xff]
  %v472 = vld [vmem:[%s1 + $0xdd0] sm:$0xff]
  %v473 = vld [vmem:[%s1 + $0xdd8] sm:$0xff]
  %v474 = vld [vmem:[%s1 + $0xde0] sm:$0xff]
  %v475 = vld [vmem:[%s1 + $0xde8] sm:$0xff]
  %v476 = vld [vmem:[%s1 + $0xdf0] sm:$0xff]
  %v477 = vld [vmem:[%s1 + $0xdf8] sm:$0xff]
  %v478 = vld [vmem:[%s1 + $0xe00] sm:$0xff]
  %v479 = vld [vmem:[%s1 + $0xe08] sm:$0xff]
  %v480 = vld [vmem:[%s1 + $0xe10] sm:$0xff]
  %v481 = vld [vmem:[%s1 + $0xe18] sm:$0xff]
  %v482 = vld [vmem:[%s1 + $0xe20] sm:$0xff]
  %v483 = vld [vmem:[%s1 + $0xe28] sm:$0xff]
  %v484 = vld [vmem:[%s1 + $0xe30] sm:$0xff]
  %v485 = vld [vmem:[%s1 + $0xe38] sm:$0xff]
  %v486 = vld [vmem:[%s1 + $0xe40] sm:$0xff]
  %v487 = vld [vmem:[%s1 + $0xe48] sm:$0xff]
  %v488 = vld [vmem:[%s1 + $0xe50] sm:$0xff]
  %v489 = vld [vmem:[%s1 + $0xe58] sm:$0xff]
  %v490 = vld [vmem:[%s1 + $0xe60] sm:$0xff]
  %v491 = vld [vmem:[%s1 + $0xe68] sm:$0xff]
  %v492 = vld [vmem:[%s1 + $0xe70] sm:$0xff]
  %v493 = vld [vmem:[%s1 + $0xe78] sm:$0xff]
  %v494 = vld [vmem:[%s1 + $0xe80] sm:$0xff]
  %v495 = vld [vmem:[%s1 + $0xe88] sm:$0xff]
  %v496 = vld [vmem:[%s1 + $0xe90] sm:$0xff]
  %v497 = vld [vmem:[%s1 + $0xe98] sm:$0xff]
  %v498 = vld [vmem:[%s1 + $0xea0] sm:$0xff]
  %v499 = vld [vmem:[%s1 + $0xea8] sm:$0xff]
  %v500 = vld [vmem:[%s1 + $0xeb0] sm:$0xff]
  %v501 = vld [vmem:[%s1 + $0xeb8] sm:$0xff]
  %v502 = vld [vmem:[%s1 + $0xec0] sm:$0xff]
  %v503 = vld [vmem:[%s1 + $0xec8] sm:$0xff]
  %v504 = vld [vmem:[%s1 + $0xed0] sm:$0xff]
  %v505 = vld [vmem:[%s1 + $0xed8] sm:$0xff]
  %v506 = vld [vmem:[%s1 + $0xee0] sm:$0xff]
  %v507 = vld [vmem:[%s1 + $0xee8] sm:$0xff]
  %v508 = vld [vmem:[%s1 + $0xef0] sm:$0xff]
  %v509 = vld [vmem:[%s1 + $0xef8] sm:$0xff]
  %v510 = vld [vmem:[%s1 + $0xf00] sm:$0xff]
  %v511 = vld [vmem:[%s1 + $0xf08] sm:$0xff]
  %v512 = vld [vmem:[%s1 + $0xf10] sm:$0xff]
  %v513 = vld [vmem:[%s1 + $0xf18] sm:$0xff]
  %v514 = vld [vmem:[%s1 + $0xf20] sm:$0xff]
  %v515 = vld [vmem:[%s1 + $0xf28] sm:$0xff]
  %v516 = vld [vmem:[%s1 + $0xf30] sm:$0xff]
  %v517 = vld [vmem:[%s1 + $0xf38] sm:$0xff]
  %v518 = vld [vmem:[%s1 + $0xf40] sm:$0xff]
  %v519 = vld [vmem:[%s1 + $0xf48] sm:$0xff]
  %v520 = vld [vmem:[%s1 + $0xf50] sm:$0xff]
  %v521 = vld [vmem:[%s1 + $0xf58] sm:$0xff]
  %v522 = vld [vmem:[%s1 + $0xf60] sm:$0xff]
  %v523 = vld [vmem:[%s1 + $0xf68] sm:$0xff]
  %v524 = vld [vmem:[%s1 + $0xf70] sm:$0xff]
  %v525 = vld [vmem:[%s1 + $0xf78] sm:$0xff]
  %v526 = vld [vmem:[%s1 + $0xf80] sm:$0xff]
  %v527 = vld [vmem:[%s1 + $0xf88] sm:$0xff]
  %v528 = vld [vmem:[%s1 + $0xf90] sm:$0xff]
  %v529 = vld [vmem:[%s1 + $0xf98] sm:$0xff]
  %v530 = vld [vmem:[%s1 + $0xfa0] sm:$0xff]
  %v531 = vld [vmem:[%s1 + $0xfa8] sm:$0xff]
  %v532 = vld [vmem:[%s1 + $0xfb0] sm:$0xff]
  %v533 = vld [vmem:[%s1 + $0xfb8] sm:$0xff]
  %v534 = vld [vmem:[%s1 + $0xfc0] sm:$0xff]
  %v535 = vld [vmem:[%s1 + $0xfc8] sm:$0xff]
  %v536 = vld [vmem:[%s1 + $0xfd0] sm:$0xff]
  %v537 = vld [vmem:[%s1 + $0xfd8] sm:$0xff]
  %v538 = vld [vmem:[%s1 + $0xfe0] sm:$0xff]
  %v539 = vld [vmem:[%s1 + $0xfe8] sm:$0xff]
  %v540 = vld [vmem:[%s1 + $0xff0] sm:$0xff]
  %v541 = vld [vmem:[%s1 + $0xff8] sm:$0xff]
  %v542 = vld [vmem:[%s1 + $0x1000] sm:$0xff]
  %v543 = vld [vmem:[%s1 + $0x1008] sm:$0xff]
  %v544 = vld [vmem:[%s1 + $0x1010] sm:$0xff]
  %v545 = vld [vmem:[%s1 + $0x1018] sm:$0xff]
  %v546 = vld [vmem:[%s1 + $0x1020] sm:$0xff]
  %v547 = vld [vmem:[%s1 + $0x1028] sm:$0xff]
  %v548 = vld [vmem:[%s1 + $0x1030] sm:$0xff]
  %v549 = vld [vmem:[%s1 + $0x1038] sm:$0xff]
  %v550 = vld [vmem:[%s1 + $0x1040] sm:$0xff]
  %v551 = vld [vmem:[%s1 + $0x1048] sm:$0xff]
  %v552 = vld [vmem:[%s1 + $0x1050] sm:$0xff]
  %v553 = vld [vmem:[%s1 + $0x1058] sm:$0xff]
  %v554 = vld [vmem:[%s1 + $0x1060] sm:$0xff]
  %v555 = vld [vmem:[%s1 + $0x1068] sm:$0xff]
  %v556 = vld [vmem:[%s1 + $0x1070] sm:$0xff]
  %v557 = vld [vmem:[%s1 + $0x1078] sm:$0xff]
  %v558 = vld [vmem:[%s1 + $0x1080] sm:$0xff]
  %v559 = vld [vmem:[%s1 + $0x1088] sm:$0xff]
  %v560 = vld [vmem:[%s1 + $0x1090] sm:$0xff]
  %v561 = vld [vmem:[%s1 + $0x1098] sm:$0xff]
  %v562 = vld [vmem:[%s1 + $0x10a0] sm:$0xff]
  %v563 = vld [vmem:[%s1 + $0x10a8] sm:$0xff]
  %v564 = vld [vmem:[%s1 + $0x10b0] sm:$0xff]
  %v565 = vld [vmem:[%s1 + $0x10b8] sm:$0xff]
  %v566 = vld [vmem:[%s1 + $0x10c0] sm:$0xff]
  %v567 = vld [vmem:[%s1 + $0x10c8] sm:$0xff]
  %v568 = vld [vmem:[%s1 + $0x10d0] sm:$0xff]
  %v569 = vld [vmem:[%s1 + $0x10d8] sm:$0xff]
  %v570 = vld [vmem:[%s1 + $0x10e0] sm:$0xff]
  %v571 = vld [vmem:[%s1 + $0x10e8] sm:$0xff]
  %v572 = vld [vmem:[%s1 + $0x10f0] sm:$0xff]
  %v573 = vld [vmem:[%s1 + $0x10f8] sm:$0xff]
  %v574 = vld [vmem:[%s1 + $0x1100] sm:$0xff]
  %v575 = vld [vmem:[%s1 + $0x1108] sm:$0xff]
  %v576 = vld [vmem:[%s1 + $0x1110] sm:$0xff]
  %v577 = vld [vmem:[%s1 + $0x1118] sm:$0xff]
  %v578 = vld [vmem:[%s1 + $0x1120] sm:$0xff]
  %v579 = vld [vmem:[%s1 + $0x1128] sm:$0xff]
  %v580 = vld [vmem:[%s1 + $0x1130] sm:$0xff]
  %v581 = vld [vmem:[%s1 + $0x1138] sm:$0xff]
  %v582 = vld [vmem:[%s1 + $0x1140] sm:$0xff]
  %v583 = vld [vmem:[%s1 + $0x1148] sm:$0xff]
  %v584 = vld [vmem:[%s1 + $0x1150] sm:$0xff]
  %v585 = vld [vmem:[%s1 + $0x1158] sm:$0xff]
  %v586 = vld [vmem:[%s1 + $0x1160] sm:$0xff]
  %v587 = vld [vmem:[%s1 + $0x1168] sm:$0xff]
  %v588 = vld [vmem:[%s1 + $0x1170] sm:$0xff]
  %v589 = vld [vmem:[%s1 + $0x1178] sm:$0xff]
  %v590 = vld [vmem:[%s1 + $0x1180] sm:$0xff]
  %v591 = vld [vmem:[%s1 + $0x1188] sm:$0xff]
  %v592 = vld [vmem:[%s1 + $0x1190] sm:$0xff]
  %v593 = vld [vmem:[%s1 + $0x1198] sm:$0xff]
  %v594 = vld [vmem:[%s1 + $0x11a0] sm:$0xff]
  %v595 = vld [vmem:[%s1 + $0x11a8] sm:$0xff]
  %v596 = vld [vmem:[%s1 + $0x11b0] sm:$0xff]
  %v597 = vld [vmem:[%s1 + $0x11b8] sm:$0xff]
  %v598 = vld [vmem:[%s1 + $0x11c0] sm:$0xff]
  %v599 = vld [vmem:[%s1 + $0x11c8] sm:$0xff]
  %v600 = vld [vmem:[%s1 + $0x11d0] sm:$0xff]
  %v601 = vld [vmem:[%s1 + $0x11d8] sm:$0xff]
  %v602 = vld [vmem:[%s1 + $0x11e0] sm:$0xff]
  %v603 = vld [vmem:[%s1 + $0x11e8] sm:$0xff]
  %v604 = vld [vmem:[%s1 + $0x11f0] sm:$0xff]
  %v605 = vld [vmem:[%s1 + $0x11f8] sm:$0xff]
  %v606 = vld [vmem:[%s1 + $0x1200] sm:$0xff]
  %v607 = vld [vmem:[%s1 + $0x1208] sm:$0xff]
  %v608 = vld [vmem:[%s1 + $0x1210] sm:$0xff]
  %v609 = vld [vmem:[%s1 + $0x1218] sm:$0xff]
  %v610 = vld [vmem:[%s1 + $0x1220] sm:$0xff]
  %v611 = vld [vmem:[%s1 + $0x1228] sm:$0xff]
  %v612 = vld [vmem:[%s1 + $0x1230] sm:$0xff]
  %v613 = vld [vmem:[%s1 + $0x1238] sm:$0xff]
  %v614 = vld [vmem:[%s1 + $0x1240] sm:$0xff]
  %v615 = vld [vmem:[%s1 + $0x1248] sm:$0xff]
  %v616 = vld [vmem:[%s1 + $0x1250] sm:$0xff]
  %v617 = vld [vmem:[%s1 + $0x1258] sm:$0xff]
  %v618 = vld [vmem:[%s1 + $0x1260] sm:$0xff]
  %v619 = vld [vmem:[%s1 + $0x1268] sm:$0xff]
  %v620 = vld [vmem:[%s1 + $0x1270] sm:$0xff]
  %v621 = vld [vmem:[%s1 + $0x1278] sm:$0xff]
  %v622 = vld [vmem:[%s1 + $0x1280] sm:$0xff]
  %v623 = vld [vmem:[%s1 + $0x1288] sm:$0xff]
  %v624 = vld [vmem:[%s1 + $0x1290] sm:$0xff]
  %v625 = vld [vmem:[%s1 + $0x1298] sm:$0xff]
  %v626 = vld [vmem:[%s1 + $0x12a0] sm:$0xff]
  %v627 = vld [vmem:[%s1 + $0x12a8] sm:$0xff]
  %v628 = vld [vmem:[%s1 + $0x12b0] sm:$0xff]
  %v629 = vld [vmem:[%s1 + $0x12b8] sm:$0xff]
  %v630 = vld [vmem:[%s1 + $0x12c0] sm:$0xff]
  %v631 = vld [vmem:[%s1 + $0x12c8] sm:$0xff]
  %v632 = vld [vmem:[%s1 + $0x12d0] sm:$0xff]
  %v633 = vld [vmem:[%s1 + $0x12d8] sm:$0xff]
  %v634 = vld [vmem:[%s1 + $0x12e0] sm:$0xff]
  %v635 = vld [vmem:[%s1 + $0x12e8] sm:$0xff]
  %v636 = vld [vmem:[%s1 + $0x12f0] sm:$0xff]
  %v637 = vld [vmem:[%s1 + $0x12f8] sm:$0xff]
  %v638 = vld [vmem:[%s1 + $0x1300] sm:$0xff]
  %v639 = vld [vmem:[%s1 + $0x1308] sm:$0xff]
  %v640 = vld [vmem:[%s1 + $0x1310] sm:$0xff]
  %v641 = vld [vmem:[%s1 + $0x1318] sm:$0xff]
  %v642 = vld [vmem:[%s1 + $0x1320] sm:$0xff]
  %v643 = vld [vmem:[%s1 + $0x1328] sm:$0xff]
  %v644 = vld [vmem:[%s1 + $0x1330] sm:$0xff]
  %v645 = vld [vmem:[%s1 + $0x1338] sm:$0xff]
  %v646 = vld [vmem:[%s1 + $0x1340] sm:$0xff]
  %v647 = vld [vmem:[%s1 + $0x1348] sm:$0xff]
  %v648 = vld [vmem:[%s1 + $0x1350] sm:$0xff]
  %v649 = vld [vmem:[%s1 + $0x1358] sm:$0xff]
  %v650 = vld [vmem:[%s1 + $0x1360] sm:$0xff]
  %v651 = vld [vmem:[%s1 + $0x1368] sm:$0xff]
  %v652 = vld [vmem:[%s1 + $0x1370] sm:$0xff]
  %v653 = vld [vmem:[%s1 + $0x1378] sm:$0xff]
  %v654 = vld [vmem:[%s1 + $0x1380] sm:$0xff]
  %v655 = vld [vmem:[%s1 + $0x1388] sm:$0xff]
  %v656 = vld [vmem:[%s1 + $0x1390] sm:$0xff]
  %v657 = vld [vmem:[%s1 + $0x1398] sm:$0xff]
  %v658 = vld [vmem:[%s1 + $0x13a0] sm:$0xff]
  %v659 = vld [vmem:[%s1 + $0x13a8] sm:$0xff]
  %v660 = vld [vmem:[%s1 + $0x13b0] sm:$0xff]
  %v661 = vld [vmem:[%s1 + $0x13b8] sm:$0xff]
  %v662 = vld [vmem:[%s1 + $0x13c0] sm:$0xff]
  %v663 = vld [vmem:[%s1 + $0x13c8] sm:$0xff]
  %v664 = vld [vmem:[%s1 + $0x13d0] sm:$0xff]
  %v665 = vld [vmem:[%s1 + $0x13d8] sm:$0xff]
  %v666 = vld [vmem:[%s1 + $0x13e0] sm:$0xff]
  %v667 = vld [vmem:[%s1 + $0x13e8] sm:$0xff]
  %v668 = vld [vmem:[%s1 + $0x13f0] sm:$0xff]
  %v669 = vld [vmem:[%s1 + $0x13f8] sm:$0xff]
  %v670 = vld [vmem:[%s1 + $0x1400] sm:$0xff]
  %v671 = vld [vmem:[%s1 + $0x1408] sm:$0xff]
  %v672 = vld [vmem:[%s1 + $0x1410] sm:$0xff]
  %v673 = vld [vmem:[%s1 + $0x1418] sm:$0xff]
  %v674 = vld [vmem:[%s1 + $0x1420] sm:$0xff]
  %v675 = vld [vmem:[%s1 + $0x1428] sm:$0xff]
  %v676 = vld [vmem:[%s1 + $0x1430] sm:$0xff]
  %v677 = vld [vmem:[%s1 + $0x1438] sm:$0xff]
  %v678 = vld [vmem:[%s1 + $0x1440] sm:$0xff]
  %v679 = vld [vmem:[%s1 + $0x1448] sm:$0xff]
  %v680 = vld [vmem:[%s1 + $0x1450] sm:$0xff]
  %v681 = vld [vmem:[%s1 + $0x1458] sm:$0xff]
  %v682 = vld [vmem:[%s1 + $0x1460] sm:$0xff]
  %v683 = vld [vmem:[%s1 + $0x1468] sm:$0xff]
  %v684 = vld [vmem:[%s1 + $0x1470] sm:$0xff]
  %v685 = vld [vmem:[%s1 + $0x1478] sm:$0xff]
  %v686 = vld [vmem:[%s1 + $0x1480] sm:$0xff]
  %v687 = vld [vmem:[%s1 + $0x1488] sm:$0xff]
  %v688 = vld [vmem:[%s1 + $0x1490] sm:$0xff]
  %v689 = vld [vmem:[%s1 + $0x1498] sm:$0xff]
  %v690 = vld [vmem:[%s1 + $0x14a0] sm:$0xff]
  %v691 = vld [vmem:[%s1 + $0x14a8] sm:$0xff]
  %v692 = vld [vmem:[%s1 + $0x14b0] sm:$0xff]
  %v693 = vld [vmem:[%s1 + $0x14b8] sm:$0xff]
  %v694 = vld [vmem:[%s1 + $0x14c0] sm:$0xff]
  %v695 = vld [vmem:[%s1 + $0x14c8] sm:$0xff]
  %v696 = vld [vmem:[%s1 + $0x14d0] sm:$0xff]
  %v697 = vld [vmem:[%s1 + $0x14d8] sm:$0xff]
  %v698 = vld [vmem:[%s1 + $0x14e0] sm:$0xff]
  %v699 = vld [vmem:[%s1 + $0x14e8] sm:$0xff]
  %v700 = vld [vmem:[%s1 + $0x14f0] sm:$0xff]
  %v701 = vld [vmem:[%s1 + $0x14f8] sm:$0xff]
  %v702 = vld [vmem:[%s1 + $0x1500] sm:$0xff]
  %v703 = vld [vmem:[%s1 + $0x1508] sm:$0xff]
  %v704 = vld [vmem:[%s1 + $0x1510] sm:$0xff]
  %v705 = vld [vmem:[%s1 + $0x1518] sm:$0xff]
  %v706 = vld [vmem:[%s1 + $0x1520] sm:$0xff]
  %v707 = vld [vmem:[%s1 + $0x1528] sm:$0xff]
  %v708 = vld [vmem:[%s1 + $0x1530] sm:$0xff]
  %v709 = vld [vmem:[%s1 + $0x1538] sm:$0xff]
  %v710 = vld [vmem:[%s1 + $0x1540] sm:$0xff]
  %v711 = vld [vmem:[%s1 + $0x1548] sm:$0xff]
  %v712 = vld [vmem:[%s1 + $0x1550] sm:$0xff]
  %v713 = vld [vmem:[%s1 + $0x1558] sm:$0xff]
  %v714 = vld [vmem:[%s1 + $0x1560] sm:$0xff]
  %v715 = vld [vmem:[%s1 + $0x1568] sm:$0xff]
  %v716 = vld [vmem:[%s1 + $0x1570] sm:$0xff]
  %v717 = vld [vmem:[%s1 + $0x1578] sm:$0xff]
  %v718 = vld [vmem:[%s1 + $0x1580] sm:$0xff]
  %v719 = vld [vmem:[%s1 + $0x1588] sm:$0xff]
  %v720 = vld [vmem:[%s1 + $0x1590] sm:$0xff]
  %v721 = vld [vmem:[%s1 + $0x1598] sm:$0xff]
  %v722 = vld [vmem:[%s1 + $0x15a0] sm:$0xff]
  %v723 = vld [vmem:[%s1 + $0x15a8] sm:$0xff]
  %v724 = vld [vmem:[%s1 + $0x15b0] sm:$0xff]
  %v725 = vld [vmem:[%s1 + $0x15b8] sm:$0xff]
  %v726 = vld [vmem:[%s1 + $0x15c0] sm:$0xff]
  %v727 = vld [vmem:[%s1 + $0x15c8] sm:$0xff]
  %v728 = vld [vmem:[%s1 + $0x15d0] sm:$0xff]
  %v729 = vld [vmem:[%s1 + $0x15d8] sm:$0xff]
  %v730 = vld [vmem:[%s1 + $0x15e0] sm:$0xff]
  %v731 = vld [vmem:[%s1 + $0x15e8] sm:$0xff]
  %v732 = vld [vmem:[%s1 + $0x15f0] sm:$0xff]
  %v733 = vld [vmem:[%s1 + $0x15f8] sm:$0xff]
  %v734 = vld [vmem:[%s1 + $0x1600] sm:$0xff]
  %v735 = vld [vmem:[%s1 + $0x1608] sm:$0xff]
  %v736 = vld [vmem:[%s1 + $0x1610] sm:$0xff]
  %v737 = vld [vmem:[%s1 + $0x1618] sm:$0xff]
  %v738 = vld [vmem:[%s1 + $0x1620] sm:$0xff]
  %v739 = vld [vmem:[%s1 + $0x1628] sm:$0xff]
  %v740 = vld [vmem:[%s1 + $0x1630] sm:$0xff]
  %v741 = vld [vmem:[%s1 + $0x1638] sm:$0xff]
  %v742 = vld [vmem:[%s1 + $0x1640] sm:$0xff]
  %v743 = vld [vmem:[%s1 + $0x1648] sm:$0xff]
  %v744 = vld [vmem:[%s1 + $0x1650] sm:$0xff]
  %v745 = vld [vmem:[%s1 + $0x1658] sm:$0xff]
  %v746 = vld [vmem:[%s1 + $0x1660] sm:$0xff]
  %v747 = vld [vmem:[%s1 + $0x1668] sm:$0xff]
  %v748 = vld [vmem:[%s1 + $0x1670] sm:$0xff]
  %v749 = vld [vmem:[%s1 + $0x1678] sm:$0xff]
  %v750 = vld [vmem:[%s1 + $0x1680] sm:$0xff]
  %v751 = vld [vmem:[%s1 + $0x1688] sm:$0xff]
  %v752 = vld [vmem:[%s1 + $0x1690] sm:$0xff]
  %v753 = vld [vmem:[%s1 + $0x1698] sm:$0xff]
  %v754 = vld [vmem:[%s1 + $0x16a0] sm:$0xff]
  %v755 = vld [vmem:[%s1 + $0x16a8] sm:$0xff]
  %v756 = vld [vmem:[%s1 + $0x16b0] sm:$0xff]
  %v757 = vld [vmem:[%s1 + $0x16b8] sm:$0xff]
  %v758 = vld [vmem:[%s1 + $0x16c0] sm:$0xff]
  %v759 = vld [vmem:[%s1 + $0x16c8] sm:$0xff]
  %v760 = vld [vmem:[%s1 + $0x16d0] sm:$0xff]
  %v761 = vld [vmem:[%s1 + $0x16d8] sm:$0xff]
  %v762 = vld [vmem:[%s1 + $0x16e0] sm:$0xff]
  %v763 = vld [vmem:[%s1 + $0x16e8] sm:$0xff]
  %v764 = vld [vmem:[%s1 + $0x16f0] sm:$0xff]
  %v765 = vld [vmem:[%s1 + $0x16f8] sm:$0xff]
  %v766 = vld [vmem:[%s1 + $0x1700] sm:$0xff]
  %v767 = vld [vmem:[%s1 + $0x1708] sm:$0xff]
  %v768 = vld [vmem:[%s1 + $0x1710] sm:$0xff]
  %v769 = vld [vmem:[%s1 + $0x1718] sm:$0xff]
  %v770 = vld [vmem:[%s1 + $0x1720] sm:$0xff]
  %v771 = vld [vmem:[%s1 + $0x1728] sm:$0xff]
  %v772 = vld [vmem:[%s1 + $0x1730] sm:$0xff]
  %v773 = vld [vmem:[%s1 + $0x1738] sm:$0xff]
  %v774 = vld [vmem:[%s1 + $0x1740] sm:$0xff]
  %v775 = vld [vmem:[%s1 + $0x1748] sm:$0xff]
  %v776 = vld [vmem:[%s1 + $0x1750] sm:$0xff]
  %v777 = vld [vmem:[%s1 + $0x1758] sm:$0xff]
  %v778 = vld [vmem:[%s1 + $0x1760] sm:$0xff]
  %v779 = vld [vmem:[%s1 + $0x1768] sm:$0xff]
  %v780 = vld [vmem:[%s1 + $0x1770] sm:$0xff]
  %v781 = vld [vmem:[%s1 + $0x1778] sm:$0xff]
  %v782 = vld [vmem:[%s1 + $0x1780] sm:$0xff]
  %v783 = vld [vmem:[%s1 + $0x1788] sm:$0xff]
  %v784 = vld [vmem:[%s1 + $0x1790] sm:$0xff]
  %v785 = vld [vmem:[%s1 + $0x1798] sm:$0xff]
  %v786 = vld [vmem:[%s1 + $0x17a0] sm:$0xff]
  %v787 = vld [vmem:[%s1 + $0x17a8] sm:$0xff]
  %v788 = vld [vmem:[%s1 + $0x17b0] sm:$0xff]
  %v789 = vld [vmem:[%s1 + $0x17b8] sm:$0xff]
  %v790 = vld [vmem:[%s1 + $0x17c0] sm:$0xff]
  %v791 = vld [vmem:[%s1 + $0x17c8] sm:$0xff]
  %v792 = vld [vmem:[%s1 + $0x17d0] sm:$0xff]
  %v793 = vld [vmem:[%s1 + $0x17d8] sm:$0xff]
  %v794 = vld [vmem:[%s1 + $0x17e0] sm:$0xff]
  %v795 = vld [vmem:[%s1 + $0x17e8] sm:$0xff]
  %v796 = vld [vmem:[%s1 + $0x17f0] sm:$0xff]
  %v797 = vld [vmem:[%s1 + $0x17f8] sm:$0xff]
  %v798 = vld [vmem:[%s1 + $0x1800] sm:$0xff]
  %v799 = vld [vmem:[%s1 + $0x1808] sm:$0xff]
  %v800 = vld [vmem:[%s1 + $0x1810] sm:$0xff]
  %v801 = vld [vmem:[%s1 + $0x1818] sm:$0xff]
  %v802 = vld [vmem:[%s1 + $0x1820] sm:$0xff]
  %v803 = vld [vmem:[%s1 + $0x1828] sm:$0xff]
  %v804 = vld [vmem:[%s1 + $0x1830] sm:$0xff]
  %v805 = vld [vmem:[%s1 + $0x1838] sm:$0xff]
  %v806 = vld [vmem:[%s1 + $0x1840] sm:$0xff]
  %v807 = vld [vmem:[%s1 + $0x1848] sm:$0xff]
  %v808 = vld [vmem:[%s1 + $0x1850] sm:$0xff]
  %v809 = vld [vmem:[%s1 + $0x1858] sm:$0xff]
  %v810 = vld [vmem:[%s1 + $0x1860] sm:$0xff]
  %v811 = vld [vmem:[%s1 + $0x1868] sm:$0xff]
  %v812 = vld [vmem:[%s1 + $0x1870] sm:$0xff]
  %v813 = vld [vmem:[%s1 + $0x1878] sm:$0xff]
  %v814 = vld [vmem:[%s1 + $0x1880] sm:$0xff]
  %v815 = vld [vmem:[%s1 + $0x1888] sm:$0xff]
  %v816 = vld [vmem:[%s1 + $0x1890] sm:$0xff]
  %v817 = vld [vmem:[%s1 + $0x1898] sm:$0xff]
  %v818 = vld [vmem:[%s1 + $0x18a0] sm:$0xff]
  %v819 = vld [vmem:[%s1 + $0x18a8] sm:$0xff]
  %v820 = vld [vmem:[%s1 + $0x18b0] sm:$0xff]
  %v821 = vld [vmem:[%s1 + $0x18b8] sm:$0xff]
  %v822 = vld [vmem:[%s1 + $0x18c0] sm:$0xff]
  %v823 = vld [vmem:[%s1 + $0x18c8] sm:$0xff]
  %v824 = vld [vmem:[%s1 + $0x18d0] sm:$0xff]
  %v825 = vld [vmem:[%s1 + $0x18d8] sm:$0xff]
  %v826 = vld [vmem:[%s1 + $0x18e0] sm:$0xff]
  %v827 = vld [vmem:[%s1 + $0x18e8] sm:$0xff]
  %v828 = vld [vmem:[%s1 + $0x18f0] sm:$0xff]
  %v829 = vld [vmem:[%s1 + $0x18f8] sm:$0xff]
  %v830 = vld [vmem:[%s1 + $0x1900] sm:$0xff]
  %v831 = vld [vmem:[%s1 + $0x1908] sm:$0xff]
  %v832 = vld [vmem:[%s1 + $0x1910] sm:$0xff]
  %v833 = vld [vmem:[%s1 + $0x1918] sm:$0xff]
  %v834 = vld [vmem:[%s1 + $0x1920] sm:$0xff]
  %v835 = vld [vmem:[%s1 + $0x1928] sm:$0xff]
  %v836 = vld [vmem:[%s1 + $0x1930] sm:$0xff]
  %v837 = vld [vmem:[%s1 + $0x1938] sm:$0xff]
  %v838 = vld [vmem:[%s1 + $0x1940] sm:$0xff]
  %v839 = vld [vmem:[%s1 + $0x1948] sm:$0xff]
  %v840 = vld [vmem:[%s1 + $0x1950] sm:$0xff]
  %v841 = vld [vmem:[%s1 + $0x1958] sm:$0xff]
  %v842 = vld [vmem:[%s1 + $0x1960] sm:$0xff]
  %v843 = vld [vmem:[%s1 + $0x1968] sm:$0xff]
  %v844 = vld [vmem:[%s1 + $0x1970] sm:$0xff]
  %v845 = vld [vmem:[%s1 + $0x1978] sm:$0xff]
  %v846 = vld [vmem:[%s1 + $0x1980] sm:$0xff]
  %v847 = vld [vmem:[%s1 + $0x1988] sm:$0xff]
  %v848 = vld [vmem:[%s1 + $0x1990] sm:$0xff]
  %v849 = vld [vmem:[%s1 + $0x1998] sm:$0xff]
  %v850 = vld [vmem:[%s1 + $0x19a0] sm:$0xff]
  %v851 = vld [vmem:[%s1 + $0x19a8] sm:$0xff]
  %v852 = vld [vmem:[%s1 + $0x19b0] sm:$0xff]
  %v853 = vld [vmem:[%s1 + $0x19b8] sm:$0xff]
  %v854 = vld [vmem:[%s1 + $0x19c0] sm:$0xff]
  %v855 = vld [vmem:[%s1 + $0x19c8] sm:$0xff]
  %v856 = vld [vmem:[%s1 + $0x19d0] sm:$0xff]
  %v857 = vld [vmem:[%s1 + $0x19d8] sm:$0xff]
  %v858 = vld [vmem:[%s1 + $0x19e0] sm:$0xff]
  %v859 = vld [vmem:[%s1 + $0x19e8] sm:$0xff]
  %v860 = vld [vmem:[%s1 + $0x19f0] sm:$0xff]
  %v861 = vld [vmem:[%s1 + $0x19f8] sm:$0xff]
  %v862 = vld [vmem:[%s1 + $0x1a00] sm:$0xff]
  %v863 = vld [vmem:[%s1 + $0x1a08] sm:$0xff]
  %v864 = vld [vmem:[%s1 + $0x1a10] sm:$0xff]
  %v865 = vld [vmem:[%s1 + $0x1a18] sm:$0xff]
  %v866 = vld [vmem:[%s1 + $0x1a20] sm:$0xff]
  %v867 = vld [vmem:[%s1 + $0x1a28] sm:$0xff]
  %v868 = vld [vmem:[%s1 + $0x1a30] sm:$0xff]
  %v869 = vld [vmem:[%s1 + $0x1a38] sm:$0xff]
  %v870 = vld [vmem:[%s1 + $0x1a40] sm:$0xff]
  %v871 = vld [vmem:[%s1 + $0x1a48] sm:$0xff]
  %v872 = vld [vmem:[%s1 + $0x1a50] sm:$0xff]
  %v873 = vld [vmem:[%s1 + $0x1a58] sm:$0xff]
  %v874 = vld [vmem:[%s1 + $0x1a60] sm:$0xff]
  %v875 = vld [vmem:[%s1 + $0x1a68] sm:$0xff]
  %v876 = vld [vmem:[%s1 + $0x1a70] sm:$0xff]
  %v877 = vld [vmem:[%s1 + $0x1a78] sm:$0xff]
  %v878 = vld [vmem:[%s1 + $0x1a80] sm:$0xff]
  %v879 = vld [vmem:[%s1 + $0x1a88] sm:$0xff]
  %v880 = vld [vmem:[%s1 + $0x1a90] sm:$0xff]
  %v881 = vld [vmem:[%s1 + $0x1a98] sm:$0xff]
  %v882 = vld [vmem:[%s1 + $0x1aa0] sm:$0xff]
  %v883 = vld [vmem:[%s1 + $0x1aa8] sm:$0xff]
  %v884 = vld [vmem:[%s1 + $0x1ab0] sm:$0xff]
  %v885 = vld [vmem:[%s1 + $0x1ab8] sm:$0xff]
  %v886 = vld [vmem:[%s1 + $0x1ac0] sm:$0xff]
  %v887 = vld [vmem:[%s1 + $0x1ac8] sm:$0xff]
  %v888 = vld [vmem:[%s1 + $0x1ad0] sm:$0xff]
  %v889 = vld [vmem:[%s1 + $0x1ad8] sm:$0xff]
  %v890 = vld [vmem:[%s1 + $0x1ae0] sm:$0xff]
  %v891 = vld [vmem:[%s1 + $0x1ae8] sm:$0xff]
  %v892 = vld [vmem:[%s1 + $0x1af0] sm:$0xff]
  %v893 = vld [vmem:[%s1 + $0x1af8] sm:$0xff]
  %v894 = vld [vmem:[%s1 + $0x1b00] sm:$0xff]
  %v895 = vld [vmem:[%s1 + $0x1b08] sm:$0xff]
  %v896 = vld [vmem:[%s1 + $0x1b10] sm:$0xff]
  %v897 = vld [vmem:[%s1 + $0x1b18] sm:$0xff]
  %v898 = vld [vmem:[%s1 + $0x1b20] sm:$0xff]
  %v899 = vld [vmem:[%s1 + $0x1b28] sm:$0xff]
  %v900 = vld [vmem:[%s1 + $0x1b30] sm:$0xff]
  %v901 = vld [vmem:[%s1 + $0x1b38] sm:$0xff]
  %v902 = vld [vmem:[%s1 + $0x1b40] sm:$0xff]
  %v903 = vld [vmem:[%s1 + $0x1b48] sm:$0xff]
  %v904 = vld [vmem:[%s1 + $0x1b50] sm:$0xff]
  %v905 = vld [vmem:[%s1 + $0x1b58] sm:$0xff]
  %v906 = vld [vmem:[%s1 + $0x1b60] sm:$0xff]
  %v907 = vld [vmem:[%s1 + $0x1b68] sm:$0xff]
  %v908 = vld [vmem:[%s1 + $0x1b70] sm:$0xff]
  %v909 = vld [vmem:[%s1 + $0x1b78] sm:$0xff]
  %v910 = vld [vmem:[%s1 + $0x1b80] sm:$0xff]
  %v911 = vld [vmem:[%s1 + $0x1b88] sm:$0xff]
  %v912 = vld [vmem:[%s1 + $0x1b90] sm:$0xff]
  %v913 = vld [vmem:[%s1 + $0x1b98] sm:$0xff]
  %v914 = vld [vmem:[%s1 + $0x1ba0] sm:$0xff]
  %v915 = vld [vmem:[%s1 + $0x1ba8] sm:$0xff]
  %v916 = vld [vmem:[%s1 + $0x1bb0] sm:$0xff]
  %v917 = vld [vmem:[%s1 + $0x1bb8] sm:$0xff]
  %v918 = vld [vmem:[%s1 + $0x1bc0] sm:$0xff]
  %v919 = vld [vmem:[%s1 + $0x1bc8] sm:$0xff]
  %v920 = vld [vmem:[%s1 + $0x1bd0] sm:$0xff]
  %v921 = vld [vmem:[%s1 + $0x1bd8] sm:$0xff]
  %v922 = vld [vmem:[%s1 + $0x1be0] sm:$0xff]
  %v923 = vld [vmem:[%s1 + $0x1be8] sm:$0xff]
  %v924 = vld [vmem:[%s1 + $0x1bf0] sm:$0xff]
  %v925 = vld [vmem:[%s1 + $0x1bf8] sm:$0xff]
  %v926 = vld [vmem:[%s1 + $0x1c00] sm:$0xff]
  %v927 = vld [vmem:[%s1 + $0x1c08] sm:$0xff]
  %v928 = vld [vmem:[%s1 + $0x1c10] sm:$0xff]
  %v929 = vld [vmem:[%s1 + $0x1c18] sm:$0xff]
  %v930 = vld [vmem:[%s1 + $0x1c20] sm:$0xff]
  %v931 = vld [vmem:[%s1 + $0x1c28] sm:$0xff]
  %v932 = vld [vmem:[%s1 + $0x1c30] sm:$0xff]
  %v933 = vld [vmem:[%s1 + $0x1c38] sm:$0xff]
  %v934 = vld [vmem:[%s1 + $0x1c40] sm:$0xff]
  %v935 = vld [vmem:[%s1 + $0x1c48] sm:$0xff]
  %v936 = vld [vmem:[%s1 + $0x1c50] sm:$0xff]
  %v937 = vld [vmem:[%s1 + $0x1c58] sm:$0xff]
  %v938 = vld [vmem:[%s1 + $0x1c60] sm:$0xff]
  %v939 = vld [vmem:[%s1 + $0x1c68] sm:$0xff]
  %v940 = vld [vmem:[%s1 + $0x1c70] sm:$0xff]
  %v941 = vld [vmem:[%s1 + $0x1c78] sm:$0xff]
  %v942 = vld [vmem:[%s1 + $0x1c80] sm:$0xff]
  %v943 = vld [vmem:[%s1 + $0x1c88] sm:$0xff]
  %v944 = vld [vmem:[%s1 + $0x1c90] sm:$0xff]
  %v945 = vld [vmem:[%s1 + $0x1c98] sm:$0xff]
  %v946 = vld [vmem:[%s1 + $0x1ca0] sm:$0xff]
  %v947 = vld [vmem:[%s1 + $0x1ca8] sm:$0xff]
  %v948 = vld [vmem:[%s1 + $0x1cb0] sm:$0xff]
  %v949 = vld [vmem:[%s1 + $0x1cb8] sm:$0xff]
  %v950 = vld [vmem:[%s1 + $0x1cc0] sm:$0xff]
  %v951 = vld [vmem:[%s1 + $0x1cc8] sm:$0xff]
  %v952 = vld [vmem:[%s1 + $0x1cd0] sm:$0xff]
  %v953 = vld [vmem:[%s1 + $0x1cd8] sm:$0xff]
  %v954 = vld [vmem:[%s1 + $0x1ce0] sm:$0xff]
  %v955 = vld [vmem:[%s1 + $0x1ce8] sm:$0xff]
  %v956 = vld [vmem:[%s1 + $0x1cf0] sm:$0xff]
  %v957 = vld [vmem:[%s1 + $0x1cf8] sm:$0xff]
  %v958 = vld [vmem:[%s1 + $0x1d00] sm:$0xff]
  %v959 = vld [vmem:[%s1 + $0x1d08] sm:$0xff]
  %v960 = vld [vmem:[%s1 + $0x1d10] sm:$0xff]
  %v961 = vld [vmem:[%s1 + $0x1d18] sm:$0xff]
  %v962 = vld [vmem:[%s1 + $0x1d20] sm:$0xff]
  %v963 = vld [vmem:[%s1 + $0x1d28] sm:$0xff]
  %v964 = vld [vmem:[%s1 + $0x1d30] sm:$0xff]
  %v965 = vld [vmem:[%s1 + $0x1d38] sm:$0xff]
  %v966 = vld [vmem:[%s1 + $0x1d40] sm:$0xff]
  %v967 = vld [vmem:[%s1 + $0x1d48] sm:$0xff]
  %v968 = vld [vmem:[%s1 + $0x1d50] sm:$0xff]
  %v969 = vld [vmem:[%s1 + $0x1d58] sm:$0xff]
  %v970 = vld [vmem:[%s1 + $0x1d60] sm:$0xff]
  %v971 = vld [vmem:[%s1 + $0x1d68] sm:$0xff]
  %v972 = vld [vmem:[%s1 + $0x1d70] sm:$0xff]
  %v973 = vld [vmem:[%s1 + $0x1d78] sm:$0xff]
  %v974 = vld [vmem:[%s1 + $0x1d80] sm:$0xff]
  %v975 = vld [vmem:[%s1 + $0x1d88] sm:$0xff]
  %v976 = vld [vmem:[%s1 + $0x1d90] sm:$0xff]
  %v977 = vld [vmem:[%s1 + $0x1d98] sm:$0xff]
  %v978 = vld [vmem:[%s1 + $0x1da0] sm:$0xff]
  %v979 = vld [vmem:[%s1 + $0x1da8] sm:$0xff]
  %v980 = vld [vmem:[%s1 + $0x1db0] sm:$0xff]
  %v981 = vld [vmem:[%s1 + $0x1db8] sm:$0xff]
  %v982 = vld [vmem:[%s1 + $0x1dc0] sm:$0xff]
  %v983 = vld [vmem:[%s1 + $0x1dc8] sm:$0xff]
  %v984 = vld [vmem:[%s1 + $0x1dd0] sm:$0xff]
  %v985 = vld [vmem:[%s1 + $0x1dd8] sm:$0xff]
  %v986 = vld [vmem:[%s1 + $0x1de0] sm:$0xff]
  %v987 = vld [vmem:[%s1 + $0x1de8] sm:$0xff]
  %v988 = vld [vmem:[%s1 + $0x1df0] sm:$0xff]
  %v989 = vld [vmem:[%s1 + $0x1df8] sm:$0xff]
  %v990 = vld [vmem:[%s1 + $0x1e00] sm:$0xff]
  %v991 = vld [vmem:[%s1 + $0x1e08] sm:$0xff]
  %v992 = vld [vmem:[%s1 + $0x1e10] sm:$0xff]
  %v993 = vld [vmem:[%s1 + $0x1e18] sm:$0xff]
  %v994 = vld [vmem:[%s1 + $0x1e20] sm:$0xff]
  %v995 = vld [vmem:[%s1 + $0x1e28] sm:$0xff]
  %v996 = vld [vmem:[%s1 + $0x1e30] sm:$0xff]
  %v997 = vld [vmem:[%s1 + $0x1e38] sm:$0xff]
  %v998 = vld [vmem:[%s1 + $0x1e40] sm:$0xff]
  %v999 = vld [vmem:[%s1 + $0x1e48] sm:$0xff]
  %v1000 = vld [vmem:[%s1 + $0x1e50] sm:$0xff]
  %v1001 = vld [vmem:[%s1 + $0x1e58] sm:$0xff]
  %v1002 = vld [vmem:[%s1 + $0x1e60] sm:$0xff]
  %v1003 = vld [vmem:[%s1 + $0x1e68] sm:$0xff]
  %v1004 = vld [vmem:[%s1 + $0x1e70] sm:$0xff]
  %v1005 = vld [vmem:[%s1 + $0x1e78] sm:$0xff]
  %v1006 = vld [vmem:[%s1 + $0x1e80] sm:$0xff]
  %v1007 = vld [vmem:[%s1 + $0x1e88] sm:$0xff]
  %v1008 = vld [vmem:[%s1 + $0x1e90] sm:$0xff]
  %v1009 = vld [vmem:[%s1 + $0x1e98] sm:$0xff]
  %v1010 = vld [vmem:[%s1 + $0x1ea0] sm:$0xff]
  %v1011 = vld [vmem:[%s1 + $0x1ea8] sm:$0xff]
  %v1012 = vld [vmem:[%s1 + $0x1eb0] sm:$0xff]
  %v1013 = vld [vmem:[%s1 + $0x1eb8] sm:$0xff]
  %v1014 = vld [vmem:[%s1 + $0x1ec0] sm:$0xff]
  %v1015 = vld [vmem:[%s1 + $0x1ec8] sm:$0xff]
  %v1016 = vld [vmem:[%s1 + $0x1ed0] sm:$0xff]
  %v1017 = vld [vmem:[%s1 + $0x1ed8] sm:$0xff]
  %v1018 = vld [vmem:[%s1 + $0x1ee0] sm:$0xff]
  %v1019 = vld [vmem:[%s1 + $0x1ee8] sm:$0xff]
  %v1020 = vld [vmem:[%s1 + $0x1ef0] sm:$0xff]
  %v1021 = vld [vmem:[%s1 + $0x1ef8] sm:$0xff]
  %v1022 = vld [vmem:[%s1 + $0x1f00] sm:$0xff]
  %v1023 = vld [vmem:[%s1 + $0x1f08] sm:$0xff]
  %v1024 = vld [vmem:[%s1 + $0x1f10] sm:$0xff]
  %v1025 = vld [vmem:[%s1 + $0x1f18] sm:$0xff]
  %v1026 = vld [vmem:[%s1 + $0x1f20] sm:$0xff]
  %v1027 = vld [vmem:[%s1 + $0x1f28] sm:$0xff]
  %v1028 = vld [vmem:[%s1 + $0x1f30] sm:$0xff]
  %v1029 = vld [vmem:[%s1 + $0x1f38] sm:$0xff]
  %v1030 = vld [vmem:[%s1 + $0x1f40] sm:$0xff]
  %v1031 = vld [vmem:[%s1 + $0x1f48] sm:$0xff]
  %v1032 = vld [vmem:[%s1 + $0x1f50] sm:$0xff]
  %v1033 = vld [vmem:[%s1 + $0x1f58] sm:$0xff]
  %v1034 = vld [vmem:[%s1 + $0x1f60] sm:$0xff]
  %v1035 = vld [vmem:[%s1 + $0x1f68] sm:$0xff]
  %v1036 = vld [vmem:[%s1 + $0x1f70] sm:$0xff]
  %v1037 = vld [vmem:[%s1 + $0x1f78] sm:$0xff]
  %v1038 = vld [vmem:[%s1 + $0x1f80] sm:$0xff]
  %v1039 = vld [vmem:[%s1 + $0x1f88] sm:$0xff]
  %v1040 = vld [vmem:[%s1 + $0x1f90] sm:$0xff]
  %v1041 = vld [vmem:[%s1 + $0x1f98] sm:$0xff]
  %v1042 = vld [vmem:[%s1 + $0x1fa0] sm:$0xff]
  %v1043 = vld [vmem:[%s1 + $0x1fa8] sm:$0xff]
  %v1044 = vld [vmem:[%s1 + $0x1fb0] sm:$0xff]
  %v1045 = vld [vmem:[%s1 + $0x1fb8] sm:$0xff]
  %v1046 = vld [vmem:[%s1 + $0x1fc0] sm:$0xff]
  %v1047 = vld [vmem:[%s1 + $0x1fc8] sm:$0xff]
  %v1048 = vld [vmem:[%s1 + $0x1fd0] sm:$0xff]
  %v1049 = vld [vmem:[%s1 + $0x1fd8] sm:$0xff]
  %v1050 = vld [vmem:[%s1 + $0x1fe0] sm:$0xff]
  %v1051 = vld [vmem:[%s1 + $0x1fe8] sm:$0xff]
  %v1052 = vld [vmem:[%s1 + $0x1ff0] sm:$0xff]
  %v1053 = vld [vmem:[%s1 + $0x1ff8] sm:$0xff]
  %v1054 = vld [vmem:[%s2] sm:$0x1]
  %v1056 = vlaneseq
  %v1057 = vshrl.u32 %v1056, 7
  %v1058 = vsub.s32 0, %v1057
  %v1059 = vrot.slane %v1054, %v1058
  %v1077 = vcombine.high %v14, %v14
  %v1079 = vunpack.c.l.s4 1983009808
  %v1080 = vunpack.c.0.s8 %v1079
  %v1081 = vlaneseq
  %v1082 = vshrl.u32 %v1081, 7
  %v1083 = vsub.s32 %v1080, %v1082
  %v1084 = vrot.slane %v14, %v1083
  %v1086 = vunpack.c.l.s4 1983009808
  %v1087 = vunpack.c.0.s8 %v1086
  %v1088 = vlaneseq
  %v1089 = vshrl.u32 %v1088, 7
  %v1090 = vsub.s32 %v1087, %v1089
  %v1091 = vrot.slane %v1077, %v1090
  %v1092 = vcombine.high %v1084, %v1084
  %v1093 = vcombine.high %v1091, %v1091
  %v1094 = vcombine.high %v15, %v15
  %v1096 = vunpack.c.l.s4 1983009808
  %v1097 = vunpack.c.0.s8 %v1096
  %v1098 = vlaneseq
  %v1099 = vshrl.u32 %v1098, 7
  %v1100 = vsub.s32 %v1097, %v1099
  %v1101 = vrot.slane %v15, %v1100
  %v1103 = vunpack.c.l.s4 1983009808
  %v1104 = vunpack.c.0.s8 %v1103
  %v1105 = vlaneseq
  %v1106 = vshrl.u32 %v1105, 7
  %v1107 = vsub.s32 %v1104, %v1106
  %v1108 = vrot.slane %v1094, %v1107
  %v1109 = vcombine.high %v1101, %v1101
  %v1110 = vcombine.high %v1108, %v1108
  %v1111 = vcombine.high %v16, %v16
  %v1113 = vunpack.c.l.s4 1983009808
  %v1114 = vunpack.c.0.s8 %v1113
  %v1115 = vlaneseq
  %v1116 = vshrl.u32 %v1115, 7
  %v1117 = vsub.s32 %v1114, %v1116
  %v1118 = vrot.slane %v16, %v1117
  %v1120 = vunpack.c.l.s4 1983009808
  %v1121 = vunpack.c.0.s8 %v1120
  %v1122 = vlaneseq
  %v1123 = vshrl.u32 %v1122, 7
  %v1124 = vsub.s32 %v1121, %v1123
  %v1125 = vrot.slane %v1111, %v1124
  %v1126 = vcombine.high %v1118, %v1118
  %v1127 = vcombine.high %v1125, %v1125
  %v1128 = vcombine.high %v17, %v17
  %v1130 = vunpack.c.l.s4 1983009808
  %v1131 = vunpack.c.0.s8 %v1130
  %v1132 = vlaneseq
  %v1133 = vshrl.u32 %v1132, 7
  %v1134 = vsub.s32 %v1131, %v1133
  %v1135 = vrot.slane %v17, %v1134
  %v1137 = vunpack.c.l.s4 1983009808
  %v1138 = vunpack.c.0.s8 %v1137
  %v1139 = vlaneseq
  %v1140 = vshrl.u32 %v1139, 7
  %v1141 = vsub.s32 %v1138, %v1140
  %v1142 = vrot.slane %v1128, %v1141
  %v1143 = vcombine.high %v1135, %v1135
  %v1144 = vcombine.high %v1142, %v1142
  %v1145 = vcombine.high %v18, %v18
  %v1147 = vunpack.c.l.s4 1983009808
  %v1148 = vunpack.c.0.s8 %v1147
  %v1149 = vlaneseq
  %v1150 = vshrl.u32 %v1149, 7
  %v1151 = vsub.s32 %v1148, %v1150
  %v1152 = vrot.slane %v18, %v1151
  %v1154 = vunpack.c.l.s4 1983009808
  %v1155 = vunpack.c.0.s8 %v1154
  %v1156 = vlaneseq
  %v1157 = vshrl.u32 %v1156, 7
  %v1158 = vsub.s32 %v1155, %v1157
  %v1159 = vrot.slane %v1145, %v1158
  %v1160 = vcombine.high %v1152, %v1152
  %v1161 = vcombine.high %v1159, %v1159
  %v1162 = vcombine.high %v19, %v19
  %v1164 = vunpack.c.l.s4 1983009808
  %v1165 = vunpack.c.0.s8 %v1164
  %v1166 = vlaneseq
  %v1167 = vshrl.u32 %v1166, 7
  %v1168 = vsub.s32 %v1165, %v1167
  %v1169 = vrot.slane %v19, %v1168
  %v1171 = vunpack.c.l.s4 1983009808
  %v1172 = vunpack.c.0.s8 %v1171
  %v1173 = vlaneseq
  %v1174 = vshrl.u32 %v1173, 7
  %v1175 = vsub.s32 %v1172, %v1174
  %v1176 = vrot.slane %v1162, %v1175
  %v1177 = vcombine.high %v1169, %v1169
  %v1178 = vcombine.high %v1176, %v1176
  %v1179 = vcombine.high %v20, %v20
  %v1181 = vunpack.c.l.s4 1983009808
  %v1182 = vunpack.c.0.s8 %v1181
  %v1183 = vlaneseq
  %v1184 = vshrl.u32 %v1183, 7
  %v1185 = vsub.s32 %v1182, %v1184
  %v1186 = vrot.slane %v20, %v1185
  %v1188 = vunpack.c.l.s4 1983009808
  %v1189 = vunpack.c.0.s8 %v1188
  %v1190 = vlaneseq
  %v1191 = vshrl.u32 %v1190, 7
  %v1192 = vsub.s32 %v1189, %v1191
  %v1193 = vrot.slane %v1179, %v1192
  %v1194 = vcombine.high %v1186, %v1186
  %v1195 = vcombine.high %v1193, %v1193
  %v1196 = vcombine.high %v21, %v21
  %v1198 = vunpack.c.l.s4 1983009808
  %v1199 = vunpack.c.0.s8 %v1198
  %v1200 = vlaneseq
  %v1201 = vshrl.u32 %v1200, 7
  %v1202 = vsub.s32 %v1199, %v1201
  %v1203 = vrot.slane %v21, %v1202
  %v1205 = vunpack.c.l.s4 1983009808
  %v1206 = vunpack.c.0.s8 %v1205
  %v1207 = vlaneseq
  %v1208 = vshrl.u32 %v1207, 7
  %v1209 = vsub.s32 %v1206, %v1208
  %v1210 = vrot.slane %v1196, %v1209
  %v1211 = vcombine.high %v1203, %v1203
  %v1212 = vcombine.high %v1210, %v1210
  %v1213 = vcombine.high %v22, %v22
  %v1215 = vunpack.c.l.s4 1983009808
  %v1216 = vunpack.c.0.s8 %v1215
  %v1217 = vlaneseq
  %v1218 = vshrl.u32 %v1217, 7
  %v1219 = vsub.s32 %v1216, %v1218
  %v1220 = vrot.slane %v22, %v1219
  %v1222 = vunpack.c.l.s4 1983009808
  %v1223 = vunpack.c.0.s8 %v1222
  %v1224 = vlaneseq
  %v1225 = vshrl.u32 %v1224, 7
  %v1226 = vsub.s32 %v1223, %v1225
  %v1227 = vrot.slane %v1213, %v1226
  %v1228 = vcombine.high %v1220, %v1220
  %v1229 = vcombine.high %v1227, %v1227
  %v1230 = vcombine.high %v23, %v23
  %v1232 = vunpack.c.l.s4 1983009808
  %v1233 = vunpack.c.0.s8 %v1232
  %v1234 = vlaneseq
  %v1235 = vshrl.u32 %v1234, 7
  %v1236 = vsub.s32 %v1233, %v1235
  %v1237 = vrot.slane %v23, %v1236
  %v1239 = vunpack.c.l.s4 1983009808
  %v1240 = vunpack.c.0.s8 %v1239
  %v1241 = vlaneseq
  %v1242 = vshrl.u32 %v1241, 7
  %v1243 = vsub.s32 %v1240, %v1242
  %v1244 = vrot.slane %v1230, %v1243
  %v1245 = vcombine.high %v1237, %v1237
  %v1246 = vcombine.high %v1244, %v1244
  %v1247 = vcombine.high %v24, %v24
  %v1249 = vunpack.c.l.s4 1983009808
  %v1250 = vunpack.c.0.s8 %v1249
  %v1251 = vlaneseq
  %v1252 = vshrl.u32 %v1251, 7
  %v1253 = vsub.s32 %v1250, %v1252
  %v1254 = vrot.slane %v24, %v1253
  %v1256 = vunpack.c.l.s4 1983009808
  %v1257 = vunpack.c.0.s8 %v1256
  %v1258 = vlaneseq
  %v1259 = vshrl.u32 %v1258, 7
  %v1260 = vsub.s32 %v1257, %v1259
  %v1261 = vrot.slane %v1247, %v1260
  %v1262 = vcombine.high %v1254, %v1254
  %v1263 = vcombine.high %v1261, %v1261
  %v1264 = vcombine.high %v25, %v25
  %v1266 = vunpack.c.l.s4 1983009808
  %v1267 = vunpack.c.0.s8 %v1266
  %v1268 = vlaneseq
  %v1269 = vshrl.u32 %v1268, 7
  %v1270 = vsub.s32 %v1267, %v1269
  %v1271 = vrot.slane %v25, %v1270
  %v1273 = vunpack.c.l.s4 1983009808
  %v1274 = vunpack.c.0.s8 %v1273
  %v1275 = vlaneseq
  %v1276 = vshrl.u32 %v1275, 7
  %v1277 = vsub.s32 %v1274, %v1276
  %v1278 = vrot.slane %v1264, %v1277
  %v1279 = vcombine.high %v1271, %v1271
  %v1280 = vcombine.high %v1278, %v1278
  %v1281 = vcombine.high %v26, %v26
  %v1283 = vunpack.c.l.s4 1983009808
  %v1284 = vunpack.c.0.s8 %v1283
  %v1285 = vlaneseq
  %v1286 = vshrl.u32 %v1285, 7
  %v1287 = vsub.s32 %v1284, %v1286
  %v1288 = vrot.slane %v26, %v1287
  %v1290 = vunpack.c.l.s4 1983009808
  %v1291 = vunpack.c.0.s8 %v1290
  %v1292 = vlaneseq
  %v1293 = vshrl.u32 %v1292, 7
  %v1294 = vsub.s32 %v1291, %v1293
  %v1295 = vrot.slane %v1281, %v1294
  %v1296 = vcombine.high %v1288, %v1288
  %v1297 = vcombine.high %v1295, %v1295
  %v1298 = vcombine.high %v27, %v27
  %v1300 = vunpack.c.l.s4 1983009808
  %v1301 = vunpack.c.0.s8 %v1300
  %v1302 = vlaneseq
  %v1303 = vshrl.u32 %v1302, 7
  %v1304 = vsub.s32 %v1301, %v1303
  %v1305 = vrot.slane %v27, %v1304
  %v1307 = vunpack.c.l.s4 1983009808
  %v1308 = vunpack.c.0.s8 %v1307
  %v1309 = vlaneseq
  %v1310 = vshrl.u32 %v1309, 7
  %v1311 = vsub.s32 %v1308, %v1310
  %v1312 = vrot.slane %v1298, %v1311
  %v1313 = vcombine.high %v1305, %v1305
  %v1314 = vcombine.high %v1312, %v1312
  %v1315 = vcombine.high %v28, %v28
  %v1317 = vunpack.c.l.s4 1983009808
  %v1318 = vunpack.c.0.s8 %v1317
  %v1319 = vlaneseq
  %v1320 = vshrl.u32 %v1319, 7
  %v1321 = vsub.s32 %v1318, %v1320
  %v1322 = vrot.slane %v28, %v1321
  %v1324 = vunpack.c.l.s4 1983009808
  %v1325 = vunpack.c.0.s8 %v1324
  %v1326 = vlaneseq
  %v1327 = vshrl.u32 %v1326, 7
  %v1328 = vsub.s32 %v1325, %v1327
  %v1329 = vrot.slane %v1315, %v1328
  %v1330 = vcombine.high %v1322, %v1322
  %v1331 = vcombine.high %v1329, %v1329
  %v1332 = vcombine.high %v29, %v29
  %v1334 = vunpack.c.l.s4 1983009808
  %v1335 = vunpack.c.0.s8 %v1334
  %v1336 = vlaneseq
  %v1337 = vshrl.u32 %v1336, 7
  %v1338 = vsub.s32 %v1335, %v1337
  %v1339 = vrot.slane %v29, %v1338
  %v1341 = vunpack.c.l.s4 1983009808
  %v1342 = vunpack.c.0.s8 %v1341
  %v1343 = vlaneseq
  %v1344 = vshrl.u32 %v1343, 7
  %v1345 = vsub.s32 %v1342, %v1344
  %v1346 = vrot.slane %v1332, %v1345
  %v1347 = vcombine.high %v1339, %v1339
  %v1348 = vcombine.high %v1346, %v1346
  %1413 = vmatprep.subr.mxu0 0.0
  %1414 = vmatpush1.msra.mxu0 %v30
  %1415 = vmatprep.subr.mxu0 0.0
  %1416 = vmatpush1.msra.mxu0 %v31
  %1417 = vmatprep.subr.mxu0 0.0
  %1418 = vmatpush1.msra.mxu0 %v32
  %1419 = vmatprep.subr.mxu0 0.0
  %1420 = vmatpush1.msra.mxu0 %v33
  %1421 = vmatprep.subr.mxu0 0.0
  %1422 = vmatpush1.msra.mxu0 %v34
  %1423 = vmatprep.subr.mxu0 0.0
  %1424 = vmatpush1.msra.mxu0 %v35
  %1425 = vmatprep.subr.mxu0 0.0
  %1426 = vmatpush1.msra.mxu0 %v36
  %1427 = vmatprep.subr.mxu0 0.0
  %1428 = vmatpush1.msra.mxu0 %v37
  %1429 = vmatprep.subr.mxu0 0.0
  %1430 = vmatpush1.msra.mxu0 %v38
  %1431 = vmatprep.subr.mxu0 0.0
  %1432 = vmatpush1.msra.mxu0 %v39
  %1433 = vmatprep.subr.mxu0 0.0
  %1434 = vmatpush1.msra.mxu0 %v40
  %1435 = vmatprep.subr.mxu0 0.0
  %1436 = vmatpush1.msra.mxu0 %v41
  %1437 = vmatprep.subr.mxu0 0.0
  %1438 = vmatpush1.msra.mxu0 %v42
  %1439 = vmatprep.subr.mxu0 0.0
  %1440 = vmatpush1.msra.mxu0 %v43
  %1441 = vmatprep.subr.mxu0 0.0
  %1442 = vmatpush1.msra.mxu0 %v44
  %1443 = vmatprep.subr.mxu0 0.0
  %1444 = vmatpush1.msra.mxu0 %v45
  %1445 = vmatprep.subr.mxu0 0.0
  %1446 = vmatpush1.msra.mxu0 %v46
  %1447 = vmatprep.subr.mxu0 0.0
  %1448 = vmatpush1.msra.mxu0 %v47
  %1449 = vmatprep.subr.mxu0 0.0
  %1450 = vmatpush1.msra.mxu0 %v48
  %1451 = vmatprep.subr.mxu0 0.0
  %1452 = vmatpush1.msra.mxu0 %v49
  %1453 = vmatprep.subr.mxu0 0.0
  %1454 = vmatpush1.msra.mxu0 %v50
  %1455 = vmatprep.subr.mxu0 0.0
  %1456 = vmatpush1.msra.mxu0 %v51
  %1457 = vmatprep.subr.mxu0 0.0
  %1458 = vmatpush1.msra.mxu0 %v52
  %1459 = vmatprep.subr.mxu0 0.0
  %1460 = vmatpush1.msra.mxu0 %v53
  %1461 = vmatprep.subr.mxu0 0.0
  %1462 = vmatpush1.msra.mxu0 %v54
  %1463 = vmatprep.subr.mxu0 0.0
  %1464 = vmatpush1.msra.mxu0 %v55
  %1465 = vmatprep.subr.mxu0 0.0
  %1466 = vmatpush1.msra.mxu0 %v56
  %1467 = vmatprep.subr.mxu0 0.0
  %1468 = vmatpush1.msra.mxu0 %v57
  %1469 = vmatprep.subr.mxu0 0.0
  %1470 = vmatpush1.msra.mxu0 %v58
  %1471 = vmatprep.subr.mxu0 0.0
  %1472 = vmatpush1.msra.mxu0 %v59
  %1473 = vmatprep.subr.mxu0 0.0
  %1474 = vmatpush1.msra.mxu0 %v60
  %1475 = vmatprep.subr.mxu0 0.0
  %1476 = vmatpush1.msra.mxu0 %v61
  %1477 = vmatprep.mubr.f32.mxu0 %v1092
  %1478 = vmatmul.mubr.f32.gmra.mrb[0].mxu0 %v1084
  %v1479 = vpop.f32.mrb[0].mxu0
  %v1480 = vadd.f32 %v1059, %v1479
  %v1481 = vpop.f32.mrb[0].mxu0
  %1482 = vdwg.mxu0
  %1483 = vmatprep.subr.mxu0 0.0
  %1484 = vmatpush1.msra.mxu0 %v62
  %1485 = vmatprep.subr.mxu0 0.0
  %1486 = vmatpush1.msra.mxu0 %v63
  %1487 = vmatprep.subr.mxu0 0.0
  %1488 = vmatpush1.msra.mxu0 %v64
  %1489 = vmatprep.subr.mxu0 0.0
  %1490 = vmatpush1.msra.mxu0 %v65
  %1491 = vmatprep.subr.mxu0 0.0
  %1492 = vmatpush1.msra.mxu0 %v66
  %1493 = vmatprep.subr.mxu0 0.0
  %1494 = vmatpush1.msra.mxu0 %v67
  %1495 = vmatprep.subr.mxu0 0.0
  %1496 = vmatpush1.msra.mxu0 %v68
  %1497 = vmatprep.subr.mxu0 0.0
  %1498 = vmatpush1.msra.mxu0 %v69
  %1499 = vmatprep.subr.mxu0 0.0
  %1500 = vmatpush1.msra.mxu0 %v70
  %1501 = vmatprep.subr.mxu0 0.0
  %1502 = vmatpush1.msra.mxu0 %v71
  %1503 = vmatprep.subr.mxu0 0.0
  %1504 = vmatpush1.msra.mxu0 %v72
  %1505 = vmatprep.subr.mxu0 0.0
  %1506 = vmatpush1.msra.mxu0 %v73
  %1507 = vmatprep.subr.mxu0 0.0
  %1508 = vmatpush1.msra.mxu0 %v74
  %1509 = vmatprep.subr.mxu0 0.0
  %1510 = vmatpush1.msra.mxu0 %v75
  %1511 = vmatprep.subr.mxu0 0.0
  %1512 = vmatpush1.msra.mxu0 %v76
  %1513 = vmatprep.subr.mxu0 0.0
  %1514 = vmatpush1.msra.mxu0 %v77
  %1515 = vmatprep.subr.mxu0 0.0
  %1516 = vmatpush1.msra.mxu0 %v78
  %1517 = vmatprep.subr.mxu0 0.0
  %1518 = vmatpush1.msra.mxu0 %v79
  %1519 = vmatprep.subr.mxu0 0.0
  %1520 = vmatpush1.msra.mxu0 %v80
  %1521 = vmatprep.subr.mxu0 0.0
  %1522 = vmatpush1.msra.mxu0 %v81
  %1523 = vmatprep.subr.mxu0 0.0
  %1524 = vmatpush1.msra.mxu0 %v82
  %1525 = vmatprep.subr.mxu0 0.0
  %1526 = vmatpush1.msra.mxu0 %v83
  %1527 = vmatprep.subr.mxu0 0.0
  %1528 = vmatpush1.msra.mxu0 %v84
  %1529 = vmatprep.subr.mxu0 0.0
  %1530 = vmatpush1.msra.mxu0 %v85
  %1531 = vmatprep.subr.mxu0 0.0
  %1532 = vmatpush1.msra.mxu0 %v86
  %1533 = vmatprep.subr.mxu0 0.0
  %1534 = vmatpush1.msra.mxu0 %v87
  %1535 = vmatprep.subr.mxu0 0.0
  %1536 = vmatpush1.msra.mxu0 %v88
  %1537 = vmatprep.subr.mxu0 0.0
  %1538 = vmatpush1.msra.mxu0 %v89
  %1539 = vmatprep.subr.mxu0 0.0
  %1540 = vmatpush1.msra.mxu0 %v90
  %1541 = vmatprep.subr.mxu0 0.0
  %1542 = vmatpush1.msra.mxu0 %v91
  %1543 = vmatprep.subr.mxu0 0.0
  %1544 = vmatpush1.msra.mxu0 %v92
  %1545 = vmatprep.subr.mxu0 0.0
  %1546 = vmatpush1.msra.mxu0 %v93
  %1547 = vmatprep.mubr.f32.mxu0 %v1093
  %1548 = vmatmul.mubr.f32.gmra.mrb[0].mxu0 %v1091
  %v1549 = vpop.f32.mrb[0].mxu0
  %v1550 = vadd.f32 %v1480, %v1549
  %v1551 = vpop.f32.mrb[0].mxu0
  %1552 = vdwg.mxu0
  %1553 = vmatprep.subr.mxu0 0.0
  %1554 = vmatpush1.msra.mxu0 %v94
  %1555 = vmatprep.subr.mxu0 0.0
  %1556 = vmatpush1.msra.mxu0 %v95
  %1557 = vmatprep.subr.mxu0 0.0
  %1558 = vmatpush1.msra.mxu0 %v96
  %1559 = vmatprep.subr.mxu0 0.0
  %1560 = vmatpush1.msra.mxu0 %v97
  %1561 = vmatprep.subr.mxu0 0.0
  %1562 = vmatpush1.msra.mxu0 %v98
  %1563 = vmatprep.subr.mxu0 0.0
  %1564 = vmatpush1.msra.mxu0 %v99
  %1565 = vmatprep.subr.mxu0 0.0
  %1566 = vmatpush1.msra.mxu0 %v100
  %1567 = vmatprep.subr.mxu0 0.0
  %1568 = vmatpush1.msra.mxu0 %v101
  %1569 = vmatprep.subr.mxu0 0.0
  %1570 = vmatpush1.msra.mxu0 %v102
  %1571 = vmatprep.subr.mxu0 0.0
  %1572 = vmatpush1.msra.mxu0 %v103
  %1573 = vmatprep.subr.mxu0 0.0
  %1574 = vmatpush1.msra.mxu0 %v104
  %1575 = vmatprep.subr.mxu0 0.0
  %1576 = vmatpush1.msra.mxu0 %v105
  %1577 = vmatprep.subr.mxu0 0.0
  %1578 = vmatpush1.msra.mxu0 %v106
  %1579 = vmatprep.subr.mxu0 0.0
  %1580 = vmatpush1.msra.mxu0 %v107
  %1581 = vmatprep.subr.mxu0 0.0
  %1582 = vmatpush1.msra.mxu0 %v108
  %1583 = vmatprep.subr.mxu0 0.0
  %1584 = vmatpush1.msra.mxu0 %v109
  %1585 = vmatprep.subr.mxu0 0.0
  %1586 = vmatpush1.msra.mxu0 %v110
  %1587 = vmatprep.subr.mxu0 0.0
  %1588 = vmatpush1.msra.mxu0 %v111
  %1589 = vmatprep.subr.mxu0 0.0
  %1590 = vmatpush1.msra.mxu0 %v112
  %1591 = vmatprep.subr.mxu0 0.0
  %1592 = vmatpush1.msra.mxu0 %v113
  %1593 = vmatprep.subr.mxu0 0.0
  %1594 = vmatpush1.msra.mxu0 %v114
  %1595 = vmatprep.subr.mxu0 0.0
  %1596 = vmatpush1.msra.mxu0 %v115
  %1597 = vmatprep.subr.mxu0 0.0
  %1598 = vmatpush1.msra.mxu0 %v116
  %1599 = vmatprep.subr.mxu0 0.0
  %1600 = vmatpush1.msra.mxu0 %v117
  %1601 = vmatprep.subr.mxu0 0.0
  %1602 = vmatpush1.msra.mxu0 %v118
  %1603 = vmatprep.subr.mxu0 0.0
  %1604 = vmatpush1.msra.mxu0 %v119
  %1605 = vmatprep.subr.mxu0 0.0
  %1606 = vmatpush1.msra.mxu0 %v120
  %1607 = vmatprep.subr.mxu0 0.0
  %1608 = vmatpush1.msra.mxu0 %v121
  %1609 = vmatprep.subr.mxu0 0.0
  %1610 = vmatpush1.msra.mxu0 %v122
  %1611 = vmatprep.subr.mxu0 0.0
  %1612 = vmatpush1.msra.mxu0 %v123
  %1613 = vmatprep.subr.mxu0 0.0
  %1614 = vmatpush1.msra.mxu0 %v124
  %1615 = vmatprep.subr.mxu0 0.0
  %1616 = vmatpush1.msra.mxu0 %v125
  %1617 = vmatprep.mubr.f32.mxu0 %v1109
  %1618 = vmatmul.mubr.f32.gmra.mrb[0].mxu0 %v1101
  %v1619 = vpop.f32.mrb[0].mxu0
  %v1620 = vadd.f32 %v1550, %v1619
  %v1621 = vpop.f32.mrb[0].mxu0
  %1622 = vdwg.mxu0
  %1623 = vmatprep.subr.mxu0 0.0
  %1624 = vmatpush1.msra.mxu0 %v126
  %1625 = vmatprep.subr.mxu0 0.0
  %1626 = vmatpush1.msra.mxu0 %v127
  %1627 = vmatprep.subr.mxu0 0.0
  %1628 = vmatpush1.msra.mxu0 %v128
  %1629 = vmatprep.subr.mxu0 0.0
  %1630 = vmatpush1.msra.mxu0 %v129
  %1631 = vmatprep.subr.mxu0 0.0
  %1632 = vmatpush1.msra.mxu0 %v130
  %1633 = vmatprep.subr.mxu0 0.0
  %1634 = vmatpush1.msra.mxu0 %v131
  %1635 = vmatprep.subr.mxu0 0.0
  %1636 = vmatpush1.msra.mxu0 %v132
  %1637 = vmatprep.subr.mxu0 0.0
  %1638 = vmatpush1.msra.mxu0 %v133
  %1639 = vmatprep.subr.mxu0 0.0
  %1640 = vmatpush1.msra.mxu0 %v134
  %1641 = vmatprep.subr.mxu0 0.0
  %1642 = vmatpush1.msra.mxu0 %v135
  %1643 = vmatprep.subr.mxu0 0.0
  %1644 = vmatpush1.msra.mxu0 %v136
  %1645 = vmatprep.subr.mxu0 0.0
  %1646 = vmatpush1.msra.mxu0 %v137
  %1647 = vmatprep.subr.mxu0 0.0
  %1648 = vmatpush1.msra.mxu0 %v138
  %1649 = vmatprep.subr.mxu0 0.0
  %1650 = vmatpush1.msra.mxu0 %v139
  %1651 = vmatprep.subr.mxu0 0.0
  %1652 = vmatpush1.msra.mxu0 %v140
  %1653 = vmatprep.subr.mxu0 0.0
  %1654 = vmatpush1.msra.mxu0 %v141
  %1655 = vmatprep.subr.mxu0 0.0
  %1656 = vmatpush1.msra.mxu0 %v142
  %1657 = vmatprep.subr.mxu0 0.0
  %1658 = vmatpush1.msra.mxu0 %v143
  %1659 = vmatprep.subr.mxu0 0.0
  %1660 = vmatpush1.msra.mxu0 %v144
  %1661 = vmatprep.subr.mxu0 0.0
  %1662 = vmatpush1.msra.mxu0 %v145
  %1663 = vmatprep.subr.mxu0 0.0
  %1664 = vmatpush1.msra.mxu0 %v146
  %1665 = vmatprep.subr.mxu0 0.0
  %1666 = vmatpush1.msra.mxu0 %v147
  %1667 = vmatprep.subr.mxu0 0.0
  %1668 = vmatpush1.msra.mxu0 %v148
  %1669 = vmatprep.subr.mxu0 0.0
  %1670 = vmatpush1.msra.mxu0 %v149
  %1671 = vmatprep.subr.mxu0 0.0
  %1672 = vmatpush1.msra.mxu0 %v150
  %1673 = vmatprep.subr.mxu0 0.0
  %1674 = vmatpush1.msra.mxu0 %v151
  %1675 = vmatprep.subr.mxu0 0.0
  %1676 = vmatpush1.msra.mxu0 %v152
  %1677 = vmatprep.subr.mxu0 0.0
  %1678 = vmatpush1.msra.mxu0 %v153
  %1679 = vmatprep.subr.mxu0 0.0
  %1680 = vmatpush1.msra.mxu0 %v154
  %1681 = vmatprep.subr.mxu0 0.0
  %1682 = vmatpush1.msra.mxu0 %v155
  %1683 = vmatprep.subr.mxu0 0.0
  %1684 = vmatpush1.msra.mxu0 %v156
  %1685 = vmatprep.subr.mxu0 0.0
  %1686 = vmatpush1.msra.mxu0 %v157
  %1687 = vmatprep.mubr.f32.mxu0 %v1110
  %1688 = vmatmul.mubr.f32.gmra.mrb[0].mxu0 %v1108
  %v1689 = vpop.f32.mrb[0].mxu0
  %v1690 = vadd.f32 %v1620, %v1689
  %v1691 = vpop.f32.mrb[0].mxu0
  %1692 = vdwg.mxu0
  %1693 = vmatprep.subr.mxu0 0.0
  %1694 = vmatpush1.msra.mxu0 %v158
  %1695 = vmatprep.subr.mxu0 0.0
  %1696 = vmatpush1.msra.mxu0 %v159
  %1697 = vmatprep.subr.mxu0 0.0
  %1698 = vmatpush1.msra.mxu0 %v160
  %1699 = vmatprep.subr.mxu0 0.0
  %1700 = vmatpush1.msra.mxu0 %v161
  %1701 = vmatprep.subr.mxu0 0.0
  %1702 = vmatpush1.msra.mxu0 %v162
  %1703 = vmatprep.subr.mxu0 0.0
  %1704 = vmatpush1.msra.mxu0 %v163
  %1705 = vmatprep.subr.mxu0 0.0
  %1706 = vmatpush1.msra.mxu0 %v164
  %1707 = vmatprep.subr.mxu0 0.0
  %1708 = vmatpush1.msra.mxu0 %v165
  %1709 = vmatprep.subr.mxu0 0.0
  %1710 = vmatpush1.msra.mxu0 %v166
  %1711 = vmatprep.subr.mxu0 0.0
  %1712 = vmatpush1.msra.mxu0 %v167
  %1713 = vmatprep.subr.mxu0 0.0
  %1714 = vmatpush1.msra.mxu0 %v168
  %1715 = vmatprep.subr.mxu0 0.0
  %1716 = vmatpush1.msra.mxu0 %v169
  %1717 = vmatprep.subr.mxu0 0.0
  %1718 = vmatpush1.msra.mxu0 %v170
  %1719 = vmatprep.subr.mxu0 0.0
  %1720 = vmatpush1.msra.mxu0 %v171
  %1721 = vmatprep.subr.mxu0 0.0
  %1722 = vmatpush1.msra.mxu0 %v172
  %1723 = vmatprep.subr.mxu0 0.0
  %1724 = vmatpush1.msra.mxu0 %v173
  %1725 = vmatprep.subr.mxu0 0.0
  %1726 = vmatpush1.msra.mxu0 %v174
  %1727 = vmatprep.subr.mxu0 0.0
  %1728 = vmatpush1.msra.mxu0 %v175
  %1729 = vmatprep.subr.mxu0 0.0
  %1730 = vmatpush1.msra.mxu0 %v176
  %1731 = vmatprep.subr.mxu0 0.0
  %1732 = vmatpush1.msra.mxu0 %v177
  %1733 = vmatprep.subr.mxu0 0.0
  %1734 = vmatpush1.msra.mxu0 %v178
  %1735 = vmatprep.subr.mxu0 0.0
  %1736 = vmatpush1.msra.mxu0 %v179
  %1737 = vmatprep.subr.mxu0 0.0
  %1738 = vmatpush1.msra.mxu0 %v180
  %1739 = vmatprep.subr.mxu0 0.0
  %1740 = vmatpush1.msra.mxu0 %v181
  %1741 = vmatprep.subr.mxu0 0.0
  %1742 = vmatpush1.msra.mxu0 %v182
  %1743 = vmatprep.subr.mxu0 0.0
  %1744 = vmatpush1.msra.mxu0 %v183
  %1745 = vmatprep.subr.mxu0 0.0
  %1746 = vmatpush1.msra.mxu0 %v184
  %1747 = vmatprep.subr.mxu0 0.0
  %1748 = vmatpush1.msra.mxu0 %v185
  %1749 = vmatprep.subr.mxu0 0.0
  %1750 = vmatpush1.msra.mxu0 %v186
  %1751 = vmatprep.subr.mxu0 0.0
  %1752 = vmatpush1.msra.mxu0 %v187
  %1753 = vmatprep.subr.mxu0 0.0
  %1754 = vmatpush1.msra.mxu0 %v188
  %1755 = vmatprep.subr.mxu0 0.0
  %1756 = vmatpush1.msra.mxu0 %v189
  %1757 = vmatprep.mubr.f32.mxu0 %v1126
  %1758 = vmatmul.mubr.f32.gmra.mrb[0].mxu0 %v1118
  %v1759 = vpop.f32.mrb[0].mxu0
  %v1760 = vadd.f32 %v1690, %v1759
  %v1761 = vpop.f32.mrb[0].mxu0
  %1762 = vdwg.mxu0
  %1763 = vmatprep.subr.mxu0 0.0
  %1764 = vmatpush1.msra.mxu0 %v190
  %1765 = vmatprep.subr.mxu0 0.0
  %1766 = vmatpush1.msra.mxu0 %v191
  %1767 = vmatprep.subr.mxu0 0.0
  %1768 = vmatpush1.msra.mxu0 %v192
  %1769 = vmatprep.subr.mxu0 0.0
  %1770 = vmatpush1.msra.mxu0 %v193
  %1771 = vmatprep.subr.mxu0 0.0
  %1772 = vmatpush1.msra.mxu0 %v194
  %1773 = vmatprep.subr.mxu0 0.0
  %1774 = vmatpush1.msra.mxu0 %v195
  %1775 = vmatprep.subr.mxu0 0.0
  %1776 = vmatpush1.msra.mxu0 %v196
  %1777 = vmatprep.subr.mxu0 0.0
  %1778 = vmatpush1.msra.mxu0 %v197
  %1779 = vmatprep.subr.mxu0 0.0
  %1780 = vmatpush1.msra.mxu0 %v198
  %1781 = vmatprep.subr.mxu0 0.0
  %1782 = vmatpush1.msra.mxu0 %v199
  %1783 = vmatprep.subr.mxu0 0.0
  %1784 = vmatpush1.msra.mxu0 %v200
  %1785 = vmatprep.subr.mxu0 0.0
  %1786 = vmatpush1.msra.mxu0 %v201
  %1787 = vmatprep.subr.mxu0 0.0
  %1788 = vmatpush1.msra.mxu0 %v202
  %1789 = vmatprep.subr.mxu0 0.0
  %1790 = vmatpush1.msra.mxu0 %v203
  %1791 = vmatprep.subr.mxu0 0.0
  %1792 = vmatpush1.msra.mxu0 %v204
  %1793 = vmatprep.subr.mxu0 0.0
  %1794 = vmatpush1.msra.mxu0 %v205
  %1795 = vmatprep.subr.mxu0 0.0
  %1796 = vmatpush1.msra.mxu0 %v206
  %1797 = vmatprep.subr.mxu0 0.0
  %1798 = vmatpush1.msra.mxu0 %v207
  %1799 = vmatprep.subr.mxu0 0.0
  %1800 = vmatpush1.msra.mxu0 %v208
  %1801 = vmatprep.subr.mxu0 0.0
  %1802 = vmatpush1.msra.mxu0 %v209
  %1803 = vmatprep.subr.mxu0 0.0
  %1804 = vmatpush1.msra.mxu0 %v210
  %1805 = vmatprep.subr.mxu0 0.0
  %1806 = vmatpush1.msra.mxu0 %v211
  %1807 = vmatprep.subr.mxu0 0.0
  %1808 = vmatpush1.msra.mxu0 %v212
  %1809 = vmatprep.subr.mxu0 0.0
  %1810 = vmatpush1.msra.mxu0 %v213
  %1811 = vmatprep.subr.mxu0 0.0
  %1812 = vmatpush1.msra.mxu0 %v214
  %1813 = vmatprep.subr.mxu0 0.0
  %1814 = vmatpush1.msra.mxu0 %v215
  %1815 = vmatprep.subr.mxu0 0.0
  %1816 = vmatpush1.msra.mxu0 %v216
  %1817 = vmatprep.subr.mxu0 0.0
  %1818 = vmatpush1.msra.mxu0 %v217
  %1819 = vmatprep.subr.mxu0 0.0
  %1820 = vmatpush1.msra.mxu0 %v218
  %1821 = vmatprep.subr.mxu0 0.0
  %1822 = vmatpush1.msra.mxu0 %v219
  %1823 = vmatprep.subr.mxu0 0.0
  %1824 = vmatpush1.msra.mxu0 %v220
  %1825 = vmatprep.subr.mxu0 0.0
  %1826 = vmatpush1.msra.mxu0 %v221
  %1827 = vmatprep.mubr.f32.mxu0 %v1127
  %1828 = vmatmul.mubr.f32.gmra.mrb[0].mxu0 %v1125
  %v1829 = vpop.f32.mrb[0].mxu0
  %v1830 = vadd.f32 %v1760, %v1829
  %v1831 = vpop.f32.mrb[0].mxu0
  %1832 = vdwg.mxu0
  %1833 = vmatprep.subr.mxu0 0.0
  %1834 = vmatpush1.msra.mxu0 %v222
  %1835 = vmatprep.subr.mxu0 0.0
  %1836 = vmatpush1.msra.mxu0 %v223
  %1837 = vmatprep.subr.mxu0 0.0
  %1838 = vmatpush1.msra.mxu0 %v224
  %1839 = vmatprep.subr.mxu0 0.0
  %1840 = vmatpush1.msra.mxu0 %v225
  %1841 = vmatprep.subr.mxu0 0.0
  %1842 = vmatpush1.msra.mxu0 %v226
  %1843 = vmatprep.subr.mxu0 0.0
  %1844 = vmatpush1.msra.mxu0 %v227
  %1845 = vmatprep.subr.mxu0 0.0
  %1846 = vmatpush1.msra.mxu0 %v228
  %1847 = vmatprep.subr.mxu0 0.0
  %1848 = vmatpush1.msra.mxu0 %v229
  %1849 = vmatprep.subr.mxu0 0.0
  %1850 = vmatpush1.msra.mxu0 %v230
  %1851 = vmatprep.subr.mxu0 0.0
  %1852 = vmatpush1.msra.mxu0 %v231
  %1853 = vmatprep.subr.mxu0 0.0
  %1854 = vmatpush1.msra.mxu0 %v232
  %1855 = vmatprep.subr.mxu0 0.0
  %1856 = vmatpush1.msra.mxu0 %v233
  %1857 = vmatprep.subr.mxu0 0.0
  %1858 = vmatpush1.msra.mxu0 %v234
  %1859 = vmatprep.subr.mxu0 0.0
  %1860 = vmatpush1.msra.mxu0 %v235
  %1861 = vmatprep.subr.mxu0 0.0
  %1862 = vmatpush1.msra.mxu0 %v236
  %1863 = vmatprep.subr.mxu0 0.0
  %1864 = vmatpush1.msra.mxu0 %v237
  %1865 = vmatprep.subr.mxu0 0.0
  %1866 = vmatpush1.msra.mxu0 %v238
  %1867 = vmatprep.subr.mxu0 0.0
  %1868 = vmatpush1.msra.mxu0 %v239
  %1869 = vmatprep.subr.mxu0 0.0
  %1870 = vmatpush1.msra.mxu0 %v240
  %1871 = vmatprep.subr.mxu0 0.0
  %1872 = vmatpush1.msra.mxu0 %v241
  %1873 = vmatprep.subr.mxu0 0.0
  %1874 = vmatpush1.msra.mxu0 %v242
  %1875 = vmatprep.subr.mxu0 0.0
  %1876 = vmatpush1.msra.mxu0 %v243
  %1877 = vmatprep.subr.mxu0 0.0
  %1878 = vmatpush1.msra.mxu0 %v244
  %1879 = vmatprep.subr.mxu0 0.0
  %1880 = vmatpush1.msra.mxu0 %v245
  %1881 = vmatprep.subr.mxu0 0.0
  %1882 = vmatpush1.msra.mxu0 %v246
  %1883 = vmatprep.subr.mxu0 0.0
  %1884 = vmatpush1.msra.mxu0 %v247
  %1885 = vmatprep.subr.mxu0 0.0
  %1886 = vmatpush1.msra.mxu0 %v248
  %1887 = vmatprep.subr.mxu0 0.0
  %1888 = vmatpush1.msra.mxu0 %v249
  %1889 = vmatprep.subr.mxu0 0.0
  %1890 = vmatpush1.msra.mxu0 %v250
  %1891 = vmatprep.subr.mxu0 0.0
  %1892 = vmatpush1.msra.mxu0 %v251
  %1893 = vmatprep.subr.mxu0 0.0
  %1894 = vmatpush1.msra.mxu0 %v252
  %1895 = vmatprep.subr.mxu0 0.0
  %1896 = vmatpush1.msra.mxu0 %v253
  %1897 = vmatprep.mubr.f32.mxu0 %v1143
  %1898 = vmatmul.mubr.f32.gmra.mrb[0].mxu0 %v1135
  %v1899 = vpop.f32.mrb[0].mxu0
  %v1900 = vadd.f32 %v1830, %v1899
  %v1901 = vpop.f32.mrb[0].mxu0
  %1902 = vdwg.mxu0
  %1903 = vmatprep.subr.mxu0 0.0
  %1904 = vmatpush1.msra.mxu0 %v254
  %1905 = vmatprep.subr.mxu0 0.0
  %1906 = vmatpush1.msra.mxu0 %v255
  %1907 = vmatprep.subr.mxu0 0.0
  %1908 = vmatpush1.msra.mxu0 %v256
  %1909 = vmatprep.subr.mxu0 0.0
  %1910 = vmatpush1.msra.mxu0 %v257
  %1911 = vmatprep.subr.mxu0 0.0
  %1912 = vmatpush1.msra.mxu0 %v258
  %1913 = vmatprep.subr.mxu0 0.0
  %1914 = vmatpush1.msra.mxu0 %v259
  %1915 = vmatprep.subr.mxu0 0.0
  %1916 = vmatpush1.msra.mxu0 %v260
  %1917 = vmatprep.subr.mxu0 0.0
  %1918 = vmatpush1.msra.mxu0 %v261
  %1919 = vmatprep.subr.mxu0 0.0
  %1920 = vmatpush1.msra.mxu0 %v262
  %1921 = vmatprep.subr.mxu0 0.0
  %1922 = vmatpush1.msra.mxu0 %v263
  %1923 = vmatprep.subr.mxu0 0.0
  %1924 = vmatpush1.msra.mxu0 %v264
  %1925 = vmatprep.subr.mxu0 0.0
  %1926 = vmatpush1.msra.mxu0 %v265
  %1927 = vmatprep.subr.mxu0 0.0
  %1928 = vmatpush1.msra.mxu0 %v266
  %1929 = vmatprep.subr.mxu0 0.0
  %1930 = vmatpush1.msra.mxu0 %v267
  %1931 = vmatprep.subr.mxu0 0.0
  %1932 = vmatpush1.msra.mxu0 %v268
  %1933 = vmatprep.subr.mxu0 0.0
  %1934 = vmatpush1.msra.mxu0 %v269
  %1935 = vmatprep.subr.mxu0 0.0
  %1936 = vmatpush1.msra.mxu0 %v270
  %1937 = vmatprep.subr.mxu0 0.0
  %1938 = vmatpush1.msra.mxu0 %v271
  %1939 = vmatprep.subr.mxu0 0.0
  %1940 = vmatpush1.msra.mxu0 %v272
  %1941 = vmatprep.subr.mxu0 0.0
  %1942 = vmatpush1.msra.mxu0 %v273
  %1943 = vmatprep.subr.mxu0 0.0
  %1944 = vmatpush1.msra.mxu0 %v274
  %1945 = vmatprep.subr.mxu0 0.0
  %1946 = vmatpush1.msra.mxu0 %v275
  %1947 = vmatprep.subr.mxu0 0.0
  %1948 = vmatpush1.msra.mxu0 %v276
  %1949 = vmatprep.subr.mxu0 0.0
  %1950 = vmatpush1.msra.mxu0 %v277
  %1951 = vmatprep.subr.mxu0 0.0
  %1952 = vmatpush1.msra.mxu0 %v278
  %1953 = vmatprep.subr.mxu0 0.0
  %1954 = vmatpush1.msra.mxu0 %v279
  %1955 = vmatprep.subr.mxu0 0.0
  %1956 = vmatpush1.msra.mxu0 %v280
  %1957 = vmatprep.subr.mxu0 0.0
  %1958 = vmatpush1.msra.mxu0 %v281
  %1959 = vmatprep.subr.mxu0 0.0
  %1960 = vmatpush1.msra.mxu0 %v282
  %1961 = vmatprep.subr.mxu0 0.0
  %1962 = vmatpush1.msra.mxu0 %v283
  %1963 = vmatprep.subr.mxu0 0.0
  %1964 = vmatpush1.msra.mxu0 %v284
  %1965 = vmatprep.subr.mxu0 0.0
  %1966 = vmatpush1.msra.mxu0 %v285
  %1967 = vmatprep.mubr.f32.mxu0 %v1144
  %1968 = vmatmul.mubr.f32.gmra.mrb[0].mxu0 %v1142
  %v1969 = vpop.f32.mrb[0].mxu0
  %v1970 = vadd.f32 %v1900, %v1969
  %v1971 = vpop.f32.mrb[0].mxu0
  %1972 = vdwg.mxu0
  %1973 = vmatprep.subr.mxu0 0.0
  %1974 = vmatpush1.msra.mxu0 %v286
  %1975 = vmatprep.subr.mxu0 0.0
  %1976 = vmatpush1.msra.mxu0 %v287
  %1977 = vmatprep.subr.mxu0 0.0
  %1978 = vmatpush1.msra.mxu0 %v288
  %1979 = vmatprep.subr.mxu0 0.0
  %1980 = vmatpush1.msra.mxu0 %v289
  %1981 = vmatprep.subr.mxu0 0.0
  %1982 = vmatpush1.msra.mxu0 %v290
  %1983 = vmatprep.subr.mxu0 0.0
  %1984 = vmatpush1.msra.mxu0 %v291
  %1985 = vmatprep.subr.mxu0 0.0
  %1986 = vmatpush1.msra.mxu0 %v292
  %1987 = vmatprep.subr.mxu0 0.0
  %1988 = vmatpush1.msra.mxu0 %v293
  %1989 = vmatprep.subr.mxu0 0.0
  %1990 = vmatpush1.msra.mxu0 %v294
  %1991 = vmatprep.subr.mxu0 0.0
  %1992 = vmatpush1.msra.mxu0 %v295
  %1993 = vmatprep.subr.mxu0 0.0
  %1994 = vmatpush1.msra.mxu0 %v296
  %1995 = vmatprep.subr.mxu0 0.0
  %1996 = vmatpush1.msra.mxu0 %v297
  %1997 = vmatprep.subr.mxu0 0.0
  %1998 = vmatpush1.msra.mxu0 %v298
  %1999 = vmatprep.subr.mxu0 0.0
  %2000 = vmatpush1.msra.mxu0 %v299
  %2001 = vmatprep.subr.mxu0 0.0
  %2002 = vmatpush1.msra.mxu0 %v300
  %2003 = vmatprep.subr.mxu0 0.0
  %2004 = vmatpush1.msra.mxu0 %v301
  %2005 = vmatprep.subr.mxu0 0.0
  %2006 = vmatpush1.msra.mxu0 %v302
  %2007 = vmatprep.subr.mxu0 0.0
  %2008 = vmatpush1.msra.mxu0 %v303
  %2009 = vmatprep.subr.mxu0 0.0
  %2010 = vmatpush1.msra.mxu0 %v304
  %2011 = vmatprep.subr.mxu0 0.0
  %2012 = vmatpush1.msra.mxu0 %v305
  %2013 = vmatprep.subr.mxu0 0.0
  %2014 = vmatpush1.msra.mxu0 %v306
  %2015 = vmatprep.subr.mxu0 0.0
  %2016 = vmatpush1.msra.mxu0 %v307
  %2017 = vmatprep.subr.mxu0 0.0
  %2018 = vmatpush1.msra.mxu0 %v308
  %2019 = vmatprep.subr.mxu0 0.0
  %2020 = vmatpush1.msra.mxu0 %v309
  %2021 = vmatprep.subr.mxu0 0.0
  %2022 = vmatpush1.msra.mxu0 %v310
  %2023 = vmatprep.subr.mxu0 0.0
  %2024 = vmatpush1.msra.mxu0 %v311
  %2025 = vmatprep.subr.mxu0 0.0
  %2026 = vmatpush1.msra.mxu0 %v312
  %2027 = vmatprep.subr.mxu0 0.0
  %2028 = vmatpush1.msra.mxu0 %v313
  %2029 = vmatprep.subr.mxu0 0.0
  %2030 = vmatpush1.msra.mxu0 %v314
  %2031 = vmatprep.subr.mxu0 0.0
  %2032 = vmatpush1.msra.mxu0 %v315
  %2033 = vmatprep.subr.mxu0 0.0
  %2034 = vmatpush1.msra.mxu0 %v316
  %2035 = vmatprep.subr.mxu0 0.0
  %2036 = vmatpush1.msra.mxu0 %v317
  %2037 = vmatprep.mubr.f32.mxu0 %v1160
  %2038 = vmatmul.mubr.f32.gmra.mrb[0].mxu0 %v1152
  %v2039 = vpop.f32.mrb[0].mxu0
  %v2040 = vadd.f32 %v1970, %v2039
  %v2041 = vpop.f32.mrb[0].mxu0
  %2042 = vdwg.mxu0
  %2043 = vmatprep.subr.mxu0 0.0
  %2044 = vmatpush1.msra.mxu0 %v318
  %2045 = vmatprep.subr.mxu0 0.0
  %2046 = vmatpush1.msra.mxu0 %v319
  %2047 = vmatprep.subr.mxu0 0.0
  %2048 = vmatpush1.msra.mxu0 %v320
  %2049 = vmatprep.subr.mxu0 0.0
  %2050 = vmatpush1.msra.mxu0 %v321
  %2051 = vmatprep.subr.mxu0 0.0
  %2052 = vmatpush1.msra.mxu0 %v322
  %2053 = vmatprep.subr.mxu0 0.0
  %2054 = vmatpush1.msra.mxu0 %v323
  %2055 = vmatprep.subr.mxu0 0.0
  %2056 = vmatpush1.msra.mxu0 %v324
  %2057 = vmatprep.subr.mxu0 0.0
  %2058 = vmatpush1.msra.mxu0 %v325
  %2059 = vmatprep.subr.mxu0 0.0
  %2060 = vmatpush1.msra.mxu0 %v326
  %2061 = vmatprep.subr.mxu0 0.0
  %2062 = vmatpush1.msra.mxu0 %v327
  %2063 = vmatprep.subr.mxu0 0.0
  %2064 = vmatpush1.msra.mxu0 %v328
  %2065 = vmatprep.subr.mxu0 0.0
  %2066 = vmatpush1.msra.mxu0 %v329
  %2067 = vmatprep.subr.mxu0 0.0
  %2068 = vmatpush1.msra.mxu0 %v330
  %2069 = vmatprep.subr.mxu0 0.0
  %2070 = vmatpush1.msra.mxu0 %v331
  %2071 = vmatprep.subr.mxu0 0.0
  %2072 = vmatpush1.msra.mxu0 %v332
  %2073 = vmatprep.subr.mxu0 0.0
  %2074 = vmatpush1.msra.mxu0 %v333
  %2075 = vmatprep.subr.mxu0 0.0
  %2076 = vmatpush1.msra.mxu0 %v334
  %2077 = vmatprep.subr.mxu0 0.0
  %2078 = vmatpush1.msra.mxu0 %v335
  %2079 = vmatprep.subr.mxu0 0.0
  %2080 = vmatpush1.msra.mxu0 %v336
  %2081 = vmatprep.subr.mxu0 0.0
  %2082 = vmatpush1.msra.mxu0 %v337
  %2083 = vmatprep.subr.mxu0 0.0
  %2084 = vmatpush1.msra.mxu0 %v338
  %2085 = vmatprep.subr.mxu0 0.0
  %2086 = vmatpush1.msra.mxu0 %v339
  %2087 = vmatprep.subr.mxu0 0.0
  %2088 = vmatpush1.msra.mxu0 %v340
  %2089 = vmatprep.subr.mxu0 0.0
  %2090 = vmatpush1.msra.mxu0 %v341
  %2091 = vmatprep.subr.mxu0 0.0
  %2092 = vmatpush1.msra.mxu0 %v342
  %2093 = vmatprep.subr.mxu0 0.0
  %2094 = vmatpush1.msra.mxu0 %v343
  %2095 = vmatprep.subr.mxu0 0.0
  %2096 = vmatpush1.msra.mxu0 %v344
  %2097 = vmatprep.subr.mxu0 0.0
  %2098 = vmatpush1.msra.mxu0 %v345
  %2099 = vmatprep.subr.mxu0 0.0
  %2100 = vmatpush1.msra.mxu0 %v346
  %2101 = vmatprep.subr.mxu0 0.0
  %2102 = vmatpush1.msra.mxu0 %v347
  %2103 = vmatprep.subr.mxu0 0.0
  %2104 = vmatpush1.msra.mxu0 %v348
  %2105 = vmatprep.subr.mxu0 0.0
  %2106 = vmatpush1.msra.mxu0 %v349
  %2107 = vmatprep.mubr.f32.mxu0 %v1161
  %2108 = vmatmul.mubr.f32.gmra.mrb[0].mxu0 %v1159
  %v2109 = vpop.f32.mrb[0].mxu0
  %v2110 = vadd.f32 %v2040, %v2109
  %v2111 = vpop.f32.mrb[0].mxu0
  %2112 = vdwg.mxu0
  %2113 = vmatprep.subr.mxu0 0.0
  %2114 = vmatpush1.msra.mxu0 %v350
  %2115 = vmatprep.subr.mxu0 0.0
  %2116 = vmatpush1.msra.mxu0 %v351
  %2117 = vmatprep.subr.mxu0 0.0
  %2118 = vmatpush1.msra.mxu0 %v352
  %2119 = vmatprep.subr.mxu0 0.0
  %2120 = vmatpush1.msra.mxu0 %v353
  %2121 = vmatprep.subr.mxu0 0.0
  %2122 = vmatpush1.msra.mxu0 %v354
  %2123 = vmatprep.subr.mxu0 0.0
  %2124 = vmatpush1.msra.mxu0 %v355
  %2125 = vmatprep.subr.mxu0 0.0
  %2126 = vmatpush1.msra.mxu0 %v356
  %2127 = vmatprep.subr.mxu0 0.0
  %2128 = vmatpush1.msra.mxu0 %v357
  %2129 = vmatprep.subr.mxu0 0.0
  %2130 = vmatpush1.msra.mxu0 %v358
  %2131 = vmatprep.subr.mxu0 0.0
  %2132 = vmatpush1.msra.mxu0 %v359
  %2133 = vmatprep.subr.mxu0 0.0
  %2134 = vmatpush1.msra.mxu0 %v360
  %2135 = vmatprep.subr.mxu0 0.0
  %2136 = vmatpush1.msra.mxu0 %v361
  %2137 = vmatprep.subr.mxu0 0.0
  %2138 = vmatpush1.msra.mxu0 %v362
  %2139 = vmatprep.subr.mxu0 0.0
  %2140 = vmatpush1.msra.mxu0 %v363
  %2141 = vmatprep.subr.mxu0 0.0
  %2142 = vmatpush1.msra.mxu0 %v364
  %2143 = vmatprep.subr.mxu0 0.0
  %2144 = vmatpush1.msra.mxu0 %v365
  %2145 = vmatprep.subr.mxu0 0.0
  %2146 = vmatpush1.msra.mxu0 %v366
  %2147 = vmatprep.subr.mxu0 0.0
  %2148 = vmatpush1.msra.mxu0 %v367
  %2149 = vmatprep.subr.mxu0 0.0
  %2150 = vmatpush1.msra.mxu0 %v368
  %2151 = vmatprep.subr.mxu0 0.0
  %2152 = vmatpush1.msra.mxu0 %v369
  %2153 = vmatprep.subr.mxu0 0.0
  %2154 = vmatpush1.msra.mxu0 %v370
  %2155 = vmatprep.subr.mxu0 0.0
  %2156 = vmatpush1.msra.mxu0 %v371
  %2157 = vmatprep.subr.mxu0 0.0
  %2158 = vmatpush1.msra.mxu0 %v372
  %2159 = vmatprep.subr.mxu0 0.0
  %2160 = vmatpush1.msra.mxu0 %v373
  %2161 = vmatprep.subr.mxu0 0.0
  %2162 = vmatpush1.msra.mxu0 %v374
  %2163 = vmatprep.subr.mxu0 0.0
  %2164 = vmatpush1.msra.mxu0 %v375
  %2165 = vmatprep.subr.mxu0 0.0
  %2166 = vmatpush1.msra.mxu0 %v376
  %2167 = vmatprep.subr.mxu0 0.0
  %2168 = vmatpush1.msra.mxu0 %v377
  %2169 = vmatprep.subr.mxu0 0.0
  %2170 = vmatpush1.msra.mxu0 %v378
  %2171 = vmatprep.subr.mxu0 0.0
  %2172 = vmatpush1.msra.mxu0 %v379
  %2173 = vmatprep.subr.mxu0 0.0
  %2174 = vmatpush1.msra.mxu0 %v380
  %2175 = vmatprep.subr.mxu0 0.0
  %2176 = vmatpush1.msra.mxu0 %v381
  %2177 = vmatprep.mubr.f32.mxu0 %v1177
  %2178 = vmatmul.mubr.f32.gmra.mrb[0].mxu0 %v1169
  %v2179 = vpop.f32.mrb[0].mxu0
  %v2180 = vadd.f32 %v2110, %v2179
  %v2181 = vpop.f32.mrb[0].mxu0
  %2182 = vdwg.mxu0
  %2183 = vmatprep.subr.mxu0 0.0
  %2184 = vmatpush1.msra.mxu0 %v382
  %2185 = vmatprep.subr.mxu0 0.0
  %2186 = vmatpush1.msra.mxu0 %v383
  %2187 = vmatprep.subr.mxu0 0.0
  %2188 = vmatpush1.msra.mxu0 %v384
  %2189 = vmatprep.subr.mxu0 0.0
  %2190 = vmatpush1.msra.mxu0 %v385
  %2191 = vmatprep.subr.mxu0 0.0
  %2192 = vmatpush1.msra.mxu0 %v386
  %2193 = vmatprep.subr.mxu0 0.0
  %2194 = vmatpush1.msra.mxu0 %v387
  %2195 = vmatprep.subr.mxu0 0.0
  %2196 = vmatpush1.msra.mxu0 %v388
  %2197 = vmatprep.subr.mxu0 0.0
  %2198 = vmatpush1.msra.mxu0 %v389
  %2199 = vmatprep.subr.mxu0 0.0
  %2200 = vmatpush1.msra.mxu0 %v390
  %2201 = vmatprep.subr.mxu0 0.0
  %2202 = vmatpush1.msra.mxu0 %v391
  %2203 = vmatprep.subr.mxu0 0.0
  %2204 = vmatpush1.msra.mxu0 %v392
  %2205 = vmatprep.subr.mxu0 0.0
  %2206 = vmatpush1.msra.mxu0 %v393
  %2207 = vmatprep.subr.mxu0 0.0
  %2208 = vmatpush1.msra.mxu0 %v394
  %2209 = vmatprep.subr.mxu0 0.0
  %2210 = vmatpush1.msra.mxu0 %v395
  %2211 = vmatprep.subr.mxu0 0.0
  %2212 = vmatpush1.msra.mxu0 %v396
  %2213 = vmatprep.subr.mxu0 0.0
  %2214 = vmatpush1.msra.mxu0 %v397
  %2215 = vmatprep.subr.mxu0 0.0
  %2216 = vmatpush1.msra.mxu0 %v398
  %2217 = vmatprep.subr.mxu0 0.0
  %2218 = vmatpush1.msra.mxu0 %v399
  %2219 = vmatprep.subr.mxu0 0.0
  %2220 = vmatpush1.msra.mxu0 %v400
  %2221 = vmatprep.subr.mxu0 0.0
  %2222 = vmatpush1.msra.mxu0 %v401
  %2223 = vmatprep.subr.mxu0 0.0
  %2224 = vmatpush1.msra.mxu0 %v402
  %2225 = vmatprep.subr.mxu0 0.0
  %2226 = vmatpush1.msra.mxu0 %v403
  %2227 = vmatprep.subr.mxu0 0.0
  %2228 = vmatpush1.msra.mxu0 %v404
  %2229 = vmatprep.subr.mxu0 0.0
  %2230 = vmatpush1.msra.mxu0 %v405
  %2231 = vmatprep.subr.mxu0 0.0
  %2232 = vmatpush1.msra.mxu0 %v406
  %2233 = vmatprep.subr.mxu0 0.0
  %2234 = vmatpush1.msra.mxu0 %v407
  %2235 = vmatprep.subr.mxu0 0.0
  %2236 = vmatpush1.msra.mxu0 %v408
  %2237 = vmatprep.subr.mxu0 0.0
  %2238 = vmatpush1.msra.mxu0 %v409
  %2239 = vmatprep.subr.mxu0 0.0
  %2240 = vmatpush1.msra.mxu0 %v410
  %2241 = vmatprep.subr.mxu0 0.0
  %2242 = vmatpush1.msra.mxu0 %v411
  %2243 = vmatprep.subr.mxu0 0.0
  %2244 = vmatpush1.msra.mxu0 %v412
  %2245 = vmatprep.subr.mxu0 0.0
  %2246 = vmatpush1.msra.mxu0 %v413
  %2247 = vmatprep.mubr.f32.mxu0 %v1178
  %2248 = vmatmul.mubr.f32.gmra.mrb[0].mxu0 %v1176
  %v2249 = vpop.f32.mrb[0].mxu0
  %v2250 = vadd.f32 %v2180, %v2249
  %v2251 = vpop.f32.mrb[0].mxu0
  %2252 = vdwg.mxu0
  %2253 = vmatprep.subr.mxu0 0.0
  %2254 = vmatpush1.msra.mxu0 %v414
  %2255 = vmatprep.subr.mxu0 0.0
  %2256 = vmatpush1.msra.mxu0 %v415
  %2257 = vmatprep.subr.mxu0 0.0
  %2258 = vmatpush1.msra.mxu0 %v416
  %2259 = vmatprep.subr.mxu0 0.0
  %2260 = vmatpush1.msra.mxu0 %v417
  %2261 = vmatprep.subr.mxu0 0.0
  %2262 = vmatpush1.msra.mxu0 %v418
  %2263 = vmatprep.subr.mxu0 0.0
  %2264 = vmatpush1.msra.mxu0 %v419
  %2265 = vmatprep.subr.mxu0 0.0
  %2266 = vmatpush1.msra.mxu0 %v420
  %2267 = vmatprep.subr.mxu0 0.0
  %2268 = vmatpush1.msra.mxu0 %v421
  %2269 = vmatprep.subr.mxu0 0.0
  %2270 = vmatpush1.msra.mxu0 %v422
  %2271 = vmatprep.subr.mxu0 0.0
  %2272 = vmatpush1.msra.mxu0 %v423
  %2273 = vmatprep.subr.mxu0 0.0
  %2274 = vmatpush1.msra.mxu0 %v424
  %2275 = vmatprep.subr.mxu0 0.0
  %2276 = vmatpush1.msra.mxu0 %v425
  %2277 = vmatprep.subr.mxu0 0.0
  %2278 = vmatpush1.msra.mxu0 %v426
  %2279 = vmatprep.subr.mxu0 0.0
  %2280 = vmatpush1.msra.mxu0 %v427
  %2281 = vmatprep.subr.mxu0 0.0
  %2282 = vmatpush1.msra.mxu0 %v428
  %2283 = vmatprep.subr.mxu0 0.0
  %2284 = vmatpush1.msra.mxu0 %v429
  %2285 = vmatprep.subr.mxu0 0.0
  %2286 = vmatpush1.msra.mxu0 %v430
  %2287 = vmatprep.subr.mxu0 0.0
  %2288 = vmatpush1.msra.mxu0 %v431
  %2289 = vmatprep.subr.mxu0 0.0
  %2290 = vmatpush1.msra.mxu0 %v432
  %2291 = vmatprep.subr.mxu0 0.0
  %2292 = vmatpush1.msra.mxu0 %v433
  %2293 = vmatprep.subr.mxu0 0.0
  %2294 = vmatpush1.msra.mxu0 %v434
  %2295 = vmatprep.subr.mxu0 0.0
  %2296 = vmatpush1.msra.mxu0 %v435
  %2297 = vmatprep.subr.mxu0 0.0
  %2298 = vmatpush1.msra.mxu0 %v436
  %2299 = vmatprep.subr.mxu0 0.0
  %2300 = vmatpush1.msra.mxu0 %v437
  %2301 = vmatprep.subr.mxu0 0.0
  %2302 = vmatpush1.msra.mxu0 %v438
  %2303 = vmatprep.subr.mxu0 0.0
  %2304 = vmatpush1.msra.mxu0 %v439
  %2305 = vmatprep.subr.mxu0 0.0
  %2306 = vmatpush1.msra.mxu0 %v440
  %2307 = vmatprep.subr.mxu0 0.0
  %2308 = vmatpush1.msra.mxu0 %v441
  %2309 = vmatprep.subr.mxu0 0.0
  %2310 = vmatpush1.msra.mxu0 %v442
  %2311 = vmatprep.subr.mxu0 0.0
  %2312 = vmatpush1.msra.mxu0 %v443
  %2313 = vmatprep.subr.mxu0 0.0
  %2314 = vmatpush1.msra.mxu0 %v444
  %2315 = vmatprep.subr.mxu0 0.0
  %2316 = vmatpush1.msra.mxu0 %v445
  %2317 = vmatprep.mubr.f32.mxu0 %v1194
  %2318 = vmatmul.mubr.f32.gmra.mrb[0].mxu0 %v1186
  %v2319 = vpop.f32.mrb[0].mxu0
  %v2320 = vadd.f32 %v2250, %v2319
  %v2321 = vpop.f32.mrb[0].mxu0
  %2322 = vdwg.mxu0
  %2323 = vmatprep.subr.mxu0 0.0
  %2324 = vmatpush1.msra.mxu0 %v446
  %2325 = vmatprep.subr.mxu0 0.0
  %2326 = vmatpush1.msra.mxu0 %v447
  %2327 = vmatprep.subr.mxu0 0.0
  %2328 = vmatpush1.msra.mxu0 %v448
  %2329 = vmatprep.subr.mxu0 0.0
  %2330 = vmatpush1.msra.mxu0 %v449
  %2331 = vmatprep.subr.mxu0 0.0
  %2332 = vmatpush1.msra.mxu0 %v450
  %2333 = vmatprep.subr.mxu0 0.0
  %2334 = vmatpush1.msra.mxu0 %v451
  %2335 = vmatprep.subr.mxu0 0.0
  %2336 = vmatpush1.msra.mxu0 %v452
  %2337 = vmatprep.subr.mxu0 0.0
  %2338 = vmatpush1.msra.mxu0 %v453
  %2339 = vmatprep.subr.mxu0 0.0
  %2340 = vmatpush1.msra.mxu0 %v454
  %2341 = vmatprep.subr.mxu0 0.0
  %2342 = vmatpush1.msra.mxu0 %v455
  %2343 = vmatprep.subr.mxu0 0.0
  %2344 = vmatpush1.msra.mxu0 %v456
  %2345 = vmatprep.subr.mxu0 0.0
  %2346 = vmatpush1.msra.mxu0 %v457
  %2347 = vmatprep.subr.mxu0 0.0
  %2348 = vmatpush1.msra.mxu0 %v458
  %2349 = vmatprep.subr.mxu0 0.0
  %2350 = vmatpush1.msra.mxu0 %v459
  %2351 = vmatprep.subr.mxu0 0.0
  %2352 = vmatpush1.msra.mxu0 %v460
  %2353 = vmatprep.subr.mxu0 0.0
  %2354 = vmatpush1.msra.mxu0 %v461
  %2355 = vmatprep.subr.mxu0 0.0
  %2356 = vmatpush1.msra.mxu0 %v462
  %2357 = vmatprep.subr.mxu0 0.0
  %2358 = vmatpush1.msra.mxu0 %v463
  %2359 = vmatprep.subr.mxu0 0.0
  %2360 = vmatpush1.msra.mxu0 %v464
  %2361 = vmatprep.subr.mxu0 0.0
  %2362 = vmatpush1.msra.mxu0 %v465
  %2363 = vmatprep.subr.mxu0 0.0
  %2364 = vmatpush1.msra.mxu0 %v466
  %2365 = vmatprep.subr.mxu0 0.0
  %2366 = vmatpush1.msra.mxu0 %v467
  %2367 = vmatprep.subr.mxu0 0.0
  %2368 = vmatpush1.msra.mxu0 %v468
  %2369 = vmatprep.subr.mxu0 0.0
  %2370 = vmatpush1.msra.mxu0 %v469
  %2371 = vmatprep.subr.mxu0 0.0
  %2372 = vmatpush1.msra.mxu0 %v470
  %2373 = vmatprep.subr.mxu0 0.0
  %2374 = vmatpush1.msra.mxu0 %v471
  %2375 = vmatprep.subr.mxu0 0.0
  %2376 = vmatpush1.msra.mxu0 %v472
  %2377 = vmatprep.subr.mxu0 0.0
  %2378 = vmatpush1.msra.mxu0 %v473
  %2379 = vmatprep.subr.mxu0 0.0
  %2380 = vmatpush1.msra.mxu0 %v474
  %2381 = vmatprep.subr.mxu0 0.0
  %2382 = vmatpush1.msra.mxu0 %v475
  %2383 = vmatprep.subr.mxu0 0.0
  %2384 = vmatpush1.msra.mxu0 %v476
  %2385 = vmatprep.subr.mxu0 0.0
  %2386 = vmatpush1.msra.mxu0 %v477
  %2387 = vmatprep.mubr.f32.mxu0 %v1195
  %2388 = vmatmul.mubr.f32.gmra.mrb[0].mxu0 %v1193
  %v2389 = vpop.f32.mrb[0].mxu0
  %v2390 = vadd.f32 %v2320, %v2389
  %v2391 = vpop.f32.mrb[0].mxu0
  %2392 = vdwg.mxu0
  %2393 = vmatprep.subr.mxu0 0.0
  %2394 = vmatpush1.msra.mxu0 %v478
  %2395 = vmatprep.subr.mxu0 0.0
  %2396 = vmatpush1.msra.mxu0 %v479
  %2397 = vmatprep.subr.mxu0 0.0
  %2398 = vmatpush1.msra.mxu0 %v480
  %2399 = vmatprep.subr.mxu0 0.0
  %2400 = vmatpush1.msra.mxu0 %v481
  %2401 = vmatprep.subr.mxu0 0.0
  %2402 = vmatpush1.msra.mxu0 %v482
  %2403 = vmatprep.subr.mxu0 0.0
  %2404 = vmatpush1.msra.mxu0 %v483
  %2405 = vmatprep.subr.mxu0 0.0
  %2406 = vmatpush1.msra.mxu0 %v484
  %2407 = vmatprep.subr.mxu0 0.0
  %2408 = vmatpush1.msra.mxu0 %v485
  %2409 = vmatprep.subr.mxu0 0.0
  %2410 = vmatpush1.msra.mxu0 %v486
  %2411 = vmatprep.subr.mxu0 0.0
  %2412 = vmatpush1.msra.mxu0 %v487
  %2413 = vmatprep.subr.mxu0 0.0
  %2414 = vmatpush1.msra.mxu0 %v488
  %2415 = vmatprep.subr.mxu0 0.0
  %2416 = vmatpush1.msra.mxu0 %v489
  %2417 = vmatprep.subr.mxu0 0.0
  %2418 = vmatpush1.msra.mxu0 %v490
  %2419 = vmatprep.subr.mxu0 0.0
  %2420 = vmatpush1.msra.mxu0 %v491
  %2421 = vmatprep.subr.mxu0 0.0
  %2422 = vmatpush1.msra.mxu0 %v492
  %2423 = vmatprep.subr.mxu0 0.0
  %2424 = vmatpush1.msra.mxu0 %v493
  %2425 = vmatprep.subr.mxu0 0.0
  %2426 = vmatpush1.msra.mxu0 %v494
  %2427 = vmatprep.subr.mxu0 0.0
  %2428 = vmatpush1.msra.mxu0 %v495
  %2429 = vmatprep.subr.mxu0 0.0
  %2430 = vmatpush1.msra.mxu0 %v496
  %2431 = vmatprep.subr.mxu0 0.0
  %2432 = vmatpush1.msra.mxu0 %v497
  %2433 = vmatprep.subr.mxu0 0.0
  %2434 = vmatpush1.msra.mxu0 %v498
  %2435 = vmatprep.subr.mxu0 0.0
  %2436 = vmatpush1.msra.mxu0 %v499
  %2437 = vmatprep.subr.mxu0 0.0
  %2438 = vmatpush1.msra.mxu0 %v500
  %2439 = vmatprep.subr.mxu0 0.0
  %2440 = vmatpush1.msra.mxu0 %v501
  %2441 = vmatprep.subr.mxu0 0.0
  %2442 = vmatpush1.msra.mxu0 %v502
  %2443 = vmatprep.subr.mxu0 0.0
  %2444 = vmatpush1.msra.mxu0 %v503
  %2445 = vmatprep.subr.mxu0 0.0
  %2446 = vmatpush1.msra.mxu0 %v504
  %2447 = vmatprep.subr.mxu0 0.0
  %2448 = vmatpush1.msra.mxu0 %v505
  %2449 = vmatprep.subr.mxu0 0.0
  %2450 = vmatpush1.msra.mxu0 %v506
  %2451 = vmatprep.subr.mxu0 0.0
  %2452 = vmatpush1.msra.mxu0 %v507
  %2453 = vmatprep.subr.mxu0 0.0
  %2454 = vmatpush1.msra.mxu0 %v508
  %2455 = vmatprep.subr.mxu0 0.0
  %2456 = vmatpush1.msra.mxu0 %v509
  %2457 = vmatprep.mubr.f32.mxu0 %v1211
  %2458 = vmatmul.mubr.f32.gmra.mrb[0].mxu0 %v1203
  %v2459 = vpop.f32.mrb[0].mxu0
  %v2460 = vadd.f32 %v2390, %v2459
  %v2461 = vpop.f32.mrb[0].mxu0
  %2462 = vdwg.mxu0
  %2463 = vmatprep.subr.mxu0 0.0
  %2464 = vmatpush1.msra.mxu0 %v510
  %2465 = vmatprep.subr.mxu0 0.0
  %2466 = vmatpush1.msra.mxu0 %v511
  %2467 = vmatprep.subr.mxu0 0.0
  %2468 = vmatpush1.msra.mxu0 %v512
  %2469 = vmatprep.subr.mxu0 0.0
  %2470 = vmatpush1.msra.mxu0 %v513
  %2471 = vmatprep.subr.mxu0 0.0
  %2472 = vmatpush1.msra.mxu0 %v514
  %2473 = vmatprep.subr.mxu0 0.0
  %2474 = vmatpush1.msra.mxu0 %v515
  %2475 = vmatprep.subr.mxu0 0.0
  %2476 = vmatpush1.msra.mxu0 %v516
  %2477 = vmatprep.subr.mxu0 0.0
  %2478 = vmatpush1.msra.mxu0 %v517
  %2479 = vmatprep.subr.mxu0 0.0
  %2480 = vmatpush1.msra.mxu0 %v518
  %2481 = vmatprep.subr.mxu0 0.0
  %2482 = vmatpush1.msra.mxu0 %v519
  %2483 = vmatprep.subr.mxu0 0.0
  %2484 = vmatpush1.msra.mxu0 %v520
  %2485 = vmatprep.subr.mxu0 0.0
  %2486 = vmatpush1.msra.mxu0 %v521
  %2487 = vmatprep.subr.mxu0 0.0
  %2488 = vmatpush1.msra.mxu0 %v522
  %2489 = vmatprep.subr.mxu0 0.0
  %2490 = vmatpush1.msra.mxu0 %v523
  %2491 = vmatprep.subr.mxu0 0.0
  %2492 = vmatpush1.msra.mxu0 %v524
  %2493 = vmatprep.subr.mxu0 0.0
  %2494 = vmatpush1.msra.mxu0 %v525
  %2495 = vmatprep.subr.mxu0 0.0
  %2496 = vmatpush1.msra.mxu0 %v526
  %2497 = vmatprep.subr.mxu0 0.0
  %2498 = vmatpush1.msra.mxu0 %v527
  %2499 = vmatprep.subr.mxu0 0.0
  %2500 = vmatpush1.msra.mxu0 %v528
  %2501 = vmatprep.subr.mxu0 0.0
  %2502 = vmatpush1.msra.mxu0 %v529
  %2503 = vmatprep.subr.mxu0 0.0
  %2504 = vmatpush1.msra.mxu0 %v530
  %2505 = vmatprep.subr.mxu0 0.0
  %2506 = vmatpush1.msra.mxu0 %v531
  %2507 = vmatprep.subr.mxu0 0.0
  %2508 = vmatpush1.msra.mxu0 %v532
  %2509 = vmatprep.subr.mxu0 0.0
  %2510 = vmatpush1.msra.mxu0 %v533
  %2511 = vmatprep.subr.mxu0 0.0
  %2512 = vmatpush1.msra.mxu0 %v534
  %2513 = vmatprep.subr.mxu0 0.0
  %2514 = vmatpush1.msra.mxu0 %v535
  %2515 = vmatprep.subr.mxu0 0.0
  %2516 = vmatpush1.msra.mxu0 %v536
  %2517 = vmatprep.subr.mxu0 0.0
  %2518 = vmatpush1.msra.mxu0 %v537
  %2519 = vmatprep.subr.mxu0 0.0
  %2520 = vmatpush1.msra.mxu0 %v538
  %2521 = vmatprep.subr.mxu0 0.0
  %2522 = vmatpush1.msra.mxu0 %v539
  %2523 = vmatprep.subr.mxu0 0.0
  %2524 = vmatpush1.msra.mxu0 %v540
  %2525 = vmatprep.subr.mxu0 0.0
  %2526 = vmatpush1.msra.mxu0 %v541
  %2527 = vmatprep.mubr.f32.mxu0 %v1212
  %2528 = vmatmul.mubr.f32.gmra.mrb[0].mxu0 %v1210
  %v2529 = vpop.f32.mrb[0].mxu0
  %v2530 = vadd.f32 %v2460, %v2529
  %v2531 = vpop.f32.mrb[0].mxu0
  %2532 = vdwg.mxu0
  %2533 = vmatprep.subr.mxu0 0.0
  %2534 = vmatpush1.msra.mxu0 %v542
  %2535 = vmatprep.subr.mxu0 0.0
  %2536 = vmatpush1.msra.mxu0 %v543
  %2537 = vmatprep.subr.mxu0 0.0
  %2538 = vmatpush1.msra.mxu0 %v544
  %2539 = vmatprep.subr.mxu0 0.0
  %2540 = vmatpush1.msra.mxu0 %v545
  %2541 = vmatprep.subr.mxu0 0.0
  %2542 = vmatpush1.msra.mxu0 %v546
  %2543 = vmatprep.subr.mxu0 0.0
  %2544 = vmatpush1.msra.mxu0 %v547
  %2545 = vmatprep.subr.mxu0 0.0
  %2546 = vmatpush1.msra.mxu0 %v548
  %2547 = vmatprep.subr.mxu0 0.0
  %2548 = vmatpush1.msra.mxu0 %v549
  %2549 = vmatprep.subr.mxu0 0.0
  %2550 = vmatpush1.msra.mxu0 %v550
  %2551 = vmatprep.subr.mxu0 0.0
  %2552 = vmatpush1.msra.mxu0 %v551
  %2553 = vmatprep.subr.mxu0 0.0
  %2554 = vmatpush1.msra.mxu0 %v552
  %2555 = vmatprep.subr.mxu0 0.0
  %2556 = vmatpush1.msra.mxu0 %v553
  %2557 = vmatprep.subr.mxu0 0.0
  %2558 = vmatpush1.msra.mxu0 %v554
  %2559 = vmatprep.subr.mxu0 0.0
  %2560 = vmatpush1.msra.mxu0 %v555
  %2561 = vmatprep.subr.mxu0 0.0
  %2562 = vmatpush1.msra.mxu0 %v556
  %2563 = vmatprep.subr.mxu0 0.0
  %2564 = vmatpush1.msra.mxu0 %v557
  %2565 = vmatprep.subr.mxu0 0.0
  %2566 = vmatpush1.msra.mxu0 %v558
  %2567 = vmatprep.subr.mxu0 0.0
  %2568 = vmatpush1.msra.mxu0 %v559
  %2569 = vmatprep.subr.mxu0 0.0
  %2570 = vmatpush1.msra.mxu0 %v560
  %2571 = vmatprep.subr.mxu0 0.0
  %2572 = vmatpush1.msra.mxu0 %v561
  %2573 = vmatprep.subr.mxu0 0.0
  %2574 = vmatpush1.msra.mxu0 %v562
  %2575 = vmatprep.subr.mxu0 0.0
  %2576 = vmatpush1.msra.mxu0 %v563
  %2577 = vmatprep.subr.mxu0 0.0
  %2578 = vmatpush1.msra.mxu0 %v564
  %2579 = vmatprep.subr.mxu0 0.0
  %2580 = vmatpush1.msra.mxu0 %v565
  %2581 = vmatprep.subr.mxu0 0.0
  %2582 = vmatpush1.msra.mxu0 %v566
  %2583 = vmatprep.subr.mxu0 0.0
  %2584 = vmatpush1.msra.mxu0 %v567
  %2585 = vmatprep.subr.mxu0 0.0
  %2586 = vmatpush1.msra.mxu0 %v568
  %2587 = vmatprep.subr.mxu0 0.0
  %2588 = vmatpush1.msra.mxu0 %v569
  %2589 = vmatprep.subr.mxu0 0.0
  %2590 = vmatpush1.msra.mxu0 %v570
  %2591 = vmatprep.subr.mxu0 0.0
  %2592 = vmatpush1.msra.mxu0 %v571
  %2593 = vmatprep.subr.mxu0 0.0
  %2594 = vmatpush1.msra.mxu0 %v572
  %2595 = vmatprep.subr.mxu0 0.0
  %2596 = vmatpush1.msra.mxu0 %v573
  %2597 = vmatprep.mubr.f32.mxu0 %v1228
  %2598 = vmatmul.mubr.f32.gmra.mrb[0].mxu0 %v1220
  %v2599 = vpop.f32.mrb[0].mxu0
  %v2600 = vadd.f32 %v2530, %v2599
  %v2601 = vpop.f32.mrb[0].mxu0
  %2602 = vdwg.mxu0
  %2603 = vmatprep.subr.mxu0 0.0
  %2604 = vmatpush1.msra.mxu0 %v574
  %2605 = vmatprep.subr.mxu0 0.0
  %2606 = vmatpush1.msra.mxu0 %v575
  %2607 = vmatprep.subr.mxu0 0.0
  %2608 = vmatpush1.msra.mxu0 %v576
  %2609 = vmatprep.subr.mxu0 0.0
  %2610 = vmatpush1.msra.mxu0 %v577
  %2611 = vmatprep.subr.mxu0 0.0
  %2612 = vmatpush1.msra.mxu0 %v578
  %2613 = vmatprep.subr.mxu0 0.0
  %2614 = vmatpush1.msra.mxu0 %v579
  %2615 = vmatprep.subr.mxu0 0.0
  %2616 = vmatpush1.msra.mxu0 %v580
  %2617 = vmatprep.subr.mxu0 0.0
  %2618 = vmatpush1.msra.mxu0 %v581
  %2619 = vmatprep.subr.mxu0 0.0
  %2620 = vmatpush1.msra.mxu0 %v582
  %2621 = vmatprep.subr.mxu0 0.0
  %2622 = vmatpush1.msra.mxu0 %v583
  %2623 = vmatprep.subr.mxu0 0.0
  %2624 = vmatpush1.msra.mxu0 %v584
  %2625 = vmatprep.subr.mxu0 0.0
  %2626 = vmatpush1.msra.mxu0 %v585
  %2627 = vmatprep.subr.mxu0 0.0
  %2628 = vmatpush1.msra.mxu0 %v586
  %2629 = vmatprep.subr.mxu0 0.0
  %2630 = vmatpush1.msra.mxu0 %v587
  %2631 = vmatprep.subr.mxu0 0.0
  %2632 = vmatpush1.msra.mxu0 %v588
  %2633 = vmatprep.subr.mxu0 0.0
  %2634 = vmatpush1.msra.mxu0 %v589
  %2635 = vmatprep.subr.mxu0 0.0
  %2636 = vmatpush1.msra.mxu0 %v590
  %2637 = vmatprep.subr.mxu0 0.0
  %2638 = vmatpush1.msra.mxu0 %v591
  %2639 = vmatprep.subr.mxu0 0.0
  %2640 = vmatpush1.msra.mxu0 %v592
  %2641 = vmatprep.subr.mxu0 0.0
  %2642 = vmatpush1.msra.mxu0 %v593
  %2643 = vmatprep.subr.mxu0 0.0
  %2644 = vmatpush1.msra.mxu0 %v594
  %2645 = vmatprep.subr.mxu0 0.0
  %2646 = vmatpush1.msra.mxu0 %v595
  %2647 = vmatprep.subr.mxu0 0.0
  %2648 = vmatpush1.msra.mxu0 %v596
  %2649 = vmatprep.subr.mxu0 0.0
  %2650 = vmatpush1.msra.mxu0 %v597
  %2651 = vmatprep.subr.mxu0 0.0
  %2652 = vmatpush1.msra.mxu0 %v598
  %2653 = vmatprep.subr.mxu0 0.0
  %2654 = vmatpush1.msra.mxu0 %v599
  %2655 = vmatprep.subr.mxu0 0.0
  %2656 = vmatpush1.msra.mxu0 %v600
  %2657 = vmatprep.subr.mxu0 0.0
  %2658 = vmatpush1.msra.mxu0 %v601
  %2659 = vmatprep.subr.mxu0 0.0
  %2660 = vmatpush1.msra.mxu0 %v602
  %2661 = vmatprep.subr.mxu0 0.0
  %2662 = vmatpush1.msra.mxu0 %v603
  %2663 = vmatprep.subr.mxu0 0.0
  %2664 = vmatpush1.msra.mxu0 %v604
  %2665 = vmatprep.subr.mxu0 0.0
  %2666 = vmatpush1.msra.mxu0 %v605
  %2667 = vmatprep.mubr.f32.mxu0 %v1229
  %2668 = vmatmul.mubr.f32.gmra.mrb[0].mxu0 %v1227
  %v2669 = vpop.f32.mrb[0].mxu0
  %v2670 = vadd.f32 %v2600, %v2669
  %v2671 = vpop.f32.mrb[0].mxu0
  %2672 = vdwg.mxu0
  %2673 = vmatprep.subr.mxu0 0.0
  %2674 = vmatpush1.msra.mxu0 %v606
  %2675 = vmatprep.subr.mxu0 0.0
  %2676 = vmatpush1.msra.mxu0 %v607
  %2677 = vmatprep.subr.mxu0 0.0
  %2678 = vmatpush1.msra.mxu0 %v608
  %2679 = vmatprep.subr.mxu0 0.0
  %2680 = vmatpush1.msra.mxu0 %v609
  %2681 = vmatprep.subr.mxu0 0.0
  %2682 = vmatpush1.msra.mxu0 %v610
  %2683 = vmatprep.subr.mxu0 0.0
  %2684 = vmatpush1.msra.mxu0 %v611
  %2685 = vmatprep.subr.mxu0 0.0
  %2686 = vmatpush1.msra.mxu0 %v612
  %2687 = vmatprep.subr.mxu0 0.0
  %2688 = vmatpush1.msra.mxu0 %v613
  %2689 = vmatprep.subr.mxu0 0.0
  %2690 = vmatpush1.msra.mxu0 %v614
  %2691 = vmatprep.subr.mxu0 0.0
  %2692 = vmatpush1.msra.mxu0 %v615
  %2693 = vmatprep.subr.mxu0 0.0
  %2694 = vmatpush1.msra.mxu0 %v616
  %2695 = vmatprep.subr.mxu0 0.0
  %2696 = vmatpush1.msra.mxu0 %v617
  %2697 = vmatprep.subr.mxu0 0.0
  %2698 = vmatpush1.msra.mxu0 %v618
  %2699 = vmatprep.subr.mxu0 0.0
  %2700 = vmatpush1.msra.mxu0 %v619
  %2701 = vmatprep.subr.mxu0 0.0
  %2702 = vmatpush1.msra.mxu0 %v620
  %2703 = vmatprep.subr.mxu0 0.0
  %2704 = vmatpush1.msra.mxu0 %v621
  %2705 = vmatprep.subr.mxu0 0.0
  %2706 = vmatpush1.msra.mxu0 %v622
  %2707 = vmatprep.subr.mxu0 0.0
  %2708 = vmatpush1.msra.mxu0 %v623
  %2709 = vmatprep.subr.mxu0 0.0
  %2710 = vmatpush1.msra.mxu0 %v624
  %2711 = vmatprep.subr.mxu0 0.0
  %2712 = vmatpush1.msra.mxu0 %v625
  %2713 = vmatprep.subr.mxu0 0.0
  %2714 = vmatpush1.msra.mxu0 %v626
  %2715 = vmatprep.subr.mxu0 0.0
  %2716 = vmatpush1.msra.mxu0 %v627
  %2717 = vmatprep.subr.mxu0 0.0
  %2718 = vmatpush1.msra.mxu0 %v628
  %2719 = vmatprep.subr.mxu0 0.0
  %2720 = vmatpush1.msra.mxu0 %v629
  %2721 = vmatprep.subr.mxu0 0.0
  %2722 = vmatpush1.msra.mxu0 %v630
  %2723 = vmatprep.subr.mxu0 0.0
  %2724 = vmatpush1.msra.mxu0 %v631
  %2725 = vmatprep.subr.mxu0 0.0
  %2726 = vmatpush1.msra.mxu0 %v632
  %2727 = vmatprep.subr.mxu0 0.0
  %2728 = vmatpush1.msra.mxu0 %v633
  %2729 = vmatprep.subr.mxu0 0.0
  %2730 = vmatpush1.msra.mxu0 %v634
  %2731 = vmatprep.subr.mxu0 0.0
  %2732 = vmatpush1.msra.mxu0 %v635
  %2733 = vmatprep.subr.mxu0 0.0
  %2734 = vmatpush1.msra.mxu0 %v636
  %2735 = vmatprep.subr.mxu0 0.0
  %2736 = vmatpush1.msra.mxu0 %v637
  %2737 = vmatprep.mubr.f32.mxu0 %v1245
  %2738 = vmatmul.mubr.f32.gmra.mrb[0].mxu0 %v1237
  %v2739 = vpop.f32.mrb[0].mxu0
  %v2740 = vadd.f32 %v2670, %v2739
  %v2741 = vpop.f32.mrb[0].mxu0
  %2742 = vdwg.mxu0
  %2743 = vmatprep.subr.mxu0 0.0
  %2744 = vmatpush1.msra.mxu0 %v638
  %2745 = vmatprep.subr.mxu0 0.0
  %2746 = vmatpush1.msra.mxu0 %v639
  %2747 = vmatprep.subr.mxu0 0.0
  %2748 = vmatpush1.msra.mxu0 %v640
  %2749 = vmatprep.subr.mxu0 0.0
  %2750 = vmatpush1.msra.mxu0 %v641
  %2751 = vmatprep.subr.mxu0 0.0
  %2752 = vmatpush1.msra.mxu0 %v642
  %2753 = vmatprep.subr.mxu0 0.0
  %2754 = vmatpush1.msra.mxu0 %v643
  %2755 = vmatprep.subr.mxu0 0.0
  %2756 = vmatpush1.msra.mxu0 %v644
  %2757 = vmatprep.subr.mxu0 0.0
  %2758 = vmatpush1.msra.mxu0 %v645
  %2759 = vmatprep.subr.mxu0 0.0
  %2760 = vmatpush1.msra.mxu0 %v646
  %2761 = vmatprep.subr.mxu0 0.0
  %2762 = vmatpush1.msra.mxu0 %v647
  %2763 = vmatprep.subr.mxu0 0.0
  %2764 = vmatpush1.msra.mxu0 %v648
  %2765 = vmatprep.subr.mxu0 0.0
  %2766 = vmatpush1.msra.mxu0 %v649
  %2767 = vmatprep.subr.mxu0 0.0
  %2768 = vmatpush1.msra.mxu0 %v650
  %2769 = vmatprep.subr.mxu0 0.0
  %2770 = vmatpush1.msra.mxu0 %v651
  %2771 = vmatprep.subr.mxu0 0.0
  %2772 = vmatpush1.msra.mxu0 %v652
  %2773 = vmatprep.subr.mxu0 0.0
  %2774 = vmatpush1.msra.mxu0 %v653
  %2775 = vmatprep.subr.mxu0 0.0
  %2776 = vmatpush1.msra.mxu0 %v654
  %2777 = vmatprep.subr.mxu0 0.0
  %2778 = vmatpush1.msra.mxu0 %v655
  %2779 = vmatprep.subr.mxu0 0.0
  %2780 = vmatpush1.msra.mxu0 %v656
  %2781 = vmatprep.subr.mxu0 0.0
  %2782 = vmatpush1.msra.mxu0 %v657
  %2783 = vmatprep.subr.mxu0 0.0
  %2784 = vmatpush1.msra.mxu0 %v658
  %2785 = vmatprep.subr.mxu0 0.0
  %2786 = vmatpush1.msra.mxu0 %v659
  %2787 = vmatprep.subr.mxu0 0.0
  %2788 = vmatpush1.msra.mxu0 %v660
  %2789 = vmatprep.subr.mxu0 0.0
  %2790 = vmatpush1.msra.mxu0 %v661
  %2791 = vmatprep.subr.mxu0 0.0
  %2792 = vmatpush1.msra.mxu0 %v662
  %2793 = vmatprep.subr.mxu0 0.0
  %2794 = vmatpush1.msra.mxu0 %v663
  %2795 = vmatprep.subr.mxu0 0.0
  %2796 = vmatpush1.msra.mxu0 %v664
  %2797 = vmatprep.subr.mxu0 0.0
  %2798 = vmatpush1.msra.mxu0 %v665
  %2799 = vmatprep.subr.mxu0 0.0
  %2800 = vmatpush1.msra.mxu0 %v666
  %2801 = vmatprep.subr.mxu0 0.0
  %2802 = vmatpush1.msra.mxu0 %v667
  %2803 = vmatprep.subr.mxu0 0.0
  %2804 = vmatpush1.msra.mxu0 %v668
  %2805 = vmatprep.subr.mxu0 0.0
  %2806 = vmatpush1.msra.mxu0 %v669
  %2807 = vmatprep.mubr.f32.mxu0 %v1246
  %2808 = vmatmul.mubr.f32.gmra.mrb[0].mxu0 %v1244
  %v2809 = vpop.f32.mrb[0].mxu0
  %v2810 = vadd.f32 %v2740, %v2809
  %v2811 = vpop.f32.mrb[0].mxu0
  %2812 = vdwg.mxu0
  %2813 = vmatprep.subr.mxu0 0.0
  %2814 = vmatpush1.msra.mxu0 %v670
  %2815 = vmatprep.subr.mxu0 0.0
  %2816 = vmatpush1.msra.mxu0 %v671
  %2817 = vmatprep.subr.mxu0 0.0
  %2818 = vmatpush1.msra.mxu0 %v672
  %2819 = vmatprep.subr.mxu0 0.0
  %2820 = vmatpush1.msra.mxu0 %v673
  %2821 = vmatprep.subr.mxu0 0.0
  %2822 = vmatpush1.msra.mxu0 %v674
  %2823 = vmatprep.subr.mxu0 0.0
  %2824 = vmatpush1.msra.mxu0 %v675
  %2825 = vmatprep.subr.mxu0 0.0
  %2826 = vmatpush1.msra.mxu0 %v676
  %2827 = vmatprep.subr.mxu0 0.0
  %2828 = vmatpush1.msra.mxu0 %v677
  %2829 = vmatprep.subr.mxu0 0.0
  %2830 = vmatpush1.msra.mxu0 %v678
  %2831 = vmatprep.subr.mxu0 0.0
  %2832 = vmatpush1.msra.mxu0 %v679
  %2833 = vmatprep.subr.mxu0 0.0
  %2834 = vmatpush1.msra.mxu0 %v680
  %2835 = vmatprep.subr.mxu0 0.0
  %2836 = vmatpush1.msra.mxu0 %v681
  %2837 = vmatprep.subr.mxu0 0.0
  %2838 = vmatpush1.msra.mxu0 %v682
  %2839 = vmatprep.subr.mxu0 0.0
  %2840 = vmatpush1.msra.mxu0 %v683
  %2841 = vmatprep.subr.mxu0 0.0
  %2842 = vmatpush1.msra.mxu0 %v684
  %2843 = vmatprep.subr.mxu0 0.0
  %2844 = vmatpush1.msra.mxu0 %v685
  %2845 = vmatprep.subr.mxu0 0.0
  %2846 = vmatpush1.msra.mxu0 %v686
  %2847 = vmatprep.subr.mxu0 0.0
  %2848 = vmatpush1.msra.mxu0 %v687
  %2849 = vmatprep.subr.mxu0 0.0
  %2850 = vmatpush1.msra.mxu0 %v688
  %2851 = vmatprep.subr.mxu0 0.0
  %2852 = vmatpush1.msra.mxu0 %v689
  %2853 = vmatprep.subr.mxu0 0.0
  %2854 = vmatpush1.msra.mxu0 %v690
  %2855 = vmatprep.subr.mxu0 0.0
  %2856 = vmatpush1.msra.mxu0 %v691
  %2857 = vmatprep.subr.mxu0 0.0
  %2858 = vmatpush1.msra.mxu0 %v692
  %2859 = vmatprep.subr.mxu0 0.0
  %2860 = vmatpush1.msra.mxu0 %v693
  %2861 = vmatprep.subr.mxu0 0.0
  %2862 = vmatpush1.msra.mxu0 %v694
  %2863 = vmatprep.subr.mxu0 0.0
  %2864 = vmatpush1.msra.mxu0 %v695
  %2865 = vmatprep.subr.mxu0 0.0
  %2866 = vmatpush1.msra.mxu0 %v696
  %2867 = vmatprep.subr.mxu0 0.0
  %2868 = vmatpush1.msra.mxu0 %v697
  %2869 = vmatprep.subr.mxu0 0.0
  %2870 = vmatpush1.msra.mxu0 %v698
  %2871 = vmatprep.subr.mxu0 0.0
  %2872 = vmatpush1.msra.mxu0 %v699
  %2873 = vmatprep.subr.mxu0 0.0
  %2874 = vmatpush1.msra.mxu0 %v700
  %2875 = vmatprep.subr.mxu0 0.0
  %2876 = vmatpush1.msra.mxu0 %v701
  %2877 = vmatprep.mubr.f32.mxu0 %v1262
  %2878 = vmatmul.mubr.f32.gmra.mrb[0].mxu0 %v1254
  %v2879 = vpop.f32.mrb[0].mxu0
  %v2880 = vadd.f32 %v2810, %v2879
  %v2881 = vpop.f32.mrb[0].mxu0
  %2882 = vdwg.mxu0
  %2883 = vmatprep.subr.mxu0 0.0
  %2884 = vmatpush1.msra.mxu0 %v702
  %2885 = vmatprep.subr.mxu0 0.0
  %2886 = vmatpush1.msra.mxu0 %v703
  %2887 = vmatprep.subr.mxu0 0.0
  %2888 = vmatpush1.msra.mxu0 %v704
  %2889 = vmatprep.subr.mxu0 0.0
  %2890 = vmatpush1.msra.mxu0 %v705
  %2891 = vmatprep.subr.mxu0 0.0
  %2892 = vmatpush1.msra.mxu0 %v706
  %2893 = vmatprep.subr.mxu0 0.0
  %2894 = vmatpush1.msra.mxu0 %v707
  %2895 = vmatprep.subr.mxu0 0.0
  %2896 = vmatpush1.msra.mxu0 %v708
  %2897 = vmatprep.subr.mxu0 0.0
  %2898 = vmatpush1.msra.mxu0 %v709
  %2899 = vmatprep.subr.mxu0 0.0
  %2900 = vmatpush1.msra.mxu0 %v710
  %2901 = vmatprep.subr.mxu0 0.0
  %2902 = vmatpush1.msra.mxu0 %v711
  %2903 = vmatprep.subr.mxu0 0.0
  %2904 = vmatpush1.msra.mxu0 %v712
  %2905 = vmatprep.subr.mxu0 0.0
  %2906 = vmatpush1.msra.mxu0 %v713
  %2907 = vmatprep.subr.mxu0 0.0
  %2908 = vmatpush1.msra.mxu0 %v714
  %2909 = vmatprep.subr.mxu0 0.0
  %2910 = vmatpush1.msra.mxu0 %v715
  %2911 = vmatprep.subr.mxu0 0.0
  %2912 = vmatpush1.msra.mxu0 %v716
  %2913 = vmatprep.subr.mxu0 0.0
  %2914 = vmatpush1.msra.mxu0 %v717
  %2915 = vmatprep.subr.mxu0 0.0
  %2916 = vmatpush1.msra.mxu0 %v718
  %2917 = vmatprep.subr.mxu0 0.0
  %2918 = vmatpush1.msra.mxu0 %v719
  %2919 = vmatprep.subr.mxu0 0.0
  %2920 = vmatpush1.msra.mxu0 %v720
  %2921 = vmatprep.subr.mxu0 0.0
  %2922 = vmatpush1.msra.mxu0 %v721
  %2923 = vmatprep.subr.mxu0 0.0
  %2924 = vmatpush1.msra.mxu0 %v722
  %2925 = vmatprep.subr.mxu0 0.0
  %2926 = vmatpush1.msra.mxu0 %v723
  %2927 = vmatprep.subr.mxu0 0.0
  %2928 = vmatpush1.msra.mxu0 %v724
  %2929 = vmatprep.subr.mxu0 0.0
  %2930 = vmatpush1.msra.mxu0 %v725
  %2931 = vmatprep.subr.mxu0 0.0
  %2932 = vmatpush1.msra.mxu0 %v726
  %2933 = vmatprep.subr.mxu0 0.0
  %2934 = vmatpush1.msra.mxu0 %v727
  %2935 = vmatprep.subr.mxu0 0.0
  %2936 = vmatpush1.msra.mxu0 %v728
  %2937 = vmatprep.subr.mxu0 0.0
  %2938 = vmatpush1.msra.mxu0 %v729
  %2939 = vmatprep.subr.mxu0 0.0
  %2940 = vmatpush1.msra.mxu0 %v730
  %2941 = vmatprep.subr.mxu0 0.0
  %2942 = vmatpush1.msra.mxu0 %v731
  %2943 = vmatprep.subr.mxu0 0.0
  %2944 = vmatpush1.msra.mxu0 %v732
  %2945 = vmatprep.subr.mxu0 0.0
  %2946 = vmatpush1.msra.mxu0 %v733
  %2947 = vmatprep.mubr.f32.mxu0 %v1263
  %2948 = vmatmul.mubr.f32.gmra.mrb[0].mxu0 %v1261
  %v2949 = vpop.f32.mrb[0].mxu0
  %v2950 = vadd.f32 %v2880, %v2949
  %v2951 = vpop.f32.mrb[0].mxu0
  %2952 = vdwg.mxu0
  %2953 = vmatprep.subr.mxu0 0.0
  %2954 = vmatpush1.msra.mxu0 %v734
  %2955 = vmatprep.subr.mxu0 0.0
  %2956 = vmatpush1.msra.mxu0 %v735
  %2957 = vmatprep.subr.mxu0 0.0
  %2958 = vmatpush1.msra.mxu0 %v736
  %2959 = vmatprep.subr.mxu0 0.0
  %2960 = vmatpush1.msra.mxu0 %v737
  %2961 = vmatprep.subr.mxu0 0.0
  %2962 = vmatpush1.msra.mxu0 %v738
  %2963 = vmatprep.subr.mxu0 0.0
  %2964 = vmatpush1.msra.mxu0 %v739
  %2965 = vmatprep.subr.mxu0 0.0
  %2966 = vmatpush1.msra.mxu0 %v740
  %2967 = vmatprep.subr.mxu0 0.0
  %2968 = vmatpush1.msra.mxu0 %v741
  %2969 = vmatprep.subr.mxu0 0.0
  %2970 = vmatpush1.msra.mxu0 %v742
  %2971 = vmatprep.subr.mxu0 0.0
  %2972 = vmatpush1.msra.mxu0 %v743
  %2973 = vmatprep.subr.mxu0 0.0
  %2974 = vmatpush1.msra.mxu0 %v744
  %2975 = vmatprep.subr.mxu0 0.0
  %2976 = vmatpush1.msra.mxu0 %v745
  %2977 = vmatprep.subr.mxu0 0.0
  %2978 = vmatpush1.msra.mxu0 %v746
  %2979 = vmatprep.subr.mxu0 0.0
  %2980 = vmatpush1.msra.mxu0 %v747
  %2981 = vmatprep.subr.mxu0 0.0
  %2982 = vmatpush1.msra.mxu0 %v748
  %2983 = vmatprep.subr.mxu0 0.0
  %2984 = vmatpush1.msra.mxu0 %v749
  %2985 = vmatprep.subr.mxu0 0.0
  %2986 = vmatpush1.msra.mxu0 %v750
  %2987 = vmatprep.subr.mxu0 0.0
  %2988 = vmatpush1.msra.mxu0 %v751
  %2989 = vmatprep.subr.mxu0 0.0
  %2990 = vmatpush1.msra.mxu0 %v752
  %2991 = vmatprep.subr.mxu0 0.0
  %2992 = vmatpush1.msra.mxu0 %v753
  %2993 = vmatprep.subr.mxu0 0.0
  %2994 = vmatpush1.msra.mxu0 %v754
  %2995 = vmatprep.subr.mxu0 0.0
  %2996 = vmatpush1.msra.mxu0 %v755
  %2997 = vmatprep.subr.mxu0 0.0
  %2998 = vmatpush1.msra.mxu0 %v756
  %2999 = vmatprep.subr.mxu0 0.0
  %3000 = vmatpush1.msra.mxu0 %v757
  %3001 = vmatprep.subr.mxu0 0.0
  %3002 = vmatpush1.msra.mxu0 %v758
  %3003 = vmatprep.subr.mxu0 0.0
  %3004 = vmatpush1.msra.mxu0 %v759
  %3005 = vmatprep.subr.mxu0 0.0
  %3006 = vmatpush1.msra.mxu0 %v760
  %3007 = vmatprep.subr.mxu0 0.0
  %3008 = vmatpush1.msra.mxu0 %v761
  %3009 = vmatprep.subr.mxu0 0.0
  %3010 = vmatpush1.msra.mxu0 %v762
  %3011 = vmatprep.subr.mxu0 0.0
  %3012 = vmatpush1.msra.mxu0 %v763
  %3013 = vmatprep.subr.mxu0 0.0
  %3014 = vmatpush1.msra.mxu0 %v764
  %3015 = vmatprep.subr.mxu0 0.0
  %3016 = vmatpush1.msra.mxu0 %v765
  %3017 = vmatprep.mubr.f32.mxu0 %v1279
  %3018 = vmatmul.mubr.f32.gmra.mrb[0].mxu0 %v1271
  %v3019 = vpop.f32.mrb[0].mxu0
  %v3020 = vadd.f32 %v2950, %v3019
  %v3021 = vpop.f32.mrb[0].mxu0
  %3022 = vdwg.mxu0
  %3023 = vmatprep.subr.mxu0 0.0
  %3024 = vmatpush1.msra.mxu0 %v766
  %3025 = vmatprep.subr.mxu0 0.0
  %3026 = vmatpush1.msra.mxu0 %v767
  %3027 = vmatprep.subr.mxu0 0.0
  %3028 = vmatpush1.msra.mxu0 %v768
  %3029 = vmatprep.subr.mxu0 0.0
  %3030 = vmatpush1.msra.mxu0 %v769
  %3031 = vmatprep.subr.mxu0 0.0
  %3032 = vmatpush1.msra.mxu0 %v770
  %3033 = vmatprep.subr.mxu0 0.0
  %3034 = vmatpush1.msra.mxu0 %v771
  %3035 = vmatprep.subr.mxu0 0.0
  %3036 = vmatpush1.msra.mxu0 %v772
  %3037 = vmatprep.subr.mxu0 0.0
  %3038 = vmatpush1.msra.mxu0 %v773
  %3039 = vmatprep.subr.mxu0 0.0
  %3040 = vmatpush1.msra.mxu0 %v774
  %3041 = vmatprep.subr.mxu0 0.0
  %3042 = vmatpush1.msra.mxu0 %v775
  %3043 = vmatprep.subr.mxu0 0.0
  %3044 = vmatpush1.msra.mxu0 %v776
  %3045 = vmatprep.subr.mxu0 0.0
  %3046 = vmatpush1.msra.mxu0 %v777
  %3047 = vmatprep.subr.mxu0 0.0
  %3048 = vmatpush1.msra.mxu0 %v778
  %3049 = vmatprep.subr.mxu0 0.0
  %3050 = vmatpush1.msra.mxu0 %v779
  %3051 = vmatprep.subr.mxu0 0.0
  %3052 = vmatpush1.msra.mxu0 %v780
  %3053 = vmatprep.subr.mxu0 0.0
  %3054 = vmatpush1.msra.mxu0 %v781
  %3055 = vmatprep.subr.mxu0 0.0
  %3056 = vmatpush1.msra.mxu0 %v782
  %3057 = vmatprep.subr.mxu0 0.0
  %3058 = vmatpush1.msra.mxu0 %v783
  %3059 = vmatprep.subr.mxu0 0.0
  %3060 = vmatpush1.msra.mxu0 %v784
  %3061 = vmatprep.subr.mxu0 0.0
  %3062 = vmatpush1.msra.mxu0 %v785
  %3063 = vmatprep.subr.mxu0 0.0
  %3064 = vmatpush1.msra.mxu0 %v786
  %3065 = vmatprep.subr.mxu0 0.0
  %3066 = vmatpush1.msra.mxu0 %v787
  %3067 = vmatprep.subr.mxu0 0.0
  %3068 = vmatpush1.msra.mxu0 %v788
  %3069 = vmatprep.subr.mxu0 0.0
  %3070 = vmatpush1.msra.mxu0 %v789
  %3071 = vmatprep.subr.mxu0 0.0
  %3072 = vmatpush1.msra.mxu0 %v790
  %3073 = vmatprep.subr.mxu0 0.0
  %3074 = vmatpush1.msra.mxu0 %v791
  %3075 = vmatprep.subr.mxu0 0.0
  %3076 = vmatpush1.msra.mxu0 %v792
  %3077 = vmatprep.subr.mxu0 0.0
  %3078 = vmatpush1.msra.mxu0 %v793
  %3079 = vmatprep.subr.mxu0 0.0
  %3080 = vmatpush1.msra.mxu0 %v794
  %3081 = vmatprep.subr.mxu0 0.0
  %3082 = vmatpush1.msra.mxu0 %v795
  %3083 = vmatprep.subr.mxu0 0.0
  %3084 = vmatpush1.msra.mxu0 %v796
  %3085 = vmatprep.subr.mxu0 0.0
  %3086 = vmatpush1.msra.mxu0 %v797
  %3087 = vmatprep.mubr.f32.mxu0 %v1280
  %3088 = vmatmul.mubr.f32.gmra.mrb[0].mxu0 %v1278
  %v3089 = vpop.f32.mrb[0].mxu0
  %v3090 = vadd.f32 %v3020, %v3089
  %v3091 = vpop.f32.mrb[0].mxu0
  %3092 = vdwg.mxu0
  %3093 = vmatprep.subr.mxu0 0.0
  %3094 = vmatpush1.msra.mxu0 %v798
  %3095 = vmatprep.subr.mxu0 0.0
  %3096 = vmatpush1.msra.mxu0 %v799
  %3097 = vmatprep.subr.mxu0 0.0
  %3098 = vmatpush1.msra.mxu0 %v800
  %3099 = vmatprep.subr.mxu0 0.0
  %3100 = vmatpush1.msra.mxu0 %v801
  %3101 = vmatprep.subr.mxu0 0.0
  %3102 = vmatpush1.msra.mxu0 %v802
  %3103 = vmatprep.subr.mxu0 0.0
  %3104 = vmatpush1.msra.mxu0 %v803
  %3105 = vmatprep.subr.mxu0 0.0
  %3106 = vmatpush1.msra.mxu0 %v804
  %3107 = vmatprep.subr.mxu0 0.0
  %3108 = vmatpush1.msra.mxu0 %v805
  %3109 = vmatprep.subr.mxu0 0.0
  %3110 = vmatpush1.msra.mxu0 %v806
  %3111 = vmatprep.subr.mxu0 0.0
  %3112 = vmatpush1.msra.mxu0 %v807
  %3113 = vmatprep.subr.mxu0 0.0
  %3114 = vmatpush1.msra.mxu0 %v808
  %3115 = vmatprep.subr.mxu0 0.0
  %3116 = vmatpush1.msra.mxu0 %v809
  %3117 = vmatprep.subr.mxu0 0.0
  %3118 = vmatpush1.msra.mxu0 %v810
  %3119 = vmatprep.subr.mxu0 0.0
  %3120 = vmatpush1.msra.mxu0 %v811
  %3121 = vmatprep.subr.mxu0 0.0
  %3122 = vmatpush1.msra.mxu0 %v812
  %3123 = vmatprep.subr.mxu0 0.0
  %3124 = vmatpush1.msra.mxu0 %v813
  %3125 = vmatprep.subr.mxu0 0.0
  %3126 = vmatpush1.msra.mxu0 %v814
  %3127 = vmatprep.subr.mxu0 0.0
  %3128 = vmatpush1.msra.mxu0 %v815
  %3129 = vmatprep.subr.mxu0 0.0
  %3130 = vmatpush1.msra.mxu0 %v816
  %3131 = vmatprep.subr.mxu0 0.0
  %3132 = vmatpush1.msra.mxu0 %v817
  %3133 = vmatprep.subr.mxu0 0.0
  %3134 = vmatpush1.msra.mxu0 %v818
  %3135 = vmatprep.subr.mxu0 0.0
  %3136 = vmatpush1.msra.mxu0 %v819
  %3137 = vmatprep.subr.mxu0 0.0
  %3138 = vmatpush1.msra.mxu0 %v820
  %3139 = vmatprep.subr.mxu0 0.0
  %3140 = vmatpush1.msra.mxu0 %v821
  %3141 = vmatprep.subr.mxu0 0.0
  %3142 = vmatpush1.msra.mxu0 %v822
  %3143 = vmatprep.subr.mxu0 0.0
  %3144 = vmatpush1.msra.mxu0 %v823
  %3145 = vmatprep.subr.mxu0 0.0
  %3146 = vmatpush1.msra.mxu0 %v824
  %3147 = vmatprep.subr.mxu0 0.0
  %3148 = vmatpush1.msra.mxu0 %v825
  %3149 = vmatprep.subr.mxu0 0.0
  %3150 = vmatpush1.msra.mxu0 %v826
  %3151 = vmatprep.subr.mxu0 0.0
  %3152 = vmatpush1.msra.mxu0 %v827
  %3153 = vmatprep.subr.mxu0 0.0
  %3154 = vmatpush1.msra.mxu0 %v828
  %3155 = vmatprep.subr.mxu0 0.0
  %3156 = vmatpush1.msra.mxu0 %v829
  %3157 = vmatprep.mubr.f32.mxu0 %v1296
  %3158 = vmatmul.mubr.f32.gmra.mrb[0].mxu0 %v1288
  %v3159 = vpop.f32.mrb[0].mxu0
  %v3160 = vadd.f32 %v3090, %v3159
  %v3161 = vpop.f32.mrb[0].mxu0
  %3162 = vdwg.mxu0
  %3163 = vmatprep.subr.mxu0 0.0
  %3164 = vmatpush1.msra.mxu0 %v830
  %3165 = vmatprep.subr.mxu0 0.0
  %3166 = vmatpush1.msra.mxu0 %v831
  %3167 = vmatprep.subr.mxu0 0.0
  %3168 = vmatpush1.msra.mxu0 %v832
  %3169 = vmatprep.subr.mxu0 0.0
  %3170 = vmatpush1.msra.mxu0 %v833
  %3171 = vmatprep.subr.mxu0 0.0
  %3172 = vmatpush1.msra.mxu0 %v834
  %3173 = vmatprep.subr.mxu0 0.0
  %3174 = vmatpush1.msra.mxu0 %v835
  %3175 = vmatprep.subr.mxu0 0.0
  %3176 = vmatpush1.msra.mxu0 %v836
  %3177 = vmatprep.subr.mxu0 0.0
  %3178 = vmatpush1.msra.mxu0 %v837
  %3179 = vmatprep.subr.mxu0 0.0
  %3180 = vmatpush1.msra.mxu0 %v838
  %3181 = vmatprep.subr.mxu0 0.0
  %3182 = vmatpush1.msra.mxu0 %v839
  %3183 = vmatprep.subr.mxu0 0.0
  %3184 = vmatpush1.msra.mxu0 %v840
  %3185 = vmatprep.subr.mxu0 0.0
  %3186 = vmatpush1.msra.mxu0 %v841
  %3187 = vmatprep.subr.mxu0 0.0
  %3188 = vmatpush1.msra.mxu0 %v842
  %3189 = vmatprep.subr.mxu0 0.0
  %3190 = vmatpush1.msra.mxu0 %v843
  %3191 = vmatprep.subr.mxu0 0.0
  %3192 = vmatpush1.msra.mxu0 %v844
  %3193 = vmatprep.subr.mxu0 0.0
  %3194 = vmatpush1.msra.mxu0 %v845
  %3195 = vmatprep.subr.mxu0 0.0
  %3196 = vmatpush1.msra.mxu0 %v846
  %3197 = vmatprep.subr.mxu0 0.0
  %3198 = vmatpush1.msra.mxu0 %v847
  %3199 = vmatprep.subr.mxu0 0.0
  %3200 = vmatpush1.msra.mxu0 %v848
  %3201 = vmatprep.subr.mxu0 0.0
  %3202 = vmatpush1.msra.mxu0 %v849
  %3203 = vmatprep.subr.mxu0 0.0
  %3204 = vmatpush1.msra.mxu0 %v850
  %3205 = vmatprep.subr.mxu0 0.0
  %3206 = vmatpush1.msra.mxu0 %v851
  %3207 = vmatprep.subr.mxu0 0.0
  %3208 = vmatpush1.msra.mxu0 %v852
  %3209 = vmatprep.subr.mxu0 0.0
  %3210 = vmatpush1.msra.mxu0 %v853
  %3211 = vmatprep.subr.mxu0 0.0
  %3212 = vmatpush1.msra.mxu0 %v854
  %3213 = vmatprep.subr.mxu0 0.0
  %3214 = vmatpush1.msra.mxu0 %v855
  %3215 = vmatprep.subr.mxu0 0.0
  %3216 = vmatpush1.msra.mxu0 %v856
  %3217 = vmatprep.subr.mxu0 0.0
  %3218 = vmatpush1.msra.mxu0 %v857
  %3219 = vmatprep.subr.mxu0 0.0
  %3220 = vmatpush1.msra.mxu0 %v858
  %3221 = vmatprep.subr.mxu0 0.0
  %3222 = vmatpush1.msra.mxu0 %v859
  %3223 = vmatprep.subr.mxu0 0.0
  %3224 = vmatpush1.msra.mxu0 %v860
  %3225 = vmatprep.subr.mxu0 0.0
  %3226 = vmatpush1.msra.mxu0 %v861
  %3227 = vmatprep.mubr.f32.mxu0 %v1297
  %3228 = vmatmul.mubr.f32.gmra.mrb[0].mxu0 %v1295
  %v3229 = vpop.f32.mrb[0].mxu0
  %v3230 = vadd.f32 %v3160, %v3229
  %v3231 = vpop.f32.mrb[0].mxu0
  %3232 = vdwg.mxu0
  %3233 = vmatprep.subr.mxu0 0.0
  %3234 = vmatpush1.msra.mxu0 %v862
  %3235 = vmatprep.subr.mxu0 0.0
  %3236 = vmatpush1.msra.mxu0 %v863
  %3237 = vmatprep.subr.mxu0 0.0
  %3238 = vmatpush1.msra.mxu0 %v864
  %3239 = vmatprep.subr.mxu0 0.0
  %3240 = vmatpush1.msra.mxu0 %v865
  %3241 = vmatprep.subr.mxu0 0.0
  %3242 = vmatpush1.msra.mxu0 %v866
  %3243 = vmatprep.subr.mxu0 0.0
  %3244 = vmatpush1.msra.mxu0 %v867
  %3245 = vmatprep.subr.mxu0 0.0
  %3246 = vmatpush1.msra.mxu0 %v868
  %3247 = vmatprep.subr.mxu0 0.0
  %3248 = vmatpush1.msra.mxu0 %v869
  %3249 = vmatprep.subr.mxu0 0.0
  %3250 = vmatpush1.msra.mxu0 %v870
  %3251 = vmatprep.subr.mxu0 0.0
  %3252 = vmatpush1.msra.mxu0 %v871
  %3253 = vmatprep.subr.mxu0 0.0
  %3254 = vmatpush1.msra.mxu0 %v872
  %3255 = vmatprep.subr.mxu0 0.0
  %3256 = vmatpush1.msra.mxu0 %v873
  %3257 = vmatprep.subr.mxu0 0.0
  %3258 = vmatpush1.msra.mxu0 %v874
  %3259 = vmatprep.subr.mxu0 0.0
  %3260 = vmatpush1.msra.mxu0 %v875
  %3261 = vmatprep.subr.mxu0 0.0
  %3262 = vmatpush1.msra.mxu0 %v876
  %3263 = vmatprep.subr.mxu0 0.0
  %3264 = vmatpush1.msra.mxu0 %v877
  %3265 = vmatprep.subr.mxu0 0.0
  %3266 = vmatpush1.msra.mxu0 %v878
  %3267 = vmatprep.subr.mxu0 0.0
  %3268 = vmatpush1.msra.mxu0 %v879
  %3269 = vmatprep.subr.mxu0 0.0
  %3270 = vmatpush1.msra.mxu0 %v880
  %3271 = vmatprep.subr.mxu0 0.0
  %3272 = vmatpush1.msra.mxu0 %v881
  %3273 = vmatprep.subr.mxu0 0.0
  %3274 = vmatpush1.msra.mxu0 %v882
  %3275 = vmatprep.subr.mxu0 0.0
  %3276 = vmatpush1.msra.mxu0 %v883
  %3277 = vmatprep.subr.mxu0 0.0
  %3278 = vmatpush1.msra.mxu0 %v884
  %3279 = vmatprep.subr.mxu0 0.0
  %3280 = vmatpush1.msra.mxu0 %v885
  %3281 = vmatprep.subr.mxu0 0.0
  %3282 = vmatpush1.msra.mxu0 %v886
  %3283 = vmatprep.subr.mxu0 0.0
  %3284 = vmatpush1.msra.mxu0 %v887
  %3285 = vmatprep.subr.mxu0 0.0
  %3286 = vmatpush1.msra.mxu0 %v888
  %3287 = vmatprep.subr.mxu0 0.0
  %3288 = vmatpush1.msra.mxu0 %v889
  %3289 = vmatprep.subr.mxu0 0.0
  %3290 = vmatpush1.msra.mxu0 %v890
  %3291 = vmatprep.subr.mxu0 0.0
  %3292 = vmatpush1.msra.mxu0 %v891
  %3293 = vmatprep.subr.mxu0 0.0
  %3294 = vmatpush1.msra.mxu0 %v892
  %3295 = vmatprep.subr.mxu0 0.0
  %3296 = vmatpush1.msra.mxu0 %v893
  %3297 = vmatprep.mubr.f32.mxu0 %v1313
  %3298 = vmatmul.mubr.f32.gmra.mrb[0].mxu0 %v1305
  %v3299 = vpop.f32.mrb[0].mxu0
  %v3300 = vadd.f32 %v3230, %v3299
  %v3301 = vpop.f32.mrb[0].mxu0
  %3302 = vdwg.mxu0
  %3303 = vmatprep.subr.mxu0 0.0
  %3304 = vmatpush1.msra.mxu0 %v894
  %3305 = vmatprep.subr.mxu0 0.0
  %3306 = vmatpush1.msra.mxu0 %v895
  %3307 = vmatprep.subr.mxu0 0.0
  %3308 = vmatpush1.msra.mxu0 %v896
  %3309 = vmatprep.subr.mxu0 0.0
  %3310 = vmatpush1.msra.mxu0 %v897
  %3311 = vmatprep.subr.mxu0 0.0
  %3312 = vmatpush1.msra.mxu0 %v898
  %3313 = vmatprep.subr.mxu0 0.0
  %3314 = vmatpush1.msra.mxu0 %v899
  %3315 = vmatprep.subr.mxu0 0.0
  %3316 = vmatpush1.msra.mxu0 %v900
  %3317 = vmatprep.subr.mxu0 0.0
  %3318 = vmatpush1.msra.mxu0 %v901
  %3319 = vmatprep.subr.mxu0 0.0
  %3320 = vmatpush1.msra.mxu0 %v902
  %3321 = vmatprep.subr.mxu0 0.0
  %3322 = vmatpush1.msra.mxu0 %v903
  %3323 = vmatprep.subr.mxu0 0.0
  %3324 = vmatpush1.msra.mxu0 %v904
  %3325 = vmatprep.subr.mxu0 0.0
  %3326 = vmatpush1.msra.mxu0 %v905
  %3327 = vmatprep.subr.mxu0 0.0
  %3328 = vmatpush1.msra.mxu0 %v906
  %3329 = vmatprep.subr.mxu0 0.0
  %3330 = vmatpush1.msra.mxu0 %v907
  %3331 = vmatprep.subr.mxu0 0.0
  %3332 = vmatpush1.msra.mxu0 %v908
  %3333 = vmatprep.subr.mxu0 0.0
  %3334 = vmatpush1.msra.mxu0 %v909
  %3335 = vmatprep.subr.mxu0 0.0
  %3336 = vmatpush1.msra.mxu0 %v910
  %3337 = vmatprep.subr.mxu0 0.0
  %3338 = vmatpush1.msra.mxu0 %v911
  %3339 = vmatprep.subr.mxu0 0.0
  %3340 = vmatpush1.msra.mxu0 %v912
  %3341 = vmatprep.subr.mxu0 0.0
  %3342 = vmatpush1.msra.mxu0 %v913
  %3343 = vmatprep.subr.mxu0 0.0
  %3344 = vmatpush1.msra.mxu0 %v914
  %3345 = vmatprep.subr.mxu0 0.0
  %3346 = vmatpush1.msra.mxu0 %v915
  %3347 = vmatprep.subr.mxu0 0.0
  %3348 = vmatpush1.msra.mxu0 %v916
  %3349 = vmatprep.subr.mxu0 0.0
  %3350 = vmatpush1.msra.mxu0 %v917
  %3351 = vmatprep.subr.mxu0 0.0
  %3352 = vmatpush1.msra.mxu0 %v918
  %3353 = vmatprep.subr.mxu0 0.0
  %3354 = vmatpush1.msra.mxu0 %v919
  %3355 = vmatprep.subr.mxu0 0.0
  %3356 = vmatpush1.msra.mxu0 %v920
  %3357 = vmatprep.subr.mxu0 0.0
  %3358 = vmatpush1.msra.mxu0 %v921
  %3359 = vmatprep.subr.mxu0 0.0
  %3360 = vmatpush1.msra.mxu0 %v922
  %3361 = vmatprep.subr.mxu0 0.0
  %3362 = vmatpush1.msra.mxu0 %v923
  %3363 = vmatprep.subr.mxu0 0.0
  %3364 = vmatpush1.msra.mxu0 %v924
  %3365 = vmatprep.subr.mxu0 0.0
  %3366 = vmatpush1.msra.mxu0 %v925
  %3367 = vmatprep.mubr.f32.mxu0 %v1314
  %3368 = vmatmul.mubr.f32.gmra.mrb[0].mxu0 %v1312
  %v3369 = vpop.f32.mrb[0].mxu0
  %v3370 = vadd.f32 %v3300, %v3369
  %v3371 = vpop.f32.mrb[0].mxu0
  %3372 = vdwg.mxu0
  %3373 = vmatprep.subr.mxu0 0.0
  %3374 = vmatpush1.msra.mxu0 %v926
  %3375 = vmatprep.subr.mxu0 0.0
  %3376 = vmatpush1.msra.mxu0 %v927
  %3377 = vmatprep.subr.mxu0 0.0
  %3378 = vmatpush1.msra.mxu0 %v928
  %3379 = vmatprep.subr.mxu0 0.0
  %3380 = vmatpush1.msra.mxu0 %v929
  %3381 = vmatprep.subr.mxu0 0.0
  %3382 = vmatpush1.msra.mxu0 %v930
  %3383 = vmatprep.subr.mxu0 0.0
  %3384 = vmatpush1.msra.mxu0 %v931
  %3385 = vmatprep.subr.mxu0 0.0
  %3386 = vmatpush1.msra.mxu0 %v932
  %3387 = vmatprep.subr.mxu0 0.0
  %3388 = vmatpush1.msra.mxu0 %v933
  %3389 = vmatprep.subr.mxu0 0.0
  %3390 = vmatpush1.msra.mxu0 %v934
  %3391 = vmatprep.subr.mxu0 0.0
  %3392 = vmatpush1.msra.mxu0 %v935
  %3393 = vmatprep.subr.mxu0 0.0
  %3394 = vmatpush1.msra.mxu0 %v936
  %3395 = vmatprep.subr.mxu0 0.0
  %3396 = vmatpush1.msra.mxu0 %v937
  %3397 = vmatprep.subr.mxu0 0.0
  %3398 = vmatpush1.msra.mxu0 %v938
  %3399 = vmatprep.subr.mxu0 0.0
  %3400 = vmatpush1.msra.mxu0 %v939
  %3401 = vmatprep.subr.mxu0 0.0
  %3402 = vmatpush1.msra.mxu0 %v940
  %3403 = vmatprep.subr.mxu0 0.0
  %3404 = vmatpush1.msra.mxu0 %v941
  %3405 = vmatprep.subr.mxu0 0.0
  %3406 = vmatpush1.msra.mxu0 %v942
  %3407 = vmatprep.subr.mxu0 0.0
  %3408 = vmatpush1.msra.mxu0 %v943
  %3409 = vmatprep.subr.mxu0 0.0
  %3410 = vmatpush1.msra.mxu0 %v944
  %3411 = vmatprep.subr.mxu0 0.0
  %3412 = vmatpush1.msra.mxu0 %v945
  %3413 = vmatprep.subr.mxu0 0.0
  %3414 = vmatpush1.msra.mxu0 %v946
  %3415 = vmatprep.subr.mxu0 0.0
  %3416 = vmatpush1.msra.mxu0 %v947
  %3417 = vmatprep.subr.mxu0 0.0
  %3418 = vmatpush1.msra.mxu0 %v948
  %3419 = vmatprep.subr.mxu0 0.0
  %3420 = vmatpush1.msra.mxu0 %v949
  %3421 = vmatprep.subr.mxu0 0.0
  %3422 = vmatpush1.msra.mxu0 %v950
  %3423 = vmatprep.subr.mxu0 0.0
  %3424 = vmatpush1.msra.mxu0 %v951
  %3425 = vmatprep.subr.mxu0 0.0
  %3426 = vmatpush1.msra.mxu0 %v952
  %3427 = vmatprep.subr.mxu0 0.0
  %3428 = vmatpush1.msra.mxu0 %v953
  %3429 = vmatprep.subr.mxu0 0.0
  %3430 = vmatpush1.msra.mxu0 %v954
  %3431 = vmatprep.subr.mxu0 0.0
  %3432 = vmatpush1.msra.mxu0 %v955
  %3433 = vmatprep.subr.mxu0 0.0
  %3434 = vmatpush1.msra.mxu0 %v956
  %3435 = vmatprep.subr.mxu0 0.0
  %3436 = vmatpush1.msra.mxu0 %v957
  %3437 = vmatprep.mubr.f32.mxu0 %v1330
  %3438 = vmatmul.mubr.f32.gmra.mrb[0].mxu0 %v1322
  %v3439 = vpop.f32.mrb[0].mxu0
  %v3440 = vadd.f32 %v3370, %v3439
  %v3441 = vpop.f32.mrb[0].mxu0
  %3442 = vdwg.mxu0
  %3443 = vmatprep.subr.mxu0 0.0
  %3444 = vmatpush1.msra.mxu0 %v958
  %3445 = vmatprep.subr.mxu0 0.0
  %3446 = vmatpush1.msra.mxu0 %v959
  %3447 = vmatprep.subr.mxu0 0.0
  %3448 = vmatpush1.msra.mxu0 %v960
  %3449 = vmatprep.subr.mxu0 0.0
  %3450 = vmatpush1.msra.mxu0 %v961
  %3451 = vmatprep.subr.mxu0 0.0
  %3452 = vmatpush1.msra.mxu0 %v962
  %3453 = vmatprep.subr.mxu0 0.0
  %3454 = vmatpush1.msra.mxu0 %v963
  %3455 = vmatprep.subr.mxu0 0.0
  %3456 = vmatpush1.msra.mxu0 %v964
  %3457 = vmatprep.subr.mxu0 0.0
  %3458 = vmatpush1.msra.mxu0 %v965
  %3459 = vmatprep.subr.mxu0 0.0
  %3460 = vmatpush1.msra.mxu0 %v966
  %3461 = vmatprep.subr.mxu0 0.0
  %3462 = vmatpush1.msra.mxu0 %v967
  %3463 = vmatprep.subr.mxu0 0.0
  %3464 = vmatpush1.msra.mxu0 %v968
  %3465 = vmatprep.subr.mxu0 0.0
  %3466 = vmatpush1.msra.mxu0 %v969
  %3467 = vmatprep.subr.mxu0 0.0
  %3468 = vmatpush1.msra.mxu0 %v970
  %3469 = vmatprep.subr.mxu0 0.0
  %3470 = vmatpush1.msra.mxu0 %v971
  %3471 = vmatprep.subr.mxu0 0.0
  %3472 = vmatpush1.msra.mxu0 %v972
  %3473 = vmatprep.subr.mxu0 0.0
  %3474 = vmatpush1.msra.mxu0 %v973
  %3475 = vmatprep.subr.mxu0 0.0
  %3476 = vmatpush1.msra.mxu0 %v974
  %3477 = vmatprep.subr.mxu0 0.0
  %3478 = vmatpush1.msra.mxu0 %v975
  %3479 = vmatprep.subr.mxu0 0.0
  %3480 = vmatpush1.msra.mxu0 %v976
  %3481 = vmatprep.subr.mxu0 0.0
  %3482 = vmatpush1.msra.mxu0 %v977
  %3483 = vmatprep.subr.mxu0 0.0
  %3484 = vmatpush1.msra.mxu0 %v978
  %3485 = vmatprep.subr.mxu0 0.0
  %3486 = vmatpush1.msra.mxu0 %v979
  %3487 = vmatprep.subr.mxu0 0.0
  %3488 = vmatpush1.msra.mxu0 %v980
  %3489 = vmatprep.subr.mxu0 0.0
  %3490 = vmatpush1.msra.mxu0 %v981
  %3491 = vmatprep.subr.mxu0 0.0
  %3492 = vmatpush1.msra.mxu0 %v982
  %3493 = vmatprep.subr.mxu0 0.0
  %3494 = vmatpush1.msra.mxu0 %v983
  %3495 = vmatprep.subr.mxu0 0.0
  %3496 = vmatpush1.msra.mxu0 %v984
  %3497 = vmatprep.subr.mxu0 0.0
  %3498 = vmatpush1.msra.mxu0 %v985
  %3499 = vmatprep.subr.mxu0 0.0
  %3500 = vmatpush1.msra.mxu0 %v986
  %3501 = vmatprep.subr.mxu0 0.0
  %3502 = vmatpush1.msra.mxu0 %v987
  %3503 = vmatprep.subr.mxu0 0.0
  %3504 = vmatpush1.msra.mxu0 %v988
  %3505 = vmatprep.subr.mxu0 0.0
  %3506 = vmatpush1.msra.mxu0 %v989
  %3507 = vmatprep.mubr.f32.mxu0 %v1331
  %3508 = vmatmul.mubr.f32.gmra.mrb[0].mxu0 %v1329
  %v3509 = vpop.f32.mrb[0].mxu0
  %v3510 = vadd.f32 %v3440, %v3509
  %v3511 = vpop.f32.mrb[0].mxu0
  %3512 = vdwg.mxu0
  %3513 = vmatprep.subr.mxu0 0.0
  %3514 = vmatpush1.msra.mxu0 %v990
  %3515 = vmatprep.subr.mxu0 0.0
  %3516 = vmatpush1.msra.mxu0 %v991
  %3517 = vmatprep.subr.mxu0 0.0
  %3518 = vmatpush1.msra.mxu0 %v992
  %3519 = vmatprep.subr.mxu0 0.0
  %3520 = vmatpush1.msra.mxu0 %v993
  %3521 = vmatprep.subr.mxu0 0.0
  %3522 = vmatpush1.msra.mxu0 %v994
  %3523 = vmatprep.subr.mxu0 0.0
  %3524 = vmatpush1.msra.mxu0 %v995
  %3525 = vmatprep.subr.mxu0 0.0
  %3526 = vmatpush1.msra.mxu0 %v996
  %3527 = vmatprep.subr.mxu0 0.0
  %3528 = vmatpush1.msra.mxu0 %v997
  %3529 = vmatprep.subr.mxu0 0.0
  %3530 = vmatpush1.msra.mxu0 %v998
  %3531 = vmatprep.subr.mxu0 0.0
  %3532 = vmatpush1.msra.mxu0 %v999
  %3533 = vmatprep.subr.mxu0 0.0
  %3534 = vmatpush1.msra.mxu0 %v1000
  %3535 = vmatprep.subr.mxu0 0.0
  %3536 = vmatpush1.msra.mxu0 %v1001
  %3537 = vmatprep.subr.mxu0 0.0
  %3538 = vmatpush1.msra.mxu0 %v1002
  %3539 = vmatprep.subr.mxu0 0.0
  %3540 = vmatpush1.msra.mxu0 %v1003
  %3541 = vmatprep.subr.mxu0 0.0
  %3542 = vmatpush1.msra.mxu0 %v1004
  %3543 = vmatprep.subr.mxu0 0.0
  %3544 = vmatpush1.msra.mxu0 %v1005
  %3545 = vmatprep.subr.mxu0 0.0
  %3546 = vmatpush1.msra.mxu0 %v1006
  %3547 = vmatprep.subr.mxu0 0.0
  %3548 = vmatpush1.msra.mxu0 %v1007
  %3549 = vmatprep.subr.mxu0 0.0
  %3550 = vmatpush1.msra.mxu0 %v1008
  %3551 = vmatprep.subr.mxu0 0.0
  %3552 = vmatpush1.msra.mxu0 %v1009
  %3553 = vmatprep.subr.mxu0 0.0
  %3554 = vmatpush1.msra.mxu0 %v1010
  %3555 = vmatprep.subr.mxu0 0.0
  %3556 = vmatpush1.msra.mxu0 %v1011
  %3557 = vmatprep.subr.mxu0 0.0
  %3558 = vmatpush1.msra.mxu0 %v1012
  %3559 = vmatprep.subr.mxu0 0.0
  %3560 = vmatpush1.msra.mxu0 %v1013
  %3561 = vmatprep.subr.mxu0 0.0
  %3562 = vmatpush1.msra.mxu0 %v1014
  %3563 = vmatprep.subr.mxu0 0.0
  %3564 = vmatpush1.msra.mxu0 %v1015
  %3565 = vmatprep.subr.mxu0 0.0
  %3566 = vmatpush1.msra.mxu0 %v1016
  %3567 = vmatprep.subr.mxu0 0.0
  %3568 = vmatpush1.msra.mxu0 %v1017
  %3569 = vmatprep.subr.mxu0 0.0
  %3570 = vmatpush1.msra.mxu0 %v1018
  %3571 = vmatprep.subr.mxu0 0.0
  %3572 = vmatpush1.msra.mxu0 %v1019
  %3573 = vmatprep.subr.mxu0 0.0
  %3574 = vmatpush1.msra.mxu0 %v1020
  %3575 = vmatprep.subr.mxu0 0.0
  %3576 = vmatpush1.msra.mxu0 %v1021
  %3577 = vmatprep.mubr.f32.mxu0 %v1347
  %3578 = vmatmul.mubr.f32.gmra.mrb[0].mxu0 %v1339
  %v3579 = vpop.f32.mrb[0].mxu0
  %v3580 = vadd.f32 %v3510, %v3579
  %v3581 = vpop.f32.mrb[0].mxu0
  %3582 = vdwg.mxu0
  %3583 = vmatprep.subr.mxu0 0.0
  %3584 = vmatpush1.msra.mxu0 %v1022
  %3585 = vmatprep.subr.mxu0 0.0
  %3586 = vmatpush1.msra.mxu0 %v1023
  %3587 = vmatprep.subr.mxu0 0.0
  %3588 = vmatpush1.msra.mxu0 %v1024
  %3589 = vmatprep.subr.mxu0 0.0
  %3590 = vmatpush1.msra.mxu0 %v1025
  %3591 = vmatprep.subr.mxu0 0.0
  %3592 = vmatpush1.msra.mxu0 %v1026
  %3593 = vmatprep.subr.mxu0 0.0
  %3594 = vmatpush1.msra.mxu0 %v1027
  %3595 = vmatprep.subr.mxu0 0.0
  %3596 = vmatpush1.msra.mxu0 %v1028
  %3597 = vmatprep.subr.mxu0 0.0
  %3598 = vmatpush1.msra.mxu0 %v1029
  %3599 = vmatprep.subr.mxu0 0.0
  %3600 = vmatpush1.msra.mxu0 %v1030
  %3601 = vmatprep.subr.mxu0 0.0
  %3602 = vmatpush1.msra.mxu0 %v1031
  %3603 = vmatprep.subr.mxu0 0.0
  %3604 = vmatpush1.msra.mxu0 %v1032
  %3605 = vmatprep.subr.mxu0 0.0
  %3606 = vmatpush1.msra.mxu0 %v1033
  %3607 = vmatprep.subr.mxu0 0.0
  %3608 = vmatpush1.msra.mxu0 %v1034
  %3609 = vmatprep.subr.mxu0 0.0
  %3610 = vmatpush1.msra.mxu0 %v1035
  %3611 = vmatprep.subr.mxu0 0.0
  %3612 = vmatpush1.msra.mxu0 %v1036
  %3613 = vmatprep.subr.mxu0 0.0
  %3614 = vmatpush1.msra.mxu0 %v1037
  %3615 = vmatprep.subr.mxu0 0.0
  %3616 = vmatpush1.msra.mxu0 %v1038
  %3617 = vmatprep.subr.mxu0 0.0
  %3618 = vmatpush1.msra.mxu0 %v1039
  %3619 = vmatprep.subr.mxu0 0.0
  %3620 = vmatpush1.msra.mxu0 %v1040
  %3621 = vmatprep.subr.mxu0 0.0
  %3622 = vmatpush1.msra.mxu0 %v1041
  %3623 = vmatprep.subr.mxu0 0.0
  %3624 = vmatpush1.msra.mxu0 %v1042
  %3625 = vmatprep.subr.mxu0 0.0
  %3626 = vmatpush1.msra.mxu0 %v1043
  %3627 = vmatprep.subr.mxu0 0.0
  %3628 = vmatpush1.msra.mxu0 %v1044
  %3629 = vmatprep.subr.mxu0 0.0
  %3630 = vmatpush1.msra.mxu0 %v1045
  %3631 = vmatprep.subr.mxu0 0.0
  %3632 = vmatpush1.msra.mxu0 %v1046
  %3633 = vmatprep.subr.mxu0 0.0
  %3634 = vmatpush1.msra.mxu0 %v1047
  %3635 = vmatprep.subr.mxu0 0.0
  %3636 = vmatpush1.msra.mxu0 %v1048
  %3637 = vmatprep.subr.mxu0 0.0
  %3638 = vmatpush1.msra.mxu0 %v1049
  %3639 = vmatprep.subr.mxu0 0.0
  %3640 = vmatpush1.msra.mxu0 %v1050
  %3641 = vmatprep.subr.mxu0 0.0
  %3642 = vmatpush1.msra.mxu0 %v1051
  %3643 = vmatprep.subr.mxu0 0.0
  %3644 = vmatpush1.msra.mxu0 %v1052
  %3645 = vmatprep.subr.mxu0 0.0
  %3646 = vmatpush1.msra.mxu0 %v1053
  %3647 = vmatprep.mubr.f32.mxu0 %v1348
  %3648 = vmatmul.mubr.f32.gmra.mrb[0].mxu0 %v1346
  %v3649 = vpop.f32.mrb[0].mxu0
  %v3650 = vadd.f32 %v3580, %v3649
  %v3651 = vpop.f32.mrb[0].mxu0
  %3652 = vdwg.mxu0
  %3653 = vst [vmem:[%s3] sm:$0x3] %v3650
  // Predicated region
  $region14: #{multi_task_forward.1} parent=0 // pred_check
    _
  $region15: #{multi_task_forward.1} parent=0 // pred_check_branch
    %3655 = sbr.rel (0) target = $region17
  $region16: #{multi_task_forward.1} parent=0 // pred_region
    _
  $region17: #{multi_task_forward.1} parent=0 // pred_fallthru
    _
  // Predicated region
  $region18: #{multi_task_forward.1} parent=0 // pred_check
    _
  $region19: #{multi_task_forward.1} parent=0 // pred_check_branch
    %3657 = sbr.rel (0) target = $region21
  $region20: #{multi_task_forward.1} parent=0 // pred_region
    _
  $region21: #{multi_task_forward.1} parent=0 // pred_fallthru
    _

</llo_original>
